<compile_context>
chip_gen: v7x
topology: tpu7x:2x2x1
jax: 0.10.0
libtpu: 0.0.40
codegen_flags: <defaults>
</compile_context>

<pallas_src>
import numpy as np
import jax
import jax.numpy as jnp
from jax.experimental import pallas as pl
from jax.experimental.pallas import tpu as pltpu

BN_EPS = 1e-5       # PyTorch BatchNorm2d default
MAX_TILE_B = 512    # batch rows per grid step (multiple of 256 / 128 / 16)


def _round_up(n, m):
    return -(-n // m) * m


def _choose_tile_b(b):
    bp = _round_up(b, 16)                       # bf16 sublane packing
    if bp <= MAX_TILE_B:
        return bp                               # small batch: single tile
    n_tiles = max(2, -(-bp // MAX_TILE_B))      # >= 2 steps -> both v7x TCs busy
    return _round_up(-(-bp // n_tiles), 16)


# ----------------------------------------------------------------------------
# Kernel: whole network for a tile of TILE_B samples
# ----------------------------------------------------------------------------
def convnet_fused_kernel(x_ref, m1_ref, c1_ref, m2_ref, c2_ref, m3_ref, c3_ref,
                         w1_ref, d1_ref, w2t_ref, d2_ref, out_ref):
    """x_ref:   [TB, H*W*Cin0] bf16   CHW-flattened input rows
       mX_ref:  merged [Fin, 4*Fout] or split [4, Fin, Fout] bf16 operators
       cX_ref:  [1, Fout] f32         folded per-channel bias tiled over spatial
       w1_ref:  [feat, hid] bf16 ; d1_ref: [1, hid] f32
       w2t_ref: [1, hid] f32     ; d2_ref: [1, 1] f32
       out_ref: [1, TB] int32         thresholded prediction (lane-dense)
    """
    def conv_bn_pool(a, m_ref, c_ref):
        a16 = a if a.dtype == jnp.bfloat16 else a.astype(jnp.bfloat16)
        if len(m_ref.shape) == 2:
            # Merged operator: one long weight-stationary MXU pass, then
            # MaxPool2d(2) = max over 4 lane-aligned column slices.
            fout = c_ref.shape[-1]
            y = jnp.dot(a16, m_ref[...], preferred_element_type=jnp.float32)
            r = jnp.maximum(jnp.maximum(y[:, :fout], y[:, fout:2 * fout]),
                            jnp.maximum(y[:, 2 * fout:3 * fout], y[:, 3 * fout:]))
        else:
            # Split operators (output width not lane-aligned): 4 dot -> max.
            r = jnp.dot(a16, m_ref[0], preferred_element_type=jnp.float32)
            for p in range(1, 4):
                r = jnp.maximum(
                    r, jnp.dot(a16, m_ref[p], preferred_element_type=jnp.float32))
        return r + c_ref[...]        # folded conv bias + BN affine (per channel)

    a = x_ref[...]
    a = conv_bn_pool(a, m1_ref, c1_ref)      # 16x16 -> 8x8
    a = conv_bn_pool(a, m2_ref, c2_ref)      # 8x8   -> 4x4
    a = conv_bn_pool(a, m3_ref, c3_ref)      # 4x4   -> 2x2     [TB, 4*C] f32

    h = jnp.dot(a.astype(jnp.bfloat16), w1_ref[...],
                preferred_element_type=jnp.float32) + d1_ref[...]
    h = jnp.maximum(h, 0.0)                  # ReLU, [TB, hid] f32

    # Lane-dense epilogue: logits as a [1, TB] row (batch on lanes) so the
    # int32 prediction store is a full unmasked vst.
    logit = jnp.dot(w2t_ref[...], h.T,
                    preferred_element_type=jnp.float32) + d2_ref[...]
    # sigmoid(logit) > 0.5  <=>  logit > 0   (eval-mode threshold, exact)
    # TODO(synk): torch's `1 * (x > 0.5)` yields int64; TPU kernel emits int32 {0,1}.
    out_ref[...] = (logit > 0.0).astype(jnp.int32)


# ----------------------------------------------------------------------------
# One-time weight preprocessing (outside the kernel, done once per parameters)
# ----------------------------------------------------------------------------
def _pool_conv_selectors(h, w, k):
    """Static {0,1} tensor S[p, hw_in, tap, hw_out]: which padded-input pixel
    feeds each (pool-offset p, conv tap, pooled-output pixel)."""
    ho, wo = h // 2, w // 2
    pad = (k - 1) // 2
    sels = np.zeros((4, h * w, k * k, ho * wo), np.float32)
    for p, (di, dj) in enumerate([(0, 0), (0, 1), (1, 0), (1, 1)]):
        for oh in range(ho):
            for ow in range(wo):
                q = oh * wo + ow
                for kh in range(k):
                    for kw in range(k):
                        hi = 2 * oh + di + kh - pad
                        wi = 2 * ow + dj + kw - pad
                        if 0 <= hi < h and 0 <= wi < w:   # out-of-bounds = zero pad
                            sels[p, hi * w + wi, kh * k + kw, q] = 1.0
    return sels


def _conv_block_operator(block_params, h, w, chw_input=False):
    """Fold BN(eval)+bias into the conv and build the pool-offset operators.

    Returns (op, col_bias) where op is bf16 and either
      [H*W*Cin, 4*Fout]  (pool offsets merged along the output axis) when the
                         per-offset width Fout is a multiple of 128, or
      [4, H*W*Cin, Fout] otherwise.
    """
    wgt, bias, gamma, beta, mean, var = block_params        # wgt: [K, K, Cin, Cout]
    k, _, cin, cout = wgt.shape
    ho, wo = h // 2, w // 2
    fout = ho * wo * cout
    scale = gamma * jax.lax.rsqrt(var + BN_EPS)              # [Cout]
    w_fold = (wgt * scale).reshape(k * k, cin, cout)         # BN scale folded in
    b_fold = (bias - mean) * scale + beta                    # BN shift folded in
    sel = jnp.asarray(_pool_conv_selectors(h, w, k))         # [4, HW, KK, HoWo]
    op = jnp.einsum("pxtq,tcd->pxcqd", sel, w_fold)
    op = op.reshape(4, h * w * cin, fout)                    # rows (h,w,c), cols (q,d)
    if chw_input:
        # Permute input rows so the operator consumes CHW-flattened rows
        # (x_nchw.reshape(b, -1)) directly -- no wrapper transpose needed.
        perm = np.arange(h * w * cin).reshape(h * w, cin).T.reshape(-1)
        op = op[:, perm, :]
    if fout % 128 == 0:
        # Merge the 4 pool offsets along the output axis (lane-aligned slices).
        op = jnp.transpose(op, (1, 0, 2)).reshape(h * w * cin, 4 * fout)
    op = op.astype(jnp.bfloat16)
    col_bias = jnp.tile(b_fold, ho * wo).reshape(1, fout).astype(jnp.float32)
    return op, col_bias


def prepare_params(params, nb_channels):
    """Preprocess module parameters into kernel operands (call once)."""
    m1, c1 = _conv_block_operator(params["block1"], 16, 16, chw_input=True)
    m2, c2 = _conv_block_operator(params["block2"], 8, 8)
    m3, c3 = _conv_block_operator(params["block3"], 4, 4)
    # Block-3 output columns are in (h, w, c) order; torch's .view(-1, C*2*2)
    # expects (c, h, w).  Permute lin1 rows instead of transposing in-kernel.
    c = nb_channels
    perm = np.array([(i % c) * 4 + (i // c) for i in range(4 * c)])
    return {
        "m1": m1, "c1": c1, "m2": m2, "c2": c2, "m3": m3, "c3": c3,
        "w1": params["w1"][perm].astype(jnp.bfloat16),
        "d1": params["b1"].reshape(1, -1).astype(jnp.float32),
        "w2t": params["w2"].T.astype(jnp.float32),          # [1, hid]
        "d2": params["b2"].reshape(1, 1).astype(jnp.float32),
    }


# ----------------------------------------------------------------------------
# Forward wrapper: one fused pallas_call, gridded over batch tiles
# ----------------------------------------------------------------------------
def convnet_forward(x_nchw, kp):
    b = x_nchw.shape[0]
    # CHW-flattened rows consumed directly (block-1 operator rows are permuted);
    # the only XLA glue is the bf16 cast, which halves kernel input DMA + VMEM.
    x = x_nchw.reshape(b, -1).astype(jnp.bfloat16)
    f0 = x.shape[1]
    tile_b = _choose_tile_b(b)
    bp = _round_up(b, tile_b)
    if bp != b:
        x = jnp.pad(x, ((0, bp - b), (0, 0)))
    grid_n = bp // tile_b

    args = (x, kp["m1"], kp["c1"], kp["m2"], kp["c2"], kp["m3"], kp["c3"],
            kp["w1"], kp["d1"], kp["w2t"], kp["d2"])

    def full_spec(a):   # whole array VMEM-resident; constant block index
        # TODO(synk): if nb_channels is scaled up toward v7x's VMEM budget, add
        # pipeline_mode=pl.Buffered(1) here (constant block index -> the second
        # buffer is dead VMEM); harmless at the current ~2.6 MB of operators.
        return pl.BlockSpec(a.shape, lambda i: (0,) * a.ndim)

    in_specs = [pl.BlockSpec((tile_b, f0), lambda i: (i, 0))]
    in_specs += [full_spec(a) for a in args[1:]]

    out = pl.pallas_call(
        convnet_fused_kernel,
        out_shape=jax.ShapeDtypeStruct((grid_n, 1, tile_b), jnp.int32),
        grid=(grid_n,),
        in_specs=in_specs,
        out_specs=pl.BlockSpec((None, 1, tile_b), lambda i: (i, 0, 0)),
        compiler_params=pltpu.CompilerParams(
            dimension_semantics=("parallel",),        # shard batch tiles across TCs
            vmem_limit_bytes=32 * 1024 * 1024),        # safe on v5e/v6e/v7x
    )(*args)
    return out.reshape(-1)[:b]                         # matches x.view(-1)


# ----------------------------------------------------------------------------
# Deterministic synthetic parameters (shapes from ConvNet.__init__)
# ----------------------------------------------------------------------------
def init_params(key, nb_channels, kernel_size=3):
    k = kernel_size
    keys = iter(jax.random.split(key, 32))

    def conv_block(cin, cout):
        std = 1.0 / float(np.sqrt(cin * k * k))
        w = jax.random.normal(next(keys), (k, k, cin, cout), jnp.float32) * std
        b = jax.random.normal(next(keys), (cout,), jnp.float32) * std
        gamma = jax.random.uniform(next(keys), (cout,), jnp.float32, 0.8, 1.2)
        beta = jax.random.normal(next(keys), (cout,), jnp.float32) * 0.1
        mean = jax.random.normal(next(keys), (cout,), jnp.float32) * 0.1
        var = jax.random.uniform(next(keys), (cout,), jnp.float32, 0.5, 1.5)
        return (w, b, gamma, beta, mean, var)

    feat = nb_channels * 2 * 2
    hid = 2 * feat
    return {
        "block1": conv_block(2, nb_channels),
        "block2": conv_block(nb_channels, nb_channels),
        "block3": conv_block(nb_channels, nb_channels),
        "w1": jax.random.normal(next(keys), (feat, hid), jnp.float32) / np.sqrt(feat),
        "b1": jax.random.normal(next(keys), (hid,), jnp.float32) * 0.05,
        "w2": jax.random.normal(next(keys), (hid, 1), jnp.float32) / np.sqrt(hid),
        "b2": jax.random.normal(next(keys), (1,), jnp.float32) * 0.05,
    }


if __name__ == "__main__":
    nb_channels = 8
    key = jax.random.PRNGKey(0)
    pkey, xkey = jax.random.split(key)
    params = init_params(pkey, nb_channels)
    kparams = prepare_params(params, nb_channels)      # one-time weight preprocessing

    # spatial must be 16x16 so three 2x2 pools reach 2x2; 2 input channels
    x = jax.random.normal(xkey, (2, 2, 16, 16), jnp.float32)   # NCHW

    fwd = jax.jit(convnet_forward)
    y = jax.block_until_ready(fwd(x, kparams))
    assert y.shape == (2,) and y.dtype == jnp.int32
    assert bool(jnp.all((y == 0) | (y == 1)))
    print("KERNEL_OK")
</pallas_src>

<mosaic_0001>
module attributes {stable_mosaic.version = 11 : i64} {
  func.func @convnet_fused_kernel(%arg0: i32, %arg1: memref<16x512xbf16, #tpu.memory_space<vmem>>, %arg2: memref<512x2048xbf16, #tpu.memory_space<vmem>>, %arg3: memref<1x512xf32, #tpu.memory_space<vmem>>, %arg4: memref<512x512xbf16, #tpu.memory_space<vmem>>, %arg5: memref<1x128xf32, #tpu.memory_space<vmem>>, %arg6: memref<4x128x32xbf16, #tpu.memory_space<vmem>>, %arg7: memref<1x32xf32, #tpu.memory_space<vmem>>, %arg8: memref<32x64xbf16, #tpu.memory_space<vmem>>, %arg9: memref<1x64xf32, #tpu.memory_space<vmem>>, %arg10: memref<1x64xf32, #tpu.memory_space<vmem>>, %arg11: memref<1x1xf32, #tpu.memory_space<vmem>>, %arg12: memref<1x1x16xi32, #tpu.memory_space<vmem>>) attributes {dimension_semantics = [#tpu.dimension_semantics<parallel>], iteration_bounds = array<i64: 1>, scalar_prefetch = 0 : i64, scratch_operands = 0 : i64, tpu.core_type = #tpu.core_type<tc>, window_params = [{transform_indices = @transform_0, window_bounds = array<i64: 16, 512>}, {pipeline_mode = #tpu.pipeline_mode<synchronous>, transform_indices = @transform_1, window_bounds = array<i64: 512, 2048>}, {pipeline_mode = #tpu.pipeline_mode<synchronous>, transform_indices = @transform_2, window_bounds = array<i64: 1, 512>}, {pipeline_mode = #tpu.pipeline_mode<synchronous>, transform_indices = @transform_3, window_bounds = array<i64: 512, 512>}, {pipeline_mode = #tpu.pipeline_mode<synchronous>, transform_indices = @transform_4, window_bounds = array<i64: 1, 128>}, {pipeline_mode = #tpu.pipeline_mode<synchronous>, transform_indices = @transform_5, window_bounds = array<i64: 4, 128, 32>}, {pipeline_mode = #tpu.pipeline_mode<synchronous>, transform_indices = @transform_6, window_bounds = array<i64: 1, 32>}, {pipeline_mode = #tpu.pipeline_mode<synchronous>, transform_indices = @transform_7, window_bounds = array<i64: 32, 64>}, {pipeline_mode = #tpu.pipeline_mode<synchronous>, transform_indices = @transform_8, window_bounds = array<i64: 1, 64>}, {pipeline_mode = #tpu.pipeline_mode<synchronous>, transform_indices = @transform_9, window_bounds = array<i64: 1, 64>}, {pipeline_mode = #tpu.pipeline_mode<synchronous>, transform_indices = @transform_10, window_bounds = array<i64: 1, 1>}, {transform_indices = @transform_11, window_bounds = array<i64: 1, 1, 16>}]} {
    %c0 = arith.constant 0 : index
    %c0_0 = arith.constant 0 : index
    %0 = vector.load %arg1[%c0, %c0_0] : memref<16x512xbf16, #tpu.memory_space<vmem>>, vector<16x512xbf16>
    %c0_1 = arith.constant 0 : index
    %c0_2 = arith.constant 0 : index
    %1 = vector.load %arg2[%c0_1, %c0_2] : memref<512x2048xbf16, #tpu.memory_space<vmem>>, vector<512x2048xbf16>
    %cst = arith.constant dense<0.000000e+00> : vector<16x2048xf32>
    %2 = tpu.matmul %0, %1, %cst {dimension_numbers = #tpu.dot_dimension_numbers<[1], [0], [0], [1], [0, 0, 1, 1], [], []>} : vector<16x512xbf16>, vector<512x2048xbf16>, vector<16x2048xf32> -> vector<16x2048xf32>
    %3 = vector.extract_strided_slice %2 {offsets = [0, 0], sizes = [16, 512], strides = [1, 1]} : vector<16x2048xf32> to vector<16x512xf32>
    %4 = vector.extract_strided_slice %2 {offsets = [0, 512], sizes = [16, 512], strides = [1, 1]} : vector<16x2048xf32> to vector<16x512xf32>
    %5 = arith.maximumf %3, %4 : vector<16x512xf32>
    %6 = vector.extract_strided_slice %2 {offsets = [0, 1024], sizes = [16, 512], strides = [1, 1]} : vector<16x2048xf32> to vector<16x512xf32>
    %7 = vector.extract_strided_slice %2 {offsets = [0, 1536], sizes = [16, 512], strides = [1, 1]} : vector<16x2048xf32> to vector<16x512xf32>
    %8 = arith.maximumf %6, %7 : vector<16x512xf32>
    %9 = arith.maximumf %5, %8 : vector<16x512xf32>
    %c0_3 = arith.constant 0 : index
    %c0_4 = arith.constant 0 : index
    %10 = vector.load %arg3[%c0_3, %c0_4] : memref<1x512xf32, #tpu.memory_space<vmem>>, vector<1x512xf32>
    %11 = vector.broadcast %10 : vector<1x512xf32> to vector<16x512xf32>
    %12 = arith.addf %9, %11 : vector<16x512xf32>
    %13 = arith.truncf %12 : vector<16x512xf32> to vector<16x512xbf16>
    %c0_5 = arith.constant 0 : index
    %c0_6 = arith.constant 0 : index
    %14 = vector.load %arg4[%c0_5, %c0_6] : memref<512x512xbf16, #tpu.memory_space<vmem>>, vector<512x512xbf16>
    %cst_7 = arith.constant dense<0.000000e+00> : vector<16x512xf32>
    %15 = tpu.matmul %13, %14, %cst_7 {dimension_numbers = #tpu.dot_dimension_numbers<[1], [0], [0], [1], [0, 0, 1, 1], [], []>} : vector<16x512xbf16>, vector<512x512xbf16>, vector<16x512xf32> -> vector<16x512xf32>
    %16 = vector.extract_strided_slice %15 {offsets = [0, 0], sizes = [16, 128], strides = [1, 1]} : vector<16x512xf32> to vector<16x128xf32>
    %17 = vector.extract_strided_slice %15 {offsets = [0, 128], sizes = [16, 128], strides = [1, 1]} : vector<16x512xf32> to vector<16x128xf32>
    %18 = arith.maximumf %16, %17 : vector<16x128xf32>
    %19 = vector.extract_strided_slice %15 {offsets = [0, 256], sizes = [16, 128], strides = [1, 1]} : vector<16x512xf32> to vector<16x128xf32>
    %20 = vector.extract_strided_slice %15 {offsets = [0, 384], sizes = [16, 128], strides = [1, 1]} : vector<16x512xf32> to vector<16x128xf32>
    %21 = arith.maximumf %19, %20 : vector<16x128xf32>
    %22 = arith.maximumf %18, %21 : vector<16x128xf32>
    %c0_8 = arith.constant 0 : index
    %c0_9 = arith.constant 0 : index
    %23 = vector.load %arg5[%c0_8, %c0_9] : memref<1x128xf32, #tpu.memory_space<vmem>>, vector<1x128xf32>
    %24 = vector.broadcast %23 : vector<1x128xf32> to vector<16x128xf32>
    %25 = arith.addf %22, %24 : vector<16x128xf32>
    %26 = arith.truncf %25 : vector<16x128xf32> to vector<16x128xbf16>
    %c0_10 = arith.constant 0 : index
    %c0_11 = arith.constant 0 : index
    %c0_12 = arith.constant 0 : index
    %27 = vector.load %arg6[%c0_10, %c0_11, %c0_12] : memref<4x128x32xbf16, #tpu.memory_space<vmem>>, vector<1x128x32xbf16>
    %28 = vector.shape_cast %27 : vector<1x128x32xbf16> to vector<128x32xbf16>
    %cst_13 = arith.constant dense<0.000000e+00> : vector<16x32xf32>
    %29 = tpu.matmul %26, %28, %cst_13 {dimension_numbers = #tpu.dot_dimension_numbers<[1], [0], [0], [1], [0, 0, 1, 1], [], []>} : vector<16x128xbf16>, vector<128x32xbf16>, vector<16x32xf32> -> vector<16x32xf32>
    %c1 = arith.constant 1 : index
    %c0_14 = arith.constant 0 : index
    %c0_15 = arith.constant 0 : index
    %30 = vector.load %arg6[%c1, %c0_14, %c0_15] : memref<4x128x32xbf16, #tpu.memory_space<vmem>>, vector<1x128x32xbf16>
    %31 = vector.shape_cast %30 : vector<1x128x32xbf16> to vector<128x32xbf16>
    %cst_16 = arith.constant dense<0.000000e+00> : vector<16x32xf32>
    %32 = tpu.matmul %26, %31, %cst_16 {dimension_numbers = #tpu.dot_dimension_numbers<[1], [0], [0], [1], [0, 0, 1, 1], [], []>} : vector<16x128xbf16>, vector<128x32xbf16>, vector<16x32xf32> -> vector<16x32xf32>
    %33 = arith.maximumf %29, %32 : vector<16x32xf32>
    %c2 = arith.constant 2 : index
    %c0_17 = arith.constant 0 : index
    %c0_18 = arith.constant 0 : index
    %34 = vector.load %arg6[%c2, %c0_17, %c0_18] : memref<4x128x32xbf16, #tpu.memory_space<vmem>>, vector<1x128x32xbf16>
    %35 = vector.shape_cast %34 : vector<1x128x32xbf16> to vector<128x32xbf16>
    %cst_19 = arith.constant dense<0.000000e+00> : vector<16x32xf32>
    %36 = tpu.matmul %26, %35, %cst_19 {dimension_numbers = #tpu.dot_dimension_numbers<[1], [0], [0], [1], [0, 0, 1, 1], [], []>} : vector<16x128xbf16>, vector<128x32xbf16>, vector<16x32xf32> -> vector<16x32xf32>
    %37 = arith.maximumf %33, %36 : vector<16x32xf32>
    %c3 = arith.constant 3 : index
    %c0_20 = arith.constant 0 : index
    %c0_21 = arith.constant 0 : index
    %38 = vector.load %arg6[%c3, %c0_20, %c0_21] : memref<4x128x32xbf16, #tpu.memory_space<vmem>>, vector<1x128x32xbf16>
    %39 = vector.shape_cast %38 : vector<1x128x32xbf16> to vector<128x32xbf16>
    %cst_22 = arith.constant dense<0.000000e+00> : vector<16x32xf32>
    %40 = tpu.matmul %26, %39, %cst_22 {dimension_numbers = #tpu.dot_dimension_numbers<[1], [0], [0], [1], [0, 0, 1, 1], [], []>} : vector<16x128xbf16>, vector<128x32xbf16>, vector<16x32xf32> -> vector<16x32xf32>
    %41 = arith.maximumf %37, %40 : vector<16x32xf32>
    %c0_23 = arith.constant 0 : index
    %c0_24 = arith.constant 0 : index
    %42 = vector.load %arg7[%c0_23, %c0_24] : memref<1x32xf32, #tpu.memory_space<vmem>>, vector<1x32xf32>
    %43 = vector.broadcast %42 : vector<1x32xf32> to vector<16x32xf32>
    %44 = arith.addf %41, %43 : vector<16x32xf32>
    %45 = arith.truncf %44 : vector<16x32xf32> to vector<16x32xbf16>
    %c0_25 = arith.constant 0 : index
    %c0_26 = arith.constant 0 : index
    %46 = vector.load %arg8[%c0_25, %c0_26] : memref<32x64xbf16, #tpu.memory_space<vmem>>, vector<32x64xbf16>
    %cst_27 = arith.constant dense<0.000000e+00> : vector<16x64xf32>
    %47 = tpu.matmul %45, %46, %cst_27 {dimension_numbers = #tpu.dot_dimension_numbers<[1], [0], [0], [1], [0, 0, 1, 1], [], []>} : vector<16x32xbf16>, vector<32x64xbf16>, vector<16x64xf32> -> vector<16x64xf32>
    %c0_28 = arith.constant 0 : index
    %c0_29 = arith.constant 0 : index
    %48 = vector.load %arg9[%c0_28, %c0_29] : memref<1x64xf32, #tpu.memory_space<vmem>>, vector<1x64xf32>
    %49 = vector.broadcast %48 : vector<1x64xf32> to vector<16x64xf32>
    %50 = arith.addf %47, %49 : vector<16x64xf32>
    %cst_30 = arith.constant 0.000000e+00 : f32
    %51 = vector.broadcast %cst_30 : f32 to vector<16x64xf32>
    %52 = arith.maximumf %50, %51 : vector<16x64xf32>
    %c0_31 = arith.constant 0 : index
    %c0_32 = arith.constant 0 : index
    %53 = vector.load %arg10[%c0_31, %c0_32] : memref<1x64xf32, #tpu.memory_space<vmem>>, vector<1x64xf32>
    %54 = tpu.transpose %52, [1, 0] : vector<16x64xf32> -> vector<64x16xf32>
    %cst_33 = arith.constant dense<0.000000e+00> : vector<1x16xf32>
    %55 = tpu.matmul %53, %54, %cst_33 {dimension_numbers = #tpu.dot_dimension_numbers<[1], [0], [0], [1], [0, 0, 1, 1], [], []>} : vector<1x64xf32>, vector<64x16xf32>, vector<1x16xf32> -> vector<1x16xf32>
    %c0_34 = arith.constant 0 : index
    %c0_35 = arith.constant 0 : index
    %56 = vector.load %arg11[%c0_34, %c0_35] : memref<1x1xf32, #tpu.memory_space<vmem>>, vector<1x1xf32>
    %57 = vector.broadcast %56 : vector<1x1xf32> to vector<1x16xf32>
    %58 = arith.addf %55, %57 : vector<1x16xf32>
    %cst_36 = arith.constant 0.000000e+00 : f32
    %59 = vector.broadcast %cst_36 : f32 to vector<1x16xf32>
    %60 = arith.cmpf ogt, %58, %59 : vector<1x16xf32>
    %61 = arith.extui %60 : vector<1x16xi1> to vector<1x16xi32>
    %c0_37 = arith.constant 0 : index
    %c0_38 = arith.constant 0 : index
    %c0_39 = arith.constant 0 : index
    %62 = vector.load %arg12[%c0_37, %c0_38, %c0_39] : memref<1x1x16xi32, #tpu.memory_space<vmem>>, vector<1x1x16xi32>
    %63 = vector.shape_cast %62 : vector<1x1x16xi32> to vector<1x16xi32>
    %64 = vector.shape_cast %61 : vector<1x16xi32> to vector<1x1x16xi32>
    tpu.vector_store %arg12[%c0_37, %c0_38, %c0_39], %64 {strides = array<i32>} : memref<1x1x16xi32, #tpu.memory_space<vmem>>, vector<1x1x16xi32>,
    return
  }
  func.func @transform_0(%arg0: i32) -> (i32, i32) {
    %c0_i32 = arith.constant 0 : i32
    %c0_i32_0 = arith.constant 0 : i32
    return %arg0, %c0_i32 : i32, i32
  }
  func.func @transform_1(%arg0: i32) -> (i32, i32) {
    %c0_i32 = arith.constant 0 : i32
    %c0_i32_0 = arith.constant 0 : i32
    %c0_i32_1 = arith.constant 0 : i32
    return %c0_i32, %c0_i32_0 : i32, i32
  }
  func.func @transform_2(%arg0: i32) -> (i32, i32) {
    %c0_i32 = arith.constant 0 : i32
    %c0_i32_0 = arith.constant 0 : i32
    %c0_i32_1 = arith.constant 0 : i32
    return %c0_i32, %c0_i32_0 : i32, i32
  }
  func.func @transform_3(%arg0: i32) -> (i32, i32) {
    %c0_i32 = arith.constant 0 : i32
    %c0_i32_0 = arith.constant 0 : i32
    %c0_i32_1 = arith.constant 0 : i32
    return %c0_i32, %c0_i32_0 : i32, i32
  }
  func.func @transform_4(%arg0: i32) -> (i32, i32) {
    %c0_i32 = arith.constant 0 : i32
    %c0_i32_0 = arith.constant 0 : i32
    %c0_i32_1 = arith.constant 0 : i32
    return %c0_i32, %c0_i32_0 : i32, i32
  }
  func.func @transform_5(%arg0: i32) -> (i32, i32, i32) {
    %c0_i32 = arith.constant 0 : i32
    %c0_i32_0 = arith.constant 0 : i32
    %c0_i32_1 = arith.constant 0 : i32
    %c0_i32_2 = arith.constant 0 : i32
    return %c0_i32, %c0_i32_0, %c0_i32_1 : i32, i32, i32
  }
  func.func @transform_6(%arg0: i32) -> (i32, i32) {
    %c0_i32 = arith.constant 0 : i32
    %c0_i32_0 = arith.constant 0 : i32
    %c0_i32_1 = arith.constant 0 : i32
    return %c0_i32, %c0_i32_0 : i32, i32
  }
  func.func @transform_7(%arg0: i32) -> (i32, i32) {
    %c0_i32 = arith.constant 0 : i32
    %c0_i32_0 = arith.constant 0 : i32
    %c0_i32_1 = arith.constant 0 : i32
    return %c0_i32, %c0_i32_0 : i32, i32
  }
  func.func @transform_8(%arg0: i32) -> (i32, i32) {
    %c0_i32 = arith.constant 0 : i32
    %c0_i32_0 = arith.constant 0 : i32
    %c0_i32_1 = arith.constant 0 : i32
    return %c0_i32, %c0_i32_0 : i32, i32
  }
  func.func @transform_9(%arg0: i32) -> (i32, i32) {
    %c0_i32 = arith.constant 0 : i32
    %c0_i32_0 = arith.constant 0 : i32
    %c0_i32_1 = arith.constant 0 : i32
    return %c0_i32, %c0_i32_0 : i32, i32
  }
  func.func @transform_10(%arg0: i32) -> (i32, i32) {
    %c0_i32 = arith.constant 0 : i32
    %c0_i32_0 = arith.constant 0 : i32
    %c0_i32_1 = arith.constant 0 : i32
    return %c0_i32, %c0_i32_0 : i32, i32
  }
  func.func @transform_11(%arg0: i32) -> (i32, i32, i32) {
    %c0_i32 = arith.constant 0 : i32
    %c0_i32_0 = arith.constant 0 : i32
    %c0_i32_1 = arith.constant 0 : i32
    return %arg0, %c0_i32, %c0_i32_0 : i32, i32, i32
  }
}

</mosaic_0001>

<llo_original>
// kernel: convnet_forward.1
$region0: #{convnet_forward.1}
  #allocation0 [shape = 'u32[]', space=smem, size = 0x4, offset = 0x4, fixed_abs, tag = 'smem constant byte address 0x4 - core index']
  #allocation1 [shape = 'u32[144,128]{1,0:T(1,128)}', space=vmem, size = 0x12000, scoped, tag = 'internal scratch']
  #allocation2 [shape = 'f32[1,1]{1,0:T(1,128)S(1)}', space=vmem, size = 0x200, scoped, tag = 'scoped memory for convnet_forward.1']
  %s0 = inlined_call_operand.vmem [shape: bf16[16,512], index: 0, kind: input, shape index: {}]
  %s1 = inlined_call_operand.hbm [shape: bf16[512,2048], index: 1, kind: input, shape index: {}]
  %s2 = inlined_call_operand.hbm [shape: f32[1,512], index: 2, kind: input, shape index: {}]
  %s3 = inlined_call_operand.hbm [shape: bf16[512,512], index: 3, kind: input, shape index: {}]
  %s4 = inlined_call_operand.hbm [shape: f32[1,128], index: 4, kind: input, shape index: {}]
  %s5 = inlined_call_operand.vmem [shape: bf16[4,128,32], index: 5, kind: input, shape index: {}]
  %s6 = inlined_call_operand.hbm [shape: f32[1,32], index: 6, kind: input, shape index: {}]
  %s7 = inlined_call_operand.hbm [shape: bf16[32,64], index: 7, kind: input, shape index: {}]
  %s8 = inlined_call_operand.hbm [shape: f32[1,64], index: 8, kind: input, shape index: {}]
  %s9 = inlined_call_operand.hbm [shape: f32[1,64], index: 9, kind: input, shape index: {}]
  %s10 = inlined_call_operand.<no memory space> [shape: f32[1,1], index: 10, kind: input, shape index: {}]
  %s11 = inlined_call_operand.vmem [shape: s32[1,1,16], index: 11, kind: output, shape index: {}]
  %s12 = sld [smem:[#allocation0]]
  $region86: #{convnet_forward.1} parent=0
    _
  %s14 = ssub.s32 1, %s12
  %s15 = scalar_select 0, %s14, %s12
  %v16 = vstv %s10
  %17 = vst [vmem:[#allocation2] sm:$0x1] %v16
  $region1: #{convnet_forward.1} parent=0
    #allocation3 [shape = 'u8[2097152]{0}', space=vmem, size = 0x200000, scoped, tag = 'input window, operand 1, single buffered']
    #allocation4 [shape = 's32[1]{0}', space=sflag, size = 0x4, scoped, tag = 'scoped memory for convnet_forward.1']
    #allocation5 [shape = 'u8[2048]{0}', space=vmem, size = 0x800, scoped, tag = 'input window, operand 2, single buffered']
    #allocation6 [shape = 's32[1]{0}', space=sflag, size = 0x4, scoped, tag = 'scoped memory for convnet_forward.1']
    #allocation7 [shape = 'u8[524288]{0}', space=vmem, size = 0x80000, scoped, tag = 'input window, operand 3, single buffered']
    #allocation8 [shape = 'u8[512]{0}', space=vmem, size = 0x400, scoped, tag = 'input window, operand 4, single buffered']
    #allocation9 [shape = 's32[1]{0}', space=sflag, size = 0x4, scoped, tag = 'scoped memory for convnet_forward.1']
    #allocation10 [shape = 'u8[512]{0}', space=vmem, size = 0x400, scoped, tag = 'input window, operand 6, single buffered']
    #allocation11 [shape = 'u8[8192]{0}', space=vmem, size = 0x2000, scoped, tag = 'input window, operand 7, single buffered']
    #allocation12 [shape = 's32[1]{0}', space=sflag, size = 0x4, scoped, tag = 'scoped memory for convnet_forward.1']
    #allocation13 [shape = 'u8[512]{0}', space=vmem, size = 0x400, scoped, tag = 'input window, operand 8, single buffered']
    #allocation14 [shape = 'u8[512]{0}', space=vmem, size = 0x400, scoped, tag = 'input window, operand 9, single buffered']
    #allocation15 [shape = 's32[1]{0}', space=sflag, size = 0x4, scoped, tag = 'scoped memory for convnet_forward.1']
    %18 = vsyncpa [#allocation4], 0
    %19 = vsyncpa [#allocation6], 0
    %20 = vsyncpa [#allocation9], 0
    %21 = vsyncpa [#allocation12], 0
    %22 = vsyncpa [#allocation15], 0
    // Predicated region
    $region2: #{convnet_forward.1} parent=1 // pred_check
      _
    $region3: #{convnet_forward.1} parent=1 // pred_check_branch
      %24 = sbr.rel (0) target = $region5
    $region4: #{convnet_forward.1} parent=1 // pred_region
      _
    $region5: #{convnet_forward.1} parent=1 // pred_fallthru
      _
    // Predicated region
    $region6: #{convnet_forward.1} parent=1 // pred_check
      _
    $region7: #{convnet_forward.1} parent=1 // pred_check_branch
      %26 = sbr.rel (0) target = $region9
    $region8: #{convnet_forward.1} parent=1 // pred_region
      %s28 = ssub.s32 65536, 65536
      %29 = vsyncadd [#allocation4], %s28
      %s30 = sshll.u32 [#allocation3], 4
      %s31 = int_to_ptr.vmem [resolvable:$true] %s30
      %36 = dma.hbm_to_vmem [thread:$0]  %s1, 65536, %s31, [#allocation4], 1024, 1024, 64
    $region9: #{convnet_forward.1} parent=1 // pred_fallthru
      _
    // Predicated region
    $region10: #{convnet_forward.1} parent=1 // pred_check
      _
    $region11: #{convnet_forward.1} parent=1 // pred_check_branch
      %38 = sbr.rel (0) target = $region13
    $region12: #{convnet_forward.1} parent=1 // pred_region
      %s40 = ssub.s32 64, 64
      %41 = vsyncadd [#allocation6], %s40
      %s43 = sshll.u32 [#allocation5], 4
      %s44 = int_to_ptr.vmem [resolvable:$true] %s43
      %46 = dma.hbm_to_vmem [thread:$0]  %s2, 64, %s44, [#allocation6]
    $region13: #{convnet_forward.1} parent=1 // pred_fallthru
      _
    // Predicated region
    $region14: #{convnet_forward.1} parent=1 // pred_check
      _
    $region15: #{convnet_forward.1} parent=1 // pred_check_branch
      %48 = sbr.rel (0) target = $region17
    $region16: #{convnet_forward.1} parent=1 // pred_region
      %s50 = ssub.s32 16384, 16384
      %51 = vsyncadd [#allocation6], %s50
      %s52 = sshll.u32 [#allocation7], 4
      %s53 = int_to_ptr.vmem [resolvable:$true] %s52
      %58 = dma.hbm_to_vmem [thread:$0]  %s3, 16384, %s53, [#allocation6], 256, 256, 16
    $region17: #{convnet_forward.1} parent=1 // pred_fallthru
      _
    // Predicated region
    $region18: #{convnet_forward.1} parent=1 // pred_check
      _
    $region19: #{convnet_forward.1} parent=1 // pred_check_branch
      %60 = sbr.rel (0) target = $region21
    $region20: #{convnet_forward.1} parent=1 // pred_region
      %s62 = ssub.s32 16, 16
      %63 = vsyncadd [#allocation9], %s62
      %s65 = sshll.u32 [#allocation8], 4
      %s66 = int_to_ptr.vmem [resolvable:$true] %s65
      %68 = dma.hbm_to_vmem [thread:$0]  %s4, 16, %s66, [#allocation9]
    $region21: #{convnet_forward.1} parent=1 // pred_fallthru
      _
    // Predicated region
    $region22: #{convnet_forward.1} parent=1 // pred_check
      _
    $region23: #{convnet_forward.1} parent=1 // pred_check_branch
      %70 = sbr.rel (0) target = $region25
    $region24: #{convnet_forward.1} parent=1 // pred_region
      _
    $region25: #{convnet_forward.1} parent=1 // pred_fallthru
      _
    // Predicated region
    $region26: #{convnet_forward.1} parent=1 // pred_check
      _
    $region27: #{convnet_forward.1} parent=1 // pred_check_branch
      %72 = sbr.rel (0) target = $region29
    $region28: #{convnet_forward.1} parent=1 // pred_region
      %s74 = ssub.s32 16, 16
      %75 = vsyncadd [#allocation9], %s74
      %s77 = sshll.u32 [#allocation10], 4
      %s78 = int_to_ptr.vmem [resolvable:$true] %s77
      %80 = dma.hbm_to_vmem [thread:$0]  %s6, 16, %s78, [#allocation9]
    $region29: #{convnet_forward.1} parent=1 // pred_fallthru
      _
    // Predicated region
    $region30: #{convnet_forward.1} parent=1 // pred_check
      _
    $region31: #{convnet_forward.1} parent=1 // pred_check_branch
      %82 = sbr.rel (0) target = $region33
    $region32: #{convnet_forward.1} parent=1 // pred_region
      %s84 = ssub.s32 256, 256
      %85 = vsyncadd [#allocation12], %s84
      %s86 = sshll.u32 [#allocation11], 4
      %s87 = int_to_ptr.vmem [resolvable:$true] %s86
      %92 = dma.hbm_to_vmem [thread:$0]  %s7, 256, %s87, [#allocation12], 64, 64, 4
    $region33: #{convnet_forward.1} parent=1 // pred_fallthru
      _
    // Predicated region
    $region34: #{convnet_forward.1} parent=1 // pred_check
      _
    $region35: #{convnet_forward.1} parent=1 // pred_check_branch
      %94 = sbr.rel (0) target = $region37
    $region36: #{convnet_forward.1} parent=1 // pred_region
      %s96 = ssub.s32 16, 16
      %97 = vsyncadd [#allocation12], %s96
      %s99 = sshll.u32 [#allocation13], 4
      %s100 = int_to_ptr.vmem [resolvable:$true] %s99
      %102 = dma.hbm_to_vmem [thread:$0]  %s8, 16, %s100, [#allocation12]
    $region37: #{convnet_forward.1} parent=1 // pred_fallthru
      _
    // Predicated region
    $region38: #{convnet_forward.1} parent=1 // pred_check
      _
    $region39: #{convnet_forward.1} parent=1 // pred_check_branch
      %104 = sbr.rel (0) target = $region41
    $region40: #{convnet_forward.1} parent=1 // pred_region
      %s106 = ssub.s32 16, 16
      %107 = vsyncadd [#allocation15], %s106
      %s109 = sshll.u32 [#allocation14], 4
      %s110 = int_to_ptr.vmem [resolvable:$true] %s109
      %112 = dma.hbm_to_vmem [thread:$0]  %s9, 16, %s110, [#allocation15]
    $region41: #{convnet_forward.1} parent=1 // pred_fallthru
      _
    // Predicated region
    $region42: #{convnet_forward.1} parent=1 // pred_check
      _
    $region43: #{convnet_forward.1} parent=1 // pred_check_branch
      %114 = sbr.rel (0) target = $region45
    $region44: #{convnet_forward.1} parent=1 // pred_region
      _
    $region45: #{convnet_forward.1} parent=1 // pred_fallthru
      _
    // Predicated region
    $region46: #{convnet_forward.1} parent=1 // pred_check
      _
    $region47: #{convnet_forward.1} parent=1 // pred_check_branch
      %116 = sbr.rel (0) target = $region49
    $region48: #{convnet_forward.1} parent=1 // pred_region
      %117 = dma.done [#allocation4], 65536
    $region49: #{convnet_forward.1} parent=1 // pred_fallthru
      _
    // Predicated region
    $region50: #{convnet_forward.1} parent=1 // pred_check
      _
    $region51: #{convnet_forward.1} parent=1 // pred_check_branch
      %119 = sbr.rel (0) target = $region53
    $region52: #{convnet_forward.1} parent=1 // pred_region
      %120 = dma.done [#allocation6], 64
    $region53: #{convnet_forward.1} parent=1 // pred_fallthru
      _
    // Predicated region
    $region54: #{convnet_forward.1} parent=1 // pred_check
      _
    $region55: #{convnet_forward.1} parent=1 // pred_check_branch
      %122 = sbr.rel (0) target = $region57
    $region56: #{convnet_forward.1} parent=1 // pred_region
      %123 = dma.done [#allocation6], 16384
    $region57: #{convnet_forward.1} parent=1 // pred_fallthru
      _
    // Predicated region
    $region58: #{convnet_forward.1} parent=1 // pred_check
      _
    $region59: #{convnet_forward.1} parent=1 // pred_check_branch
      %125 = sbr.rel (0) target = $region61
    $region60: #{convnet_forward.1} parent=1 // pred_region
      %126 = dma.done [#allocation9], 16
    $region61: #{convnet_forward.1} parent=1 // pred_fallthru
      _
    // Predicated region
    $region62: #{convnet_forward.1} parent=1 // pred_check
      _
    $region63: #{convnet_forward.1} parent=1 // pred_check_branch
      %128 = sbr.rel (0) target = $region65
    $region64: #{convnet_forward.1} parent=1 // pred_region
      %129 = dma.done [#allocation9], 16
    $region65: #{convnet_forward.1} parent=1 // pred_fallthru
      _
    // Predicated region
    $region66: #{convnet_forward.1} parent=1 // pred_check
      _
    $region67: #{convnet_forward.1} parent=1 // pred_check_branch
      %131 = sbr.rel (0) target = $region69
    $region68: #{convnet_forward.1} parent=1 // pred_region
      %132 = dma.done [#allocation12], 256
    $region69: #{convnet_forward.1} parent=1 // pred_fallthru
      _
    // Predicated region
    $region70: #{convnet_forward.1} parent=1 // pred_check
      _
    $region71: #{convnet_forward.1} parent=1 // pred_check_branch
      %134 = sbr.rel (0) target = $region73
    $region72: #{convnet_forward.1} parent=1 // pred_region
      %135 = dma.done [#allocation12], 16
    $region73: #{convnet_forward.1} parent=1 // pred_fallthru
      _
    // Predicated region
    $region74: #{convnet_forward.1} parent=1 // pred_check
      _
    $region75: #{convnet_forward.1} parent=1 // pred_check_branch
      %137 = sbr.rel (0) target = $region77
    $region76: #{convnet_forward.1} parent=1 // pred_region
      %138 = dma.done [#allocation15], 16
    $region77: #{convnet_forward.1} parent=1 // pred_fallthru
      _
    %v140 = vld [vmem:[%s0] sm:$0xff]
    %v141 = vld [vmem:[%s0 + $0x8] sm:$0xff]
    %v142 = vld [vmem:[%s0 + $0x10] sm:$0xff]
    %v143 = vld [vmem:[%s0 + $0x18] sm:$0xff]
    %v144 = vld [vmem:[#allocation3] sm:$0xff]
    %v145 = vld [vmem:[#allocation3 + $0x8] sm:$0xff]
    %v146 = vld [vmem:[#allocation3 + $0x10] sm:$0xff]
    %v147 = vld [vmem:[#allocation3 + $0x18] sm:$0xff]
    %v148 = vld [vmem:[#allocation3 + $0x20] sm:$0xff]
    %v149 = vld [vmem:[#allocation3 + $0x28] sm:$0xff]
    %v150 = vld [vmem:[#allocation3 + $0x30] sm:$0xff]
    %v151 = vld [vmem:[#allocation3 + $0x38] sm:$0xff]
    %v152 = vld [vmem:[#allocation3 + $0x40] sm:$0xff]
    %v153 = vld [vmem:[#allocation3 + $0x48] sm:$0xff]
    %v154 = vld [vmem:[#allocation3 + $0x50] sm:$0xff]
    %v155 = vld [vmem:[#allocation3 + $0x58] sm:$0xff]
    %v156 = vld [vmem:[#allocation3 + $0x60] sm:$0xff]
    %v157 = vld [vmem:[#allocation3 + $0x68] sm:$0xff]
    %v158 = vld [vmem:[#allocation3 + $0x70] sm:$0xff]
    %v159 = vld [vmem:[#allocation3 + $0x78] sm:$0xff]
    %v160 = vld [vmem:[#allocation3 + $0x80] sm:$0xff]
    %v161 = vld [vmem:[#allocation3 + $0x88] sm:$0xff]
    %v162 = vld [vmem:[#allocation3 + $0x90] sm:$0xff]
    %v163 = vld [vmem:[#allocation3 + $0x98] sm:$0xff]
    %v164 = vld [vmem:[#allocation3 + $0xa0] sm:$0xff]
    %v165 = vld [vmem:[#allocation3 + $0xa8] sm:$0xff]
    %v166 = vld [vmem:[#allocation3 + $0xb0] sm:$0xff]
    %v167 = vld [vmem:[#allocation3 + $0xb8] sm:$0xff]
    %v168 = vld [vmem:[#allocation3 + $0xc0] sm:$0xff]
    %v169 = vld [vmem:[#allocation3 + $0xc8] sm:$0xff]
    %v170 = vld [vmem:[#allocation3 + $0xd0] sm:$0xff]
    %v171 = vld [vmem:[#allocation3 + $0xd8] sm:$0xff]
    %v172 = vld [vmem:[#allocation3 + $0xe0] sm:$0xff]
    %v173 = vld [vmem:[#allocation3 + $0xe8] sm:$0xff]
    %v174 = vld [vmem:[#allocation3 + $0xf0] sm:$0xff]
    %v175 = vld [vmem:[#allocation3 + $0xf8] sm:$0xff]
    %v176 = vld [vmem:[#allocation3 + $0x100] sm:$0xff]
    %v177 = vld [vmem:[#allocation3 + $0x108] sm:$0xff]
    %v178 = vld [vmem:[#allocation3 + $0x110] sm:$0xff]
    %v179 = vld [vmem:[#allocation3 + $0x118] sm:$0xff]
    %v180 = vld [vmem:[#allocation3 + $0x120] sm:$0xff]
    %v181 = vld [vmem:[#allocation3 + $0x128] sm:$0xff]
    %v182 = vld [vmem:[#allocation3 + $0x130] sm:$0xff]
    %v183 = vld [vmem:[#allocation3 + $0x138] sm:$0xff]
    %v184 = vld [vmem:[#allocation3 + $0x140] sm:$0xff]
    %v185 = vld [vmem:[#allocation3 + $0x148] sm:$0xff]
    %v186 = vld [vmem:[#allocation3 + $0x150] sm:$0xff]
    %v187 = vld [vmem:[#allocation3 + $0x158] sm:$0xff]
    %v188 = vld [vmem:[#allocation3 + $0x160] sm:$0xff]
    %v189 = vld [vmem:[#allocation3 + $0x168] sm:$0xff]
    %v190 = vld [vmem:[#allocation3 + $0x170] sm:$0xff]
    %v191 = vld [vmem:[#allocation3 + $0x178] sm:$0xff]
    %v192 = vld [vmem:[#allocation3 + $0x180] sm:$0xff]
    %v193 = vld [vmem:[#allocation3 + $0x188] sm:$0xff]
    %v194 = vld [vmem:[#allocation3 + $0x190] sm:$0xff]
    %v195 = vld [vmem:[#allocation3 + $0x198] sm:$0xff]
    %v196 = vld [vmem:[#allocation3 + $0x1a0] sm:$0xff]
    %v197 = vld [vmem:[#allocation3 + $0x1a8] sm:$0xff]
    %v198 = vld [vmem:[#allocation3 + $0x1b0] sm:$0xff]
    %v199 = vld [vmem:[#allocation3 + $0x1b8] sm:$0xff]
    %v200 = vld [vmem:[#allocation3 + $0x1c0] sm:$0xff]
    %v201 = vld [vmem:[#allocation3 + $0x1c8] sm:$0xff]
    %v202 = vld [vmem:[#allocation3 + $0x1d0] sm:$0xff]
    %v203 = vld [vmem:[#allocation3 + $0x1d8] sm:$0xff]
    %v204 = vld [vmem:[#allocation3 + $0x1e0] sm:$0xff]
    %v205 = vld [vmem:[#allocation3 + $0x1e8] sm:$0xff]
    %v206 = vld [vmem:[#allocation3 + $0x1f0] sm:$0xff]
    %v207 = vld [vmem:[#allocation3 + $0x1f8] sm:$0xff]
    %v208 = vld [vmem:[#allocation3 + $0x200] sm:$0xff]
    %v209 = vld [vmem:[#allocation3 + $0x208] sm:$0xff]
    %v210 = vld [vmem:[#allocation3 + $0x210] sm:$0xff]
    %v211 = vld [vmem:[#allocation3 + $0x218] sm:$0xff]
    %v212 = vld [vmem:[#allocation3 + $0x220] sm:$0xff]
    %v213 = vld [vmem:[#allocation3 + $0x228] sm:$0xff]
    %v214 = vld [vmem:[#allocation3 + $0x230] sm:$0xff]
    %v215 = vld [vmem:[#allocation3 + $0x238] sm:$0xff]
    %v216 = vld [vmem:[#allocation3 + $0x240] sm:$0xff]
    %v217 = vld [vmem:[#allocation3 + $0x248] sm:$0xff]
    %v218 = vld [vmem:[#allocation3 + $0x250] sm:$0xff]
    %v219 = vld [vmem:[#allocation3 + $0x258] sm:$0xff]
    %v220 = vld [vmem:[#allocation3 + $0x260] sm:$0xff]
    %v221 = vld [vmem:[#allocation3 + $0x268] sm:$0xff]
    %v222 = vld [vmem:[#allocation3 + $0x270] sm:$0xff]
    %v223 = vld [vmem:[#allocation3 + $0x278] sm:$0xff]
    %v224 = vld [vmem:[#allocation3 + $0x280] sm:$0xff]
    %v225 = vld [vmem:[#allocation3 + $0x288] sm:$0xff]
    %v226 = vld [vmem:[#allocation3 + $0x290] sm:$0xff]
    %v227 = vld [vmem:[#allocation3 + $0x298] sm:$0xff]
    %v228 = vld [vmem:[#allocation3 + $0x2a0] sm:$0xff]
    %v229 = vld [vmem:[#allocation3 + $0x2a8] sm:$0xff]
    %v230 = vld [vmem:[#allocation3 + $0x2b0] sm:$0xff]
    %v231 = vld [vmem:[#allocation3 + $0x2b8] sm:$0xff]
    %v232 = vld [vmem:[#allocation3 + $0x2c0] sm:$0xff]
    %v233 = vld [vmem:[#allocation3 + $0x2c8] sm:$0xff]
    %v234 = vld [vmem:[#allocation3 + $0x2d0] sm:$0xff]
    %v235 = vld [vmem:[#allocation3 + $0x2d8] sm:$0xff]
    %v236 = vld [vmem:[#allocation3 + $0x2e0] sm:$0xff]
    %v237 = vld [vmem:[#allocation3 + $0x2e8] sm:$0xff]
    %v238 = vld [vmem:[#allocation3 + $0x2f0] sm:$0xff]
    %v239 = vld [vmem:[#allocation3 + $0x2f8] sm:$0xff]
    %v240 = vld [vmem:[#allocation3 + $0x300] sm:$0xff]
    %v241 = vld [vmem:[#allocation3 + $0x308] sm:$0xff]
    %v242 = vld [vmem:[#allocation3 + $0x310] sm:$0xff]
    %v243 = vld [vmem:[#allocation3 + $0x318] sm:$0xff]
    %v244 = vld [vmem:[#allocation3 + $0x320] sm:$0xff]
    %v245 = vld [vmem:[#allocation3 + $0x328] sm:$0xff]
    %v246 = vld [vmem:[#allocation3 + $0x330] sm:$0xff]
    %v247 = vld [vmem:[#allocation3 + $0x338] sm:$0xff]
    %v248 = vld [vmem:[#allocation3 + $0x340] sm:$0xff]
    %v249 = vld [vmem:[#allocation3 + $0x348] sm:$0xff]
    %v250 = vld [vmem:[#allocation3 + $0x350] sm:$0xff]
    %v251 = vld [vmem:[#allocation3 + $0x358] sm:$0xff]
    %v252 = vld [vmem:[#allocation3 + $0x360] sm:$0xff]
    %v253 = vld [vmem:[#allocation3 + $0x368] sm:$0xff]
    %v254 = vld [vmem:[#allocation3 + $0x370] sm:$0xff]
    %v255 = vld [vmem:[#allocation3 + $0x378] sm:$0xff]
    %v256 = vld [vmem:[#allocation3 + $0x380] sm:$0xff]
    %v257 = vld [vmem:[#allocation3 + $0x388] sm:$0xff]
    %v258 = vld [vmem:[#allocation3 + $0x390] sm:$0xff]
    %v259 = vld [vmem:[#allocation3 + $0x398] sm:$0xff]
    %v260 = vld [vmem:[#allocation3 + $0x3a0] sm:$0xff]
    %v261 = vld [vmem:[#allocation3 + $0x3a8] sm:$0xff]
    %v262 = vld [vmem:[#allocation3 + $0x3b0] sm:$0xff]
    %v263 = vld [vmem:[#allocation3 + $0x3b8] sm:$0xff]
    %v264 = vld [vmem:[#allocation3 + $0x3c0] sm:$0xff]
    %v265 = vld [vmem:[#allocation3 + $0x3c8] sm:$0xff]
    %v266 = vld [vmem:[#allocation3 + $0x3d0] sm:$0xff]
    %v267 = vld [vmem:[#allocation3 + $0x3d8] sm:$0xff]
    %v268 = vld [vmem:[#allocation3 + $0x3e0] sm:$0xff]
    %v269 = vld [vmem:[#allocation3 + $0x3e8] sm:$0xff]
    %v270 = vld [vmem:[#allocation3 + $0x3f0] sm:$0xff]
    %v271 = vld [vmem:[#allocation3 + $0x3f8] sm:$0xff]
    %v272 = vld [vmem:[#allocation3 + $0x400] sm:$0xff]
    %v273 = vld [vmem:[#allocation3 + $0x408] sm:$0xff]
    %v274 = vld [vmem:[#allocation3 + $0x410] sm:$0xff]
    %v275 = vld [vmem:[#allocation3 + $0x418] sm:$0xff]
    %v276 = vld [vmem:[#allocation3 + $0x420] sm:$0xff]
    %v277 = vld [vmem:[#allocation3 + $0x428] sm:$0xff]
    %v278 = vld [vmem:[#allocation3 + $0x430] sm:$0xff]
    %v279 = vld [vmem:[#allocation3 + $0x438] sm:$0xff]
    %v280 = vld [vmem:[#allocation3 + $0x440] sm:$0xff]
    %v281 = vld [vmem:[#allocation3 + $0x448] sm:$0xff]
    %v282 = vld [vmem:[#allocation3 + $0x450] sm:$0xff]
    %v283 = vld [vmem:[#allocation3 + $0x458] sm:$0xff]
    %v284 = vld [vmem:[#allocation3 + $0x460] sm:$0xff]
    %v285 = vld [vmem:[#allocation3 + $0x468] sm:$0xff]
    %v286 = vld [vmem:[#allocation3 + $0x470] sm:$0xff]
    %v287 = vld [vmem:[#allocation3 + $0x478] sm:$0xff]
    %v288 = vld [vmem:[#allocation3 + $0x480] sm:$0xff]
    %v289 = vld [vmem:[#allocation3 + $0x488] sm:$0xff]
    %v290 = vld [vmem:[#allocation3 + $0x490] sm:$0xff]
    %v291 = vld [vmem:[#allocation3 + $0x498] sm:$0xff]
    %v292 = vld [vmem:[#allocation3 + $0x4a0] sm:$0xff]
    %v293 = vld [vmem:[#allocation3 + $0x4a8] sm:$0xff]
    %v294 = vld [vmem:[#allocation3 + $0x4b0] sm:$0xff]
    %v295 = vld [vmem:[#allocation3 + $0x4b8] sm:$0xff]
    %v296 = vld [vmem:[#allocation3 + $0x4c0] sm:$0xff]
    %v297 = vld [vmem:[#allocation3 + $0x4c8] sm:$0xff]
    %v298 = vld [vmem:[#allocation3 + $0x4d0] sm:$0xff]
    %v299 = vld [vmem:[#allocation3 + $0x4d8] sm:$0xff]
    %v300 = vld [vmem:[#allocation3 + $0x4e0] sm:$0xff]
    %v301 = vld [vmem:[#allocation3 + $0x4e8] sm:$0xff]
    %v302 = vld [vmem:[#allocation3 + $0x4f0] sm:$0xff]
    %v303 = vld [vmem:[#allocation3 + $0x4f8] sm:$0xff]
    %v304 = vld [vmem:[#allocation3 + $0x500] sm:$0xff]
    %v305 = vld [vmem:[#allocation3 + $0x508] sm:$0xff]
    %v306 = vld [vmem:[#allocation3 + $0x510] sm:$0xff]
    %v307 = vld [vmem:[#allocation3 + $0x518] sm:$0xff]
    %v308 = vld [vmem:[#allocation3 + $0x520] sm:$0xff]
    %v309 = vld [vmem:[#allocation3 + $0x528] sm:$0xff]
    %v310 = vld [vmem:[#allocation3 + $0x530] sm:$0xff]
    %v311 = vld [vmem:[#allocation3 + $0x538] sm:$0xff]
    %v312 = vld [vmem:[#allocation3 + $0x540] sm:$0xff]
    %v313 = vld [vmem:[#allocation3 + $0x548] sm:$0xff]
    %v314 = vld [vmem:[#allocation3 + $0x550] sm:$0xff]
    %v315 = vld [vmem:[#allocation3 + $0x558] sm:$0xff]
    %v316 = vld [vmem:[#allocation3 + $0x560] sm:$0xff]
    %v317 = vld [vmem:[#allocation3 + $0x568] sm:$0xff]
    %v318 = vld [vmem:[#allocation3 + $0x570] sm:$0xff]
    %v319 = vld [vmem:[#allocation3 + $0x578] sm:$0xff]
    %v320 = vld [vmem:[#allocation3 + $0x580] sm:$0xff]
    %v321 = vld [vmem:[#allocation3 + $0x588] sm:$0xff]
    %v322 = vld [vmem:[#allocation3 + $0x590] sm:$0xff]
    %v323 = vld [vmem:[#allocation3 + $0x598] sm:$0xff]
    %v324 = vld [vmem:[#allocation3 + $0x5a0] sm:$0xff]
    %v325 = vld [vmem:[#allocation3 + $0x5a8] sm:$0xff]
    %v326 = vld [vmem:[#allocation3 + $0x5b0] sm:$0xff]
    %v327 = vld [vmem:[#allocation3 + $0x5b8] sm:$0xff]
    %v328 = vld [vmem:[#allocation3 + $0x5c0] sm:$0xff]
    %v329 = vld [vmem:[#allocation3 + $0x5c8] sm:$0xff]
    %v330 = vld [vmem:[#allocation3 + $0x5d0] sm:$0xff]
    %v331 = vld [vmem:[#allocation3 + $0x5d8] sm:$0xff]
    %v332 = vld [vmem:[#allocation3 + $0x5e0] sm:$0xff]
    %v333 = vld [vmem:[#allocation3 + $0x5e8] sm:$0xff]
    %v334 = vld [vmem:[#allocation3 + $0x5f0] sm:$0xff]
    %v335 = vld [vmem:[#allocation3 + $0x5f8] sm:$0xff]
    %v336 = vld [vmem:[#allocation3 + $0x600] sm:$0xff]
    %v337 = vld [vmem:[#allocation3 + $0x608] sm:$0xff]
    %v338 = vld [vmem:[#allocation3 + $0x610] sm:$0xff]
    %v339 = vld [vmem:[#allocation3 + $0x618] sm:$0xff]
    %v340 = vld [vmem:[#allocation3 + $0x620] sm:$0xff]
    %v341 = vld [vmem:[#allocation3 + $0x628] sm:$0xff]
    %v342 = vld [vmem:[#allocation3 + $0x630] sm:$0xff]
    %v343 = vld [vmem:[#allocation3 + $0x638] sm:$0xff]
    %v344 = vld [vmem:[#allocation3 + $0x640] sm:$0xff]
    %v345 = vld [vmem:[#allocation3 + $0x648] sm:$0xff]
    %v346 = vld [vmem:[#allocation3 + $0x650] sm:$0xff]
    %v347 = vld [vmem:[#allocation3 + $0x658] sm:$0xff]
    %v348 = vld [vmem:[#allocation3 + $0x660] sm:$0xff]
    %v349 = vld [vmem:[#allocation3 + $0x668] sm:$0xff]
    %v350 = vld [vmem:[#allocation3 + $0x670] sm:$0xff]
    %v351 = vld [vmem:[#allocation3 + $0x678] sm:$0xff]
    %v352 = vld [vmem:[#allocation3 + $0x680] sm:$0xff]
    %v353 = vld [vmem:[#allocation3 + $0x688] sm:$0xff]
    %v354 = vld [vmem:[#allocation3 + $0x690] sm:$0xff]
    %v355 = vld [vmem:[#allocation3 + $0x698] sm:$0xff]
    %v356 = vld [vmem:[#allocation3 + $0x6a0] sm:$0xff]
    %v357 = vld [vmem:[#allocation3 + $0x6a8] sm:$0xff]
    %v358 = vld [vmem:[#allocation3 + $0x6b0] sm:$0xff]
    %v359 = vld [vmem:[#allocation3 + $0x6b8] sm:$0xff]
    %v360 = vld [vmem:[#allocation3 + $0x6c0] sm:$0xff]
    %v361 = vld [vmem:[#allocation3 + $0x6c8] sm:$0xff]
    %v362 = vld [vmem:[#allocation3 + $0x6d0] sm:$0xff]
    %v363 = vld [vmem:[#allocation3 + $0x6d8] sm:$0xff]
    %v364 = vld [vmem:[#allocation3 + $0x6e0] sm:$0xff]
    %v365 = vld [vmem:[#allocation3 + $0x6e8] sm:$0xff]
    %v366 = vld [vmem:[#allocation3 + $0x6f0] sm:$0xff]
    %v367 = vld [vmem:[#allocation3 + $0x6f8] sm:$0xff]
    %v368 = vld [vmem:[#allocation3 + $0x700] sm:$0xff]
    %v369 = vld [vmem:[#allocation3 + $0x708] sm:$0xff]
    %v370 = vld [vmem:[#allocation3 + $0x710] sm:$0xff]
    %v371 = vld [vmem:[#allocation3 + $0x718] sm:$0xff]
    %v372 = vld [vmem:[#allocation3 + $0x720] sm:$0xff]
    %v373 = vld [vmem:[#allocation3 + $0x728] sm:$0xff]
    %v374 = vld [vmem:[#allocation3 + $0x730] sm:$0xff]
    %v375 = vld [vmem:[#allocation3 + $0x738] sm:$0xff]
    %v376 = vld [vmem:[#allocation3 + $0x740] sm:$0xff]
    %v377 = vld [vmem:[#allocation3 + $0x748] sm:$0xff]
    %v378 = vld [vmem:[#allocation3 + $0x750] sm:$0xff]
    %v379 = vld [vmem:[#allocation3 + $0x758] sm:$0xff]
    %v380 = vld [vmem:[#allocation3 + $0x760] sm:$0xff]
    %v381 = vld [vmem:[#allocation3 + $0x768] sm:$0xff]
    %v382 = vld [vmem:[#allocation3 + $0x770] sm:$0xff]
    %v383 = vld [vmem:[#allocation3 + $0x778] sm:$0xff]
    %v384 = vld [vmem:[#allocation3 + $0x780] sm:$0xff]
    %v385 = vld [vmem:[#allocation3 + $0x788] sm:$0xff]
    %v386 = vld [vmem:[#allocation3 + $0x790] sm:$0xff]
    %v387 = vld [vmem:[#allocation3 + $0x798] sm:$0xff]
    %v388 = vld [vmem:[#allocation3 + $0x7a0] sm:$0xff]
    %v389 = vld [vmem:[#allocation3 + $0x7a8] sm:$0xff]
    %v390 = vld [vmem:[#allocation3 + $0x7b0] sm:$0xff]
    %v391 = vld [vmem:[#allocation3 + $0x7b8] sm:$0xff]
    %v392 = vld [vmem:[#allocation3 + $0x7c0] sm:$0xff]
    %v393 = vld [vmem:[#allocation3 + $0x7c8] sm:$0xff]
    %v394 = vld [vmem:[#allocation3 + $0x7d0] sm:$0xff]
    %v395 = vld [vmem:[#allocation3 + $0x7d8] sm:$0xff]
    %v396 = vld [vmem:[#allocation3 + $0x7e0] sm:$0xff]
    %v397 = vld [vmem:[#allocation3 + $0x7e8] sm:$0xff]
    %v398 = vld [vmem:[#allocation3 + $0x7f0] sm:$0xff]
    %v399 = vld [vmem:[#allocation3 + $0x7f8] sm:$0xff]
    %v400 = vld [vmem:[#allocation3 + $0x800] sm:$0xff]
    %v401 = vld [vmem:[#allocation3 + $0x808] sm:$0xff]
    %v402 = vld [vmem:[#allocation3 + $0x810] sm:$0xff]
    %v403 = vld [vmem:[#allocation3 + $0x818] sm:$0xff]
    %v404 = vld [vmem:[#allocation3 + $0x820] sm:$0xff]
    %v405 = vld [vmem:[#allocation3 + $0x828] sm:$0xff]
    %v406 = vld [vmem:[#allocation3 + $0x830] sm:$0xff]
    %v407 = vld [vmem:[#allocation3 + $0x838] sm:$0xff]
    %v408 = vld [vmem:[#allocation3 + $0x840] sm:$0xff]
    %v409 = vld [vmem:[#allocation3 + $0x848] sm:$0xff]
    %v410 = vld [vmem:[#allocation3 + $0x850] sm:$0xff]
    %v411 = vld [vmem:[#allocation3 + $0x858] sm:$0xff]
    %v412 = vld [vmem:[#allocation3 + $0x860] sm:$0xff]
    %v413 = vld [vmem:[#allocation3 + $0x868] sm:$0xff]
    %v414 = vld [vmem:[#allocation3 + $0x870] sm:$0xff]
    %v415 = vld [vmem:[#allocation3 + $0x878] sm:$0xff]
    %v416 = vld [vmem:[#allocation3 + $0x880] sm:$0xff]
    %v417 = vld [vmem:[#allocation3 + $0x888] sm:$0xff]
    %v418 = vld [vmem:[#allocation3 + $0x890] sm:$0xff]
    %v419 = vld [vmem:[#allocation3 + $0x898] sm:$0xff]
    %v420 = vld [vmem:[#allocation3 + $0x8a0] sm:$0xff]
    %v421 = vld [vmem:[#allocation3 + $0x8a8] sm:$0xff]
    %v422 = vld [vmem:[#allocation3 + $0x8b0] sm:$0xff]
    %v423 = vld [vmem:[#allocation3 + $0x8b8] sm:$0xff]
    %v424 = vld [vmem:[#allocation3 + $0x8c0] sm:$0xff]
    %v425 = vld [vmem:[#allocation3 + $0x8c8] sm:$0xff]
    %v426 = vld [vmem:[#allocation3 + $0x8d0] sm:$0xff]
    %v427 = vld [vmem:[#allocation3 + $0x8d8] sm:$0xff]
    %v428 = vld [vmem:[#allocation3 + $0x8e0] sm:$0xff]
    %v429 = vld [vmem:[#allocation3 + $0x8e8] sm:$0xff]
    %v430 = vld [vmem:[#allocation3 + $0x8f0] sm:$0xff]
    %v431 = vld [vmem:[#allocation3 + $0x8f8] sm:$0xff]
    %v432 = vld [vmem:[#allocation3 + $0x900] sm:$0xff]
    %v433 = vld [vmem:[#allocation3 + $0x908] sm:$0xff]
    %v434 = vld [vmem:[#allocation3 + $0x910] sm:$0xff]
    %v435 = vld [vmem:[#allocation3 + $0x918] sm:$0xff]
    %v436 = vld [vmem:[#allocation3 + $0x920] sm:$0xff]
    %v437 = vld [vmem:[#allocation3 + $0x928] sm:$0xff]
    %v438 = vld [vmem:[#allocation3 + $0x930] sm:$0xff]
    %v439 = vld [vmem:[#allocation3 + $0x938] sm:$0xff]
    %v440 = vld [vmem:[#allocation3 + $0x940] sm:$0xff]
    %v441 = vld [vmem:[#allocation3 + $0x948] sm:$0xff]
    %v442 = vld [vmem:[#allocation3 + $0x950] sm:$0xff]
    %v443 = vld [vmem:[#allocation3 + $0x958] sm:$0xff]
    %v444 = vld [vmem:[#allocation3 + $0x960] sm:$0xff]
    %v445 = vld [vmem:[#allocation3 + $0x968] sm:$0xff]
    %v446 = vld [vmem:[#allocation3 + $0x970] sm:$0xff]
    %v447 = vld [vmem:[#allocation3 + $0x978] sm:$0xff]
    %v448 = vld [vmem:[#allocation3 + $0x980] sm:$0xff]
    %v449 = vld [vmem:[#allocation3 + $0x988] sm:$0xff]
    %v450 = vld [vmem:[#allocation3 + $0x990] sm:$0xff]
    %v451 = vld [vmem:[#allocation3 + $0x998] sm:$0xff]
    %v452 = vld [vmem:[#allocation3 + $0x9a0] sm:$0xff]
    %v453 = vld [vmem:[#allocation3 + $0x9a8] sm:$0xff]
    %v454 = vld [vmem:[#allocation3 + $0x9b0] sm:$0xff]
    %v455 = vld [vmem:[#allocation3 + $0x9b8] sm:$0xff]
    %v456 = vld [vmem:[#allocation3 + $0x9c0] sm:$0xff]
    %v457 = vld [vmem:[#allocation3 + $0x9c8] sm:$0xff]
    %v458 = vld [vmem:[#allocation3 + $0x9d0] sm:$0xff]
    %v459 = vld [vmem:[#allocation3 + $0x9d8] sm:$0xff]
    %v460 = vld [vmem:[#allocation3 + $0x9e0] sm:$0xff]
    %v461 = vld [vmem:[#allocation3 + $0x9e8] sm:$0xff]
    %v462 = vld [vmem:[#allocation3 + $0x9f0] sm:$0xff]
    %v463 = vld [vmem:[#allocation3 + $0x9f8] sm:$0xff]
    %v464 = vld [vmem:[#allocation3 + $0xa00] sm:$0xff]
    %v465 = vld [vmem:[#allocation3 + $0xa08] sm:$0xff]
    %v466 = vld [vmem:[#allocation3 + $0xa10] sm:$0xff]
    %v467 = vld [vmem:[#allocation3 + $0xa18] sm:$0xff]
    %v468 = vld [vmem:[#allocation3 + $0xa20] sm:$0xff]
    %v469 = vld [vmem:[#allocation3 + $0xa28] sm:$0xff]
    %v470 = vld [vmem:[#allocation3 + $0xa30] sm:$0xff]
    %v471 = vld [vmem:[#allocation3 + $0xa38] sm:$0xff]
    %v472 = vld [vmem:[#allocation3 + $0xa40] sm:$0xff]
    %v473 = vld [vmem:[#allocation3 + $0xa48] sm:$0xff]
    %v474 = vld [vmem:[#allocation3 + $0xa50] sm:$0xff]
    %v475 = vld [vmem:[#allocation3 + $0xa58] sm:$0xff]
    %v476 = vld [vmem:[#allocation3 + $0xa60] sm:$0xff]
    %v477 = vld [vmem:[#allocation3 + $0xa68] sm:$0xff]
    %v478 = vld [vmem:[#allocation3 + $0xa70] sm:$0xff]
    %v479 = vld [vmem:[#allocation3 + $0xa78] sm:$0xff]
    %v480 = vld [vmem:[#allocation3 + $0xa80] sm:$0xff]
    %v481 = vld [vmem:[#allocation3 + $0xa88] sm:$0xff]
    %v482 = vld [vmem:[#allocation3 + $0xa90] sm:$0xff]
    %v483 = vld [vmem:[#allocation3 + $0xa98] sm:$0xff]
    %v484 = vld [vmem:[#allocation3 + $0xaa0] sm:$0xff]
    %v485 = vld [vmem:[#allocation3 + $0xaa8] sm:$0xff]
    %v486 = vld [vmem:[#allocation3 + $0xab0] sm:$0xff]
    %v487 = vld [vmem:[#allocation3 + $0xab8] sm:$0xff]
    %v488 = vld [vmem:[#allocation3 + $0xac0] sm:$0xff]
    %v489 = vld [vmem:[#allocation3 + $0xac8] sm:$0xff]
    %v490 = vld [vmem:[#allocation3 + $0xad0] sm:$0xff]
    %v491 = vld [vmem:[#allocation3 + $0xad8] sm:$0xff]
    %v492 = vld [vmem:[#allocation3 + $0xae0] sm:$0xff]
    %v493 = vld [vmem:[#allocation3 + $0xae8] sm:$0xff]
    %v494 = vld [vmem:[#allocation3 + $0xaf0] sm:$0xff]
    %v495 = vld [vmem:[#allocation3 + $0xaf8] sm:$0xff]
    %v496 = vld [vmem:[#allocation3 + $0xb00] sm:$0xff]
    %v497 = vld [vmem:[#allocation3 + $0xb08] sm:$0xff]
    %v498 = vld [vmem:[#allocation3 + $0xb10] sm:$0xff]
    %v499 = vld [vmem:[#allocation3 + $0xb18] sm:$0xff]
    %v500 = vld [vmem:[#allocation3 + $0xb20] sm:$0xff]
    %v501 = vld [vmem:[#allocation3 + $0xb28] sm:$0xff]
    %v502 = vld [vmem:[#allocation3 + $0xb30] sm:$0xff]
    %v503 = vld [vmem:[#allocation3 + $0xb38] sm:$0xff]
    %v504 = vld [vmem:[#allocation3 + $0xb40] sm:$0xff]
    %v505 = vld [vmem:[#allocation3 + $0xb48] sm:$0xff]
    %v506 = vld [vmem:[#allocation3 + $0xb50] sm:$0xff]
    %v507 = vld [vmem:[#allocation3 + $0xb58] sm:$0xff]
    %v508 = vld [vmem:[#allocation3 + $0xb60] sm:$0xff]
    %v509 = vld [vmem:[#allocation3 + $0xb68] sm:$0xff]
    %v510 = vld [vmem:[#allocation3 + $0xb70] sm:$0xff]
    %v511 = vld [vmem:[#allocation3 + $0xb78] sm:$0xff]
    %v512 = vld [vmem:[#allocation3 + $0xb80] sm:$0xff]
    %v513 = vld [vmem:[#allocation3 + $0xb88] sm:$0xff]
    %v514 = vld [vmem:[#allocation3 + $0xb90] sm:$0xff]
    %v515 = vld [vmem:[#allocation3 + $0xb98] sm:$0xff]
    %v516 = vld [vmem:[#allocation3 + $0xba0] sm:$0xff]
    %v517 = vld [vmem:[#allocation3 + $0xba8] sm:$0xff]
    %v518 = vld [vmem:[#allocation3 + $0xbb0] sm:$0xff]
    %v519 = vld [vmem:[#allocation3 + $0xbb8] sm:$0xff]
    %v520 = vld [vmem:[#allocation3 + $0xbc0] sm:$0xff]
    %v521 = vld [vmem:[#allocation3 + $0xbc8] sm:$0xff]
    %v522 = vld [vmem:[#allocation3 + $0xbd0] sm:$0xff]
    %v523 = vld [vmem:[#allocation3 + $0xbd8] sm:$0xff]
    %v524 = vld [vmem:[#allocation3 + $0xbe0] sm:$0xff]
    %v525 = vld [vmem:[#allocation3 + $0xbe8] sm:$0xff]
    %v526 = vld [vmem:[#allocation3 + $0xbf0] sm:$0xff]
    %v527 = vld [vmem:[#allocation3 + $0xbf8] sm:$0xff]
    %v528 = vld [vmem:[#allocation3 + $0xc00] sm:$0xff]
    %v529 = vld [vmem:[#allocation3 + $0xc08] sm:$0xff]
    %v530 = vld [vmem:[#allocation3 + $0xc10] sm:$0xff]
    %v531 = vld [vmem:[#allocation3 + $0xc18] sm:$0xff]
    %v532 = vld [vmem:[#allocation3 + $0xc20] sm:$0xff]
    %v533 = vld [vmem:[#allocation3 + $0xc28] sm:$0xff]
    %v534 = vld [vmem:[#allocation3 + $0xc30] sm:$0xff]
    %v535 = vld [vmem:[#allocation3 + $0xc38] sm:$0xff]
    %v536 = vld [vmem:[#allocation3 + $0xc40] sm:$0xff]
    %v537 = vld [vmem:[#allocation3 + $0xc48] sm:$0xff]
    %v538 = vld [vmem:[#allocation3 + $0xc50] sm:$0xff]
    %v539 = vld [vmem:[#allocation3 + $0xc58] sm:$0xff]
    %v540 = vld [vmem:[#allocation3 + $0xc60] sm:$0xff]
    %v541 = vld [vmem:[#allocation3 + $0xc68] sm:$0xff]
    %v542 = vld [vmem:[#allocation3 + $0xc70] sm:$0xff]
    %v543 = vld [vmem:[#allocation3 + $0xc78] sm:$0xff]
    %v544 = vld [vmem:[#allocation3 + $0xc80] sm:$0xff]
    %v545 = vld [vmem:[#allocation3 + $0xc88] sm:$0xff]
    %v546 = vld [vmem:[#allocation3 + $0xc90] sm:$0xff]
    %v547 = vld [vmem:[#allocation3 + $0xc98] sm:$0xff]
    %v548 = vld [vmem:[#allocation3 + $0xca0] sm:$0xff]
    %v549 = vld [vmem:[#allocation3 + $0xca8] sm:$0xff]
    %v550 = vld [vmem:[#allocation3 + $0xcb0] sm:$0xff]
    %v551 = vld [vmem:[#allocation3 + $0xcb8] sm:$0xff]
    %v552 = vld [vmem:[#allocation3 + $0xcc0] sm:$0xff]
    %v553 = vld [vmem:[#allocation3 + $0xcc8] sm:$0xff]
    %v554 = vld [vmem:[#allocation3 + $0xcd0] sm:$0xff]
    %v555 = vld [vmem:[#allocation3 + $0xcd8] sm:$0xff]
    %v556 = vld [vmem:[#allocation3 + $0xce0] sm:$0xff]
    %v557 = vld [vmem:[#allocation3 + $0xce8] sm:$0xff]
    %v558 = vld [vmem:[#allocation3 + $0xcf0] sm:$0xff]
    %v559 = vld [vmem:[#allocation3 + $0xcf8] sm:$0xff]
    %v560 = vld [vmem:[#allocation3 + $0xd00] sm:$0xff]
    %v561 = vld [vmem:[#allocation3 + $0xd08] sm:$0xff]
    %v562 = vld [vmem:[#allocation3 + $0xd10] sm:$0xff]
    %v563 = vld [vmem:[#allocation3 + $0xd18] sm:$0xff]
    %v564 = vld [vmem:[#allocation3 + $0xd20] sm:$0xff]
    %v565 = vld [vmem:[#allocation3 + $0xd28] sm:$0xff]
    %v566 = vld [vmem:[#allocation3 + $0xd30] sm:$0xff]
    %v567 = vld [vmem:[#allocation3 + $0xd38] sm:$0xff]
    %v568 = vld [vmem:[#allocation3 + $0xd40] sm:$0xff]
    %v569 = vld [vmem:[#allocation3 + $0xd48] sm:$0xff]
    %v570 = vld [vmem:[#allocation3 + $0xd50] sm:$0xff]
    %v571 = vld [vmem:[#allocation3 + $0xd58] sm:$0xff]
    %v572 = vld [vmem:[#allocation3 + $0xd60] sm:$0xff]
    %v573 = vld [vmem:[#allocation3 + $0xd68] sm:$0xff]
    %v574 = vld [vmem:[#allocation3 + $0xd70] sm:$0xff]
    %v575 = vld [vmem:[#allocation3 + $0xd78] sm:$0xff]
    %v576 = vld [vmem:[#allocation3 + $0xd80] sm:$0xff]
    %v577 = vld [vmem:[#allocation3 + $0xd88] sm:$0xff]
    %v578 = vld [vmem:[#allocation3 + $0xd90] sm:$0xff]
    %v579 = vld [vmem:[#allocation3 + $0xd98] sm:$0xff]
    %v580 = vld [vmem:[#allocation3 + $0xda0] sm:$0xff]
    %v581 = vld [vmem:[#allocation3 + $0xda8] sm:$0xff]
    %v582 = vld [vmem:[#allocation3 + $0xdb0] sm:$0xff]
    %v583 = vld [vmem:[#allocation3 + $0xdb8] sm:$0xff]
    %v584 = vld [vmem:[#allocation3 + $0xdc0] sm:$0xff]
    %v585 = vld [vmem:[#allocation3 + $0xdc8] sm:$0xff]
    %v586 = vld [vmem:[#allocation3 + $0xdd0] sm:$0xff]
    %v587 = vld [vmem:[#allocation3 + $0xdd8] sm:$0xff]
    %v588 = vld [vmem:[#allocation3 + $0xde0] sm:$0xff]
    %v589 = vld [vmem:[#allocation3 + $0xde8] sm:$0xff]
    %v590 = vld [vmem:[#allocation3 + $0xdf0] sm:$0xff]
    %v591 = vld [vmem:[#allocation3 + $0xdf8] sm:$0xff]
    %v592 = vld [vmem:[#allocation3 + $0xe00] sm:$0xff]
    %v593 = vld [vmem:[#allocation3 + $0xe08] sm:$0xff]
    %v594 = vld [vmem:[#allocation3 + $0xe10] sm:$0xff]
    %v595 = vld [vmem:[#allocation3 + $0xe18] sm:$0xff]
    %v596 = vld [vmem:[#allocation3 + $0xe20] sm:$0xff]
    %v597 = vld [vmem:[#allocation3 + $0xe28] sm:$0xff]
    %v598 = vld [vmem:[#allocation3 + $0xe30] sm:$0xff]
    %v599 = vld [vmem:[#allocation3 + $0xe38] sm:$0xff]
    %v600 = vld [vmem:[#allocation3 + $0xe40] sm:$0xff]
    %v601 = vld [vmem:[#allocation3 + $0xe48] sm:$0xff]
    %v602 = vld [vmem:[#allocation3 + $0xe50] sm:$0xff]
    %v603 = vld [vmem:[#allocation3 + $0xe58] sm:$0xff]
    %v604 = vld [vmem:[#allocation3 + $0xe60] sm:$0xff]
    %v605 = vld [vmem:[#allocation3 + $0xe68] sm:$0xff]
    %v606 = vld [vmem:[#allocation3 + $0xe70] sm:$0xff]
    %v607 = vld [vmem:[#allocation3 + $0xe78] sm:$0xff]
    %v608 = vld [vmem:[#allocation3 + $0xe80] sm:$0xff]
    %v609 = vld [vmem:[#allocation3 + $0xe88] sm:$0xff]
    %v610 = vld [vmem:[#allocation3 + $0xe90] sm:$0xff]
    %v611 = vld [vmem:[#allocation3 + $0xe98] sm:$0xff]
    %v612 = vld [vmem:[#allocation3 + $0xea0] sm:$0xff]
    %v613 = vld [vmem:[#allocation3 + $0xea8] sm:$0xff]
    %v614 = vld [vmem:[#allocation3 + $0xeb0] sm:$0xff]
    %v615 = vld [vmem:[#allocation3 + $0xeb8] sm:$0xff]
    %v616 = vld [vmem:[#allocation3 + $0xec0] sm:$0xff]
    %v617 = vld [vmem:[#allocation3 + $0xec8] sm:$0xff]
    %v618 = vld [vmem:[#allocation3 + $0xed0] sm:$0xff]
    %v619 = vld [vmem:[#allocation3 + $0xed8] sm:$0xff]
    %v620 = vld [vmem:[#allocation3 + $0xee0] sm:$0xff]
    %v621 = vld [vmem:[#allocation3 + $0xee8] sm:$0xff]
    %v622 = vld [vmem:[#allocation3 + $0xef0] sm:$0xff]
    %v623 = vld [vmem:[#allocation3 + $0xef8] sm:$0xff]
    %v624 = vld [vmem:[#allocation3 + $0xf00] sm:$0xff]
    %v625 = vld [vmem:[#allocation3 + $0xf08] sm:$0xff]
    %v626 = vld [vmem:[#allocation3 + $0xf10] sm:$0xff]
    %v627 = vld [vmem:[#allocation3 + $0xf18] sm:$0xff]
    %v628 = vld [vmem:[#allocation3 + $0xf20] sm:$0xff]
    %v629 = vld [vmem:[#allocation3 + $0xf28] sm:$0xff]
    %v630 = vld [vmem:[#allocation3 + $0xf30] sm:$0xff]
    %v631 = vld [vmem:[#allocation3 + $0xf38] sm:$0xff]
    %v632 = vld [vmem:[#allocation3 + $0xf40] sm:$0xff]
    %v633 = vld [vmem:[#allocation3 + $0xf48] sm:$0xff]
    %v634 = vld [vmem:[#allocation3 + $0xf50] sm:$0xff]
    %v635 = vld [vmem:[#allocation3 + $0xf58] sm:$0xff]
    %v636 = vld [vmem:[#allocation3 + $0xf60] sm:$0xff]
    %v637 = vld [vmem:[#allocation3 + $0xf68] sm:$0xff]
    %v638 = vld [vmem:[#allocation3 + $0xf70] sm:$0xff]
    %v639 = vld [vmem:[#allocation3 + $0xf78] sm:$0xff]
    %v640 = vld [vmem:[#allocation3 + $0xf80] sm:$0xff]
    %v641 = vld [vmem:[#allocation3 + $0xf88] sm:$0xff]
    %v642 = vld [vmem:[#allocation3 + $0xf90] sm:$0xff]
    %v643 = vld [vmem:[#allocation3 + $0xf98] sm:$0xff]
    %v644 = vld [vmem:[#allocation3 + $0xfa0] sm:$0xff]
    %v645 = vld [vmem:[#allocation3 + $0xfa8] sm:$0xff]
    %v646 = vld [vmem:[#allocation3 + $0xfb0] sm:$0xff]
    %v647 = vld [vmem:[#allocation3 + $0xfb8] sm:$0xff]
    %v648 = vld [vmem:[#allocation3 + $0xfc0] sm:$0xff]
    %v649 = vld [vmem:[#allocation3 + $0xfc8] sm:$0xff]
    %v650 = vld [vmem:[#allocation3 + $0xfd0] sm:$0xff]
    %v651 = vld [vmem:[#allocation3 + $0xfd8] sm:$0xff]
    %v652 = vld [vmem:[#allocation3 + $0xfe0] sm:$0xff]
    %v653 = vld [vmem:[#allocation3 + $0xfe8] sm:$0xff]
    %v654 = vld [vmem:[#allocation3 + $0xff0] sm:$0xff]
    %v655 = vld [vmem:[#allocation3 + $0xff8] sm:$0xff]
    %v660 = vunpack.c.l.b16 %v140
    %v661 = vunpack.c.h.b16 %v140
    %v662 = vunpack.c.l.b16 %v141
    %v663 = vunpack.c.h.b16 %v141
    %v664 = vunpack.c.l.b16 %v142
    %v665 = vunpack.c.h.b16 %v142
    %v666 = vunpack.c.l.b16 %v143
    %v667 = vunpack.c.h.b16 %v143
    %v668 = vpack.c.b16 %v664, %v660
    %v669 = vpack.c.b16 %v665, %v661
    %v670 = vpack.c.b16 %v666, %v662
    %v671 = vpack.c.b16 %v667, %v663
    %v1188 = vunpack.c.l.b16 %v144
    %v1189 = vunpack.c.h.b16 %v144
    %v1190 = vunpack.c.l.b16 %v145
    %v1191 = vunpack.c.h.b16 %v145
    %v1192 = vunpack.c.l.b16 %v146
    %v1193 = vunpack.c.h.b16 %v146
    %v1194 = vunpack.c.l.b16 %v147
    %v1195 = vunpack.c.h.b16 %v147
    %v1196 = vunpack.c.l.b16 %v148
    %v1197 = vunpack.c.h.b16 %v148
    %v1198 = vunpack.c.l.b16 %v149
    %v1199 = vunpack.c.h.b16 %v149
    %v1200 = vunpack.c.l.b16 %v150
    %v1201 = vunpack.c.h.b16 %v150
    %v1202 = vunpack.c.l.b16 %v151
    %v1203 = vunpack.c.h.b16 %v151
    %v1204 = vunpack.c.l.b16 %v152
    %v1205 = vunpack.c.h.b16 %v152
    %v1206 = vunpack.c.l.b16 %v153
    %v1207 = vunpack.c.h.b16 %v153
    %v1208 = vunpack.c.l.b16 %v154
    %v1209 = vunpack.c.h.b16 %v154
    %v1210 = vunpack.c.l.b16 %v155
    %v1211 = vunpack.c.h.b16 %v155
    %v1212 = vunpack.c.l.b16 %v156
    %v1213 = vunpack.c.h.b16 %v156
    %v1214 = vunpack.c.l.b16 %v157
    %v1215 = vunpack.c.h.b16 %v157
    %v1216 = vunpack.c.l.b16 %v158
    %v1217 = vunpack.c.h.b16 %v158
    %v1218 = vunpack.c.l.b16 %v159
    %v1219 = vunpack.c.h.b16 %v159
    %v1220 = vunpack.c.l.b16 %v160
    %v1221 = vunpack.c.h.b16 %v160
    %v1222 = vunpack.c.l.b16 %v161
    %v1223 = vunpack.c.h.b16 %v161
    %v1224 = vunpack.c.l.b16 %v162
    %v1225 = vunpack.c.h.b16 %v162
    %v1226 = vunpack.c.l.b16 %v163
    %v1227 = vunpack.c.h.b16 %v163
    %v1228 = vunpack.c.l.b16 %v164
    %v1229 = vunpack.c.h.b16 %v164
    %v1230 = vunpack.c.l.b16 %v165
    %v1231 = vunpack.c.h.b16 %v165
    %v1232 = vunpack.c.l.b16 %v166
    %v1233 = vunpack.c.h.b16 %v166
    %v1234 = vunpack.c.l.b16 %v167
    %v1235 = vunpack.c.h.b16 %v167
    %v1236 = vunpack.c.l.b16 %v168
    %v1237 = vunpack.c.h.b16 %v168
    %v1238 = vunpack.c.l.b16 %v169
    %v1239 = vunpack.c.h.b16 %v169
    %v1240 = vunpack.c.l.b16 %v170
    %v1241 = vunpack.c.h.b16 %v170
    %v1242 = vunpack.c.l.b16 %v171
    %v1243 = vunpack.c.h.b16 %v171
    %v1244 = vunpack.c.l.b16 %v172
    %v1245 = vunpack.c.h.b16 %v172
    %v1246 = vunpack.c.l.b16 %v173
    %v1247 = vunpack.c.h.b16 %v173
    %v1248 = vunpack.c.l.b16 %v174
    %v1249 = vunpack.c.h.b16 %v174
    %v1250 = vunpack.c.l.b16 %v175
    %v1251 = vunpack.c.h.b16 %v175
    %v1252 = vunpack.c.l.b16 %v176
    %v1253 = vunpack.c.h.b16 %v176
    %v1254 = vunpack.c.l.b16 %v177
    %v1255 = vunpack.c.h.b16 %v177
    %v1256 = vunpack.c.l.b16 %v178
    %v1257 = vunpack.c.h.b16 %v178
    %v1258 = vunpack.c.l.b16 %v179
    %v1259 = vunpack.c.h.b16 %v179
    %v1260 = vunpack.c.l.b16 %v180
    %v1261 = vunpack.c.h.b16 %v180
    %v1262 = vunpack.c.l.b16 %v181
    %v1263 = vunpack.c.h.b16 %v181
    %v1264 = vunpack.c.l.b16 %v182
    %v1265 = vunpack.c.h.b16 %v182
    %v1266 = vunpack.c.l.b16 %v183
    %v1267 = vunpack.c.h.b16 %v183
    %v1268 = vunpack.c.l.b16 %v184
    %v1269 = vunpack.c.h.b16 %v184
    %v1270 = vunpack.c.l.b16 %v185
    %v1271 = vunpack.c.h.b16 %v185
    %v1272 = vunpack.c.l.b16 %v186
    %v1273 = vunpack.c.h.b16 %v186
    %v1274 = vunpack.c.l.b16 %v187
    %v1275 = vunpack.c.h.b16 %v187
    %v1276 = vunpack.c.l.b16 %v188
    %v1277 = vunpack.c.h.b16 %v188
    %v1278 = vunpack.c.l.b16 %v189
    %v1279 = vunpack.c.h.b16 %v189
    %v1280 = vunpack.c.l.b16 %v190
    %v1281 = vunpack.c.h.b16 %v190
    %v1282 = vunpack.c.l.b16 %v191
    %v1283 = vunpack.c.h.b16 %v191
    %v1284 = vunpack.c.l.b16 %v192
    %v1285 = vunpack.c.h.b16 %v192
    %v1286 = vunpack.c.l.b16 %v193
    %v1287 = vunpack.c.h.b16 %v193
    %v1288 = vunpack.c.l.b16 %v194
    %v1289 = vunpack.c.h.b16 %v194
    %v1290 = vunpack.c.l.b16 %v195
    %v1291 = vunpack.c.h.b16 %v195
    %v1292 = vunpack.c.l.b16 %v196
    %v1293 = vunpack.c.h.b16 %v196
    %v1294 = vunpack.c.l.b16 %v197
    %v1295 = vunpack.c.h.b16 %v197
    %v1296 = vunpack.c.l.b16 %v198
    %v1297 = vunpack.c.h.b16 %v198
    %v1298 = vunpack.c.l.b16 %v199
    %v1299 = vunpack.c.h.b16 %v199
    %v1300 = vunpack.c.l.b16 %v200
    %v1301 = vunpack.c.h.b16 %v200
    %v1302 = vunpack.c.l.b16 %v201
    %v1303 = vunpack.c.h.b16 %v201
    %v1304 = vunpack.c.l.b16 %v202
    %v1305 = vunpack.c.h.b16 %v202
    %v1306 = vunpack.c.l.b16 %v203
    %v1307 = vunpack.c.h.b16 %v203
    %v1308 = vunpack.c.l.b16 %v204
    %v1309 = vunpack.c.h.b16 %v204
    %v1310 = vunpack.c.l.b16 %v205
    %v1311 = vunpack.c.h.b16 %v205
    %v1312 = vunpack.c.l.b16 %v206
    %v1313 = vunpack.c.h.b16 %v206
    %v1314 = vunpack.c.l.b16 %v207
    %v1315 = vunpack.c.h.b16 %v207
    %v1316 = vunpack.c.l.b16 %v208
    %v1317 = vunpack.c.h.b16 %v208
    %v1318 = vunpack.c.l.b16 %v209
    %v1319 = vunpack.c.h.b16 %v209
    %v1320 = vunpack.c.l.b16 %v210
    %v1321 = vunpack.c.h.b16 %v210
    %v1322 = vunpack.c.l.b16 %v211
    %v1323 = vunpack.c.h.b16 %v211
    %v1324 = vunpack.c.l.b16 %v212
    %v1325 = vunpack.c.h.b16 %v212
    %v1326 = vunpack.c.l.b16 %v213
    %v1327 = vunpack.c.h.b16 %v213
    %v1328 = vunpack.c.l.b16 %v214
    %v1329 = vunpack.c.h.b16 %v214
    %v1330 = vunpack.c.l.b16 %v215
    %v1331 = vunpack.c.h.b16 %v215
    %v1332 = vunpack.c.l.b16 %v216
    %v1333 = vunpack.c.h.b16 %v216
    %v1334 = vunpack.c.l.b16 %v217
    %v1335 = vunpack.c.h.b16 %v217
    %v1336 = vunpack.c.l.b16 %v218
    %v1337 = vunpack.c.h.b16 %v218
    %v1338 = vunpack.c.l.b16 %v219
    %v1339 = vunpack.c.h.b16 %v219
    %v1340 = vunpack.c.l.b16 %v220
    %v1341 = vunpack.c.h.b16 %v220
    %v1342 = vunpack.c.l.b16 %v221
    %v1343 = vunpack.c.h.b16 %v221
    %v1344 = vunpack.c.l.b16 %v222
    %v1345 = vunpack.c.h.b16 %v222
    %v1346 = vunpack.c.l.b16 %v223
    %v1347 = vunpack.c.h.b16 %v223
    %v1348 = vunpack.c.l.b16 %v224
    %v1349 = vunpack.c.h.b16 %v224
    %v1350 = vunpack.c.l.b16 %v225
    %v1351 = vunpack.c.h.b16 %v225
    %v1352 = vunpack.c.l.b16 %v226
    %v1353 = vunpack.c.h.b16 %v226
    %v1354 = vunpack.c.l.b16 %v227
    %v1355 = vunpack.c.h.b16 %v227
    %v1356 = vunpack.c.l.b16 %v228
    %v1357 = vunpack.c.h.b16 %v228
    %v1358 = vunpack.c.l.b16 %v229
    %v1359 = vunpack.c.h.b16 %v229
    %v1360 = vunpack.c.l.b16 %v230
    %v1361 = vunpack.c.h.b16 %v230
    %v1362 = vunpack.c.l.b16 %v231
    %v1363 = vunpack.c.h.b16 %v231
    %v1364 = vunpack.c.l.b16 %v232
    %v1365 = vunpack.c.h.b16 %v232
    %v1366 = vunpack.c.l.b16 %v233
    %v1367 = vunpack.c.h.b16 %v233
    %v1368 = vunpack.c.l.b16 %v234
    %v1369 = vunpack.c.h.b16 %v234
    %v1370 = vunpack.c.l.b16 %v235
    %v1371 = vunpack.c.h.b16 %v235
    %v1372 = vunpack.c.l.b16 %v236
    %v1373 = vunpack.c.h.b16 %v236
    %v1374 = vunpack.c.l.b16 %v237
    %v1375 = vunpack.c.h.b16 %v237
    %v1376 = vunpack.c.l.b16 %v238
    %v1377 = vunpack.c.h.b16 %v238
    %v1378 = vunpack.c.l.b16 %v239
    %v1379 = vunpack.c.h.b16 %v239
    %v1380 = vunpack.c.l.b16 %v240
    %v1381 = vunpack.c.h.b16 %v240
    %v1382 = vunpack.c.l.b16 %v241
    %v1383 = vunpack.c.h.b16 %v241
    %v1384 = vunpack.c.l.b16 %v242
    %v1385 = vunpack.c.h.b16 %v242
    %v1386 = vunpack.c.l.b16 %v243
    %v1387 = vunpack.c.h.b16 %v243
    %v1388 = vunpack.c.l.b16 %v244
    %v1389 = vunpack.c.h.b16 %v244
    %v1390 = vunpack.c.l.b16 %v245
    %v1391 = vunpack.c.h.b16 %v245
    %v1392 = vunpack.c.l.b16 %v246
    %v1393 = vunpack.c.h.b16 %v246
    %v1394 = vunpack.c.l.b16 %v247
    %v1395 = vunpack.c.h.b16 %v247
    %v1396 = vunpack.c.l.b16 %v248
    %v1397 = vunpack.c.h.b16 %v248
    %v1398 = vunpack.c.l.b16 %v249
    %v1399 = vunpack.c.h.b16 %v249
    %v1400 = vunpack.c.l.b16 %v250
    %v1401 = vunpack.c.h.b16 %v250
    %v1402 = vunpack.c.l.b16 %v251
    %v1403 = vunpack.c.h.b16 %v251
    %v1404 = vunpack.c.l.b16 %v252
    %v1405 = vunpack.c.h.b16 %v252
    %v1406 = vunpack.c.l.b16 %v253
    %v1407 = vunpack.c.h.b16 %v253
    %v1408 = vunpack.c.l.b16 %v254
    %v1409 = vunpack.c.h.b16 %v254
    %v1410 = vunpack.c.l.b16 %v255
    %v1411 = vunpack.c.h.b16 %v255
    %v1412 = vunpack.c.l.b16 %v256
    %v1413 = vunpack.c.h.b16 %v256
    %v1414 = vunpack.c.l.b16 %v257
    %v1415 = vunpack.c.h.b16 %v257
    %v1416 = vunpack.c.l.b16 %v258
    %v1417 = vunpack.c.h.b16 %v258
    %v1418 = vunpack.c.l.b16 %v259
    %v1419 = vunpack.c.h.b16 %v259
    %v1420 = vunpack.c.l.b16 %v260
    %v1421 = vunpack.c.h.b16 %v260
    %v1422 = vunpack.c.l.b16 %v261
    %v1423 = vunpack.c.h.b16 %v261
    %v1424 = vunpack.c.l.b16 %v262
    %v1425 = vunpack.c.h.b16 %v262
    %v1426 = vunpack.c.l.b16 %v263
    %v1427 = vunpack.c.h.b16 %v263
    %v1428 = vunpack.c.l.b16 %v264
    %v1429 = vunpack.c.h.b16 %v264
    %v1430 = vunpack.c.l.b16 %v265
    %v1431 = vunpack.c.h.b16 %v265
    %v1432 = vunpack.c.l.b16 %v266
    %v1433 = vunpack.c.h.b16 %v266
    %v1434 = vunpack.c.l.b16 %v267
    %v1435 = vunpack.c.h.b16 %v267
    %v1436 = vunpack.c.l.b16 %v268
    %v1437 = vunpack.c.h.b16 %v268
    %v1438 = vunpack.c.l.b16 %v269
    %v1439 = vunpack.c.h.b16 %v269
    %v1440 = vunpack.c.l.b16 %v270
    %v1441 = vunpack.c.h.b16 %v270
    %v1442 = vunpack.c.l.b16 %v271
    %v1443 = vunpack.c.h.b16 %v271
    %v1444 = vunpack.c.l.b16 %v272
    %v1445 = vunpack.c.h.b16 %v272
    %v1446 = vunpack.c.l.b16 %v273
    %v1447 = vunpack.c.h.b16 %v273
    %v1448 = vunpack.c.l.b16 %v274
    %v1449 = vunpack.c.h.b16 %v274
    %v1450 = vunpack.c.l.b16 %v275
    %v1451 = vunpack.c.h.b16 %v275
    %v1452 = vunpack.c.l.b16 %v276
    %v1453 = vunpack.c.h.b16 %v276
    %v1454 = vunpack.c.l.b16 %v277
    %v1455 = vunpack.c.h.b16 %v277
    %v1456 = vunpack.c.l.b16 %v278
    %v1457 = vunpack.c.h.b16 %v278
    %v1458 = vunpack.c.l.b16 %v279
    %v1459 = vunpack.c.h.b16 %v279
    %v1460 = vunpack.c.l.b16 %v280
    %v1461 = vunpack.c.h.b16 %v280
    %v1462 = vunpack.c.l.b16 %v281
    %v1463 = vunpack.c.h.b16 %v281
    %v1464 = vunpack.c.l.b16 %v282
    %v1465 = vunpack.c.h.b16 %v282
    %v1466 = vunpack.c.l.b16 %v283
    %v1467 = vunpack.c.h.b16 %v283
    %v1468 = vunpack.c.l.b16 %v284
    %v1469 = vunpack.c.h.b16 %v284
    %v1470 = vunpack.c.l.b16 %v285
    %v1471 = vunpack.c.h.b16 %v285
    %v1472 = vunpack.c.l.b16 %v286
    %v1473 = vunpack.c.h.b16 %v286
    %v1474 = vunpack.c.l.b16 %v287
    %v1475 = vunpack.c.h.b16 %v287
    %v1476 = vunpack.c.l.b16 %v288
    %v1477 = vunpack.c.h.b16 %v288
    %v1478 = vunpack.c.l.b16 %v289
    %v1479 = vunpack.c.h.b16 %v289
    %v1480 = vunpack.c.l.b16 %v290
    %v1481 = vunpack.c.h.b16 %v290
    %v1482 = vunpack.c.l.b16 %v291
    %v1483 = vunpack.c.h.b16 %v291
    %v1484 = vunpack.c.l.b16 %v292
    %v1485 = vunpack.c.h.b16 %v292
    %v1486 = vunpack.c.l.b16 %v293
    %v1487 = vunpack.c.h.b16 %v293
    %v1488 = vunpack.c.l.b16 %v294
    %v1489 = vunpack.c.h.b16 %v294
    %v1490 = vunpack.c.l.b16 %v295
    %v1491 = vunpack.c.h.b16 %v295
    %v1492 = vunpack.c.l.b16 %v296
    %v1493 = vunpack.c.h.b16 %v296
    %v1494 = vunpack.c.l.b16 %v297
    %v1495 = vunpack.c.h.b16 %v297
    %v1496 = vunpack.c.l.b16 %v298
    %v1497 = vunpack.c.h.b16 %v298
    %v1498 = vunpack.c.l.b16 %v299
    %v1499 = vunpack.c.h.b16 %v299
    %v1500 = vunpack.c.l.b16 %v300
    %v1501 = vunpack.c.h.b16 %v300
    %v1502 = vunpack.c.l.b16 %v301
    %v1503 = vunpack.c.h.b16 %v301
    %v1504 = vunpack.c.l.b16 %v302
    %v1505 = vunpack.c.h.b16 %v302
    %v1506 = vunpack.c.l.b16 %v303
    %v1507 = vunpack.c.h.b16 %v303
    %v1508 = vunpack.c.l.b16 %v304
    %v1509 = vunpack.c.h.b16 %v304
    %v1510 = vunpack.c.l.b16 %v305
    %v1511 = vunpack.c.h.b16 %v305
    %v1512 = vunpack.c.l.b16 %v306
    %v1513 = vunpack.c.h.b16 %v306
    %v1514 = vunpack.c.l.b16 %v307
    %v1515 = vunpack.c.h.b16 %v307
    %v1516 = vunpack.c.l.b16 %v308
    %v1517 = vunpack.c.h.b16 %v308
    %v1518 = vunpack.c.l.b16 %v309
    %v1519 = vunpack.c.h.b16 %v309
    %v1520 = vunpack.c.l.b16 %v310
    %v1521 = vunpack.c.h.b16 %v310
    %v1522 = vunpack.c.l.b16 %v311
    %v1523 = vunpack.c.h.b16 %v311
    %v1524 = vunpack.c.l.b16 %v312
    %v1525 = vunpack.c.h.b16 %v312
    %v1526 = vunpack.c.l.b16 %v313
    %v1527 = vunpack.c.h.b16 %v313
    %v1528 = vunpack.c.l.b16 %v314
    %v1529 = vunpack.c.h.b16 %v314
    %v1530 = vunpack.c.l.b16 %v315
    %v1531 = vunpack.c.h.b16 %v315
    %v1532 = vunpack.c.l.b16 %v316
    %v1533 = vunpack.c.h.b16 %v316
    %v1534 = vunpack.c.l.b16 %v317
    %v1535 = vunpack.c.h.b16 %v317
    %v1536 = vunpack.c.l.b16 %v318
    %v1537 = vunpack.c.h.b16 %v318
    %v1538 = vunpack.c.l.b16 %v319
    %v1539 = vunpack.c.h.b16 %v319
    %v1540 = vunpack.c.l.b16 %v320
    %v1541 = vunpack.c.h.b16 %v320
    %v1542 = vunpack.c.l.b16 %v321
    %v1543 = vunpack.c.h.b16 %v321
    %v1544 = vunpack.c.l.b16 %v322
    %v1545 = vunpack.c.h.b16 %v322
    %v1546 = vunpack.c.l.b16 %v323
    %v1547 = vunpack.c.h.b16 %v323
    %v1548 = vunpack.c.l.b16 %v324
    %v1549 = vunpack.c.h.b16 %v324
    %v1550 = vunpack.c.l.b16 %v325
    %v1551 = vunpack.c.h.b16 %v325
    %v1552 = vunpack.c.l.b16 %v326
    %v1553 = vunpack.c.h.b16 %v326
    %v1554 = vunpack.c.l.b16 %v327
    %v1555 = vunpack.c.h.b16 %v327
    %v1556 = vunpack.c.l.b16 %v328
    %v1557 = vunpack.c.h.b16 %v328
    %v1558 = vunpack.c.l.b16 %v329
    %v1559 = vunpack.c.h.b16 %v329
    %v1560 = vunpack.c.l.b16 %v330
    %v1561 = vunpack.c.h.b16 %v330
    %v1562 = vunpack.c.l.b16 %v331
    %v1563 = vunpack.c.h.b16 %v331
    %v1564 = vunpack.c.l.b16 %v332
    %v1565 = vunpack.c.h.b16 %v332
    %v1566 = vunpack.c.l.b16 %v333
    %v1567 = vunpack.c.h.b16 %v333
    %v1568 = vunpack.c.l.b16 %v334
    %v1569 = vunpack.c.h.b16 %v334
    %v1570 = vunpack.c.l.b16 %v335
    %v1571 = vunpack.c.h.b16 %v335
    %v1572 = vunpack.c.l.b16 %v336
    %v1573 = vunpack.c.h.b16 %v336
    %v1574 = vunpack.c.l.b16 %v337
    %v1575 = vunpack.c.h.b16 %v337
    %v1576 = vunpack.c.l.b16 %v338
    %v1577 = vunpack.c.h.b16 %v338
    %v1578 = vunpack.c.l.b16 %v339
    %v1579 = vunpack.c.h.b16 %v339
    %v1580 = vunpack.c.l.b16 %v340
    %v1581 = vunpack.c.h.b16 %v340
    %v1582 = vunpack.c.l.b16 %v341
    %v1583 = vunpack.c.h.b16 %v341
    %v1584 = vunpack.c.l.b16 %v342
    %v1585 = vunpack.c.h.b16 %v342
    %v1586 = vunpack.c.l.b16 %v343
    %v1587 = vunpack.c.h.b16 %v343
    %v1588 = vunpack.c.l.b16 %v344
    %v1589 = vunpack.c.h.b16 %v344
    %v1590 = vunpack.c.l.b16 %v345
    %v1591 = vunpack.c.h.b16 %v345
    %v1592 = vunpack.c.l.b16 %v346
    %v1593 = vunpack.c.h.b16 %v346
    %v1594 = vunpack.c.l.b16 %v347
    %v1595 = vunpack.c.h.b16 %v347
    %v1596 = vunpack.c.l.b16 %v348
    %v1597 = vunpack.c.h.b16 %v348
    %v1598 = vunpack.c.l.b16 %v349
    %v1599 = vunpack.c.h.b16 %v349
    %v1600 = vunpack.c.l.b16 %v350
    %v1601 = vunpack.c.h.b16 %v350
    %v1602 = vunpack.c.l.b16 %v351
    %v1603 = vunpack.c.h.b16 %v351
    %v1604 = vunpack.c.l.b16 %v352
    %v1605 = vunpack.c.h.b16 %v352
    %v1606 = vunpack.c.l.b16 %v353
    %v1607 = vunpack.c.h.b16 %v353
    %v1608 = vunpack.c.l.b16 %v354
    %v1609 = vunpack.c.h.b16 %v354
    %v1610 = vunpack.c.l.b16 %v355
    %v1611 = vunpack.c.h.b16 %v355
    %v1612 = vunpack.c.l.b16 %v356
    %v1613 = vunpack.c.h.b16 %v356
    %v1614 = vunpack.c.l.b16 %v357
    %v1615 = vunpack.c.h.b16 %v357
    %v1616 = vunpack.c.l.b16 %v358
    %v1617 = vunpack.c.h.b16 %v358
    %v1618 = vunpack.c.l.b16 %v359
    %v1619 = vunpack.c.h.b16 %v359
    %v1620 = vunpack.c.l.b16 %v360
    %v1621 = vunpack.c.h.b16 %v360
    %v1622 = vunpack.c.l.b16 %v361
    %v1623 = vunpack.c.h.b16 %v361
    %v1624 = vunpack.c.l.b16 %v362
    %v1625 = vunpack.c.h.b16 %v362
    %v1626 = vunpack.c.l.b16 %v363
    %v1627 = vunpack.c.h.b16 %v363
    %v1628 = vunpack.c.l.b16 %v364
    %v1629 = vunpack.c.h.b16 %v364
    %v1630 = vunpack.c.l.b16 %v365
    %v1631 = vunpack.c.h.b16 %v365
    %v1632 = vunpack.c.l.b16 %v366
    %v1633 = vunpack.c.h.b16 %v366
    %v1634 = vunpack.c.l.b16 %v367
    %v1635 = vunpack.c.h.b16 %v367
    %v1636 = vunpack.c.l.b16 %v368
    %v1637 = vunpack.c.h.b16 %v368
    %v1638 = vunpack.c.l.b16 %v369
    %v1639 = vunpack.c.h.b16 %v369
    %v1640 = vunpack.c.l.b16 %v370
    %v1641 = vunpack.c.h.b16 %v370
    %v1642 = vunpack.c.l.b16 %v371
    %v1643 = vunpack.c.h.b16 %v371
    %v1644 = vunpack.c.l.b16 %v372
    %v1645 = vunpack.c.h.b16 %v372
    %v1646 = vunpack.c.l.b16 %v373
    %v1647 = vunpack.c.h.b16 %v373
    %v1648 = vunpack.c.l.b16 %v374
    %v1649 = vunpack.c.h.b16 %v374
    %v1650 = vunpack.c.l.b16 %v375
    %v1651 = vunpack.c.h.b16 %v375
    %v1652 = vunpack.c.l.b16 %v376
    %v1653 = vunpack.c.h.b16 %v376
    %v1654 = vunpack.c.l.b16 %v377
    %v1655 = vunpack.c.h.b16 %v377
    %v1656 = vunpack.c.l.b16 %v378
    %v1657 = vunpack.c.h.b16 %v378
    %v1658 = vunpack.c.l.b16 %v379
    %v1659 = vunpack.c.h.b16 %v379
    %v1660 = vunpack.c.l.b16 %v380
    %v1661 = vunpack.c.h.b16 %v380
    %v1662 = vunpack.c.l.b16 %v381
    %v1663 = vunpack.c.h.b16 %v381
    %v1664 = vunpack.c.l.b16 %v382
    %v1665 = vunpack.c.h.b16 %v382
    %v1666 = vunpack.c.l.b16 %v383
    %v1667 = vunpack.c.h.b16 %v383
    %v1668 = vunpack.c.l.b16 %v384
    %v1669 = vunpack.c.h.b16 %v384
    %v1670 = vunpack.c.l.b16 %v385
    %v1671 = vunpack.c.h.b16 %v385
    %v1672 = vunpack.c.l.b16 %v386
    %v1673 = vunpack.c.h.b16 %v386
    %v1674 = vunpack.c.l.b16 %v387
    %v1675 = vunpack.c.h.b16 %v387
    %v1676 = vunpack.c.l.b16 %v388
    %v1677 = vunpack.c.h.b16 %v388
    %v1678 = vunpack.c.l.b16 %v389
    %v1679 = vunpack.c.h.b16 %v389
    %v1680 = vunpack.c.l.b16 %v390
    %v1681 = vunpack.c.h.b16 %v390
    %v1682 = vunpack.c.l.b16 %v391
    %v1683 = vunpack.c.h.b16 %v391
    %v1684 = vunpack.c.l.b16 %v392
    %v1685 = vunpack.c.h.b16 %v392
    %v1686 = vunpack.c.l.b16 %v393
    %v1687 = vunpack.c.h.b16 %v393
    %v1688 = vunpack.c.l.b16 %v394
    %v1689 = vunpack.c.h.b16 %v394
    %v1690 = vunpack.c.l.b16 %v395
    %v1691 = vunpack.c.h.b16 %v395
    %v1692 = vunpack.c.l.b16 %v396
    %v1693 = vunpack.c.h.b16 %v396
    %v1694 = vunpack.c.l.b16 %v397
    %v1695 = vunpack.c.h.b16 %v397
    %v1696 = vunpack.c.l.b16 %v398
    %v1697 = vunpack.c.h.b16 %v398
    %v1698 = vunpack.c.l.b16 %v399
    %v1699 = vunpack.c.h.b16 %v399
    %v1700 = vunpack.c.l.b16 %v400
    %v1701 = vunpack.c.h.b16 %v400
    %v1702 = vunpack.c.l.b16 %v401
    %v1703 = vunpack.c.h.b16 %v401
    %v1704 = vunpack.c.l.b16 %v402
    %v1705 = vunpack.c.h.b16 %v402
    %v1706 = vunpack.c.l.b16 %v403
    %v1707 = vunpack.c.h.b16 %v403
    %v1708 = vunpack.c.l.b16 %v404
    %v1709 = vunpack.c.h.b16 %v404
    %v1710 = vunpack.c.l.b16 %v405
    %v1711 = vunpack.c.h.b16 %v405
    %v1712 = vunpack.c.l.b16 %v406
    %v1713 = vunpack.c.h.b16 %v406
    %v1714 = vunpack.c.l.b16 %v407
    %v1715 = vunpack.c.h.b16 %v407
    %v1716 = vunpack.c.l.b16 %v408
    %v1717 = vunpack.c.h.b16 %v408
    %v1718 = vunpack.c.l.b16 %v409
    %v1719 = vunpack.c.h.b16 %v409
    %v1720 = vunpack.c.l.b16 %v410
    %v1721 = vunpack.c.h.b16 %v410
    %v1722 = vunpack.c.l.b16 %v411
    %v1723 = vunpack.c.h.b16 %v411
    %v1724 = vunpack.c.l.b16 %v412
    %v1725 = vunpack.c.h.b16 %v412
    %v1726 = vunpack.c.l.b16 %v413
    %v1727 = vunpack.c.h.b16 %v413
    %v1728 = vunpack.c.l.b16 %v414
    %v1729 = vunpack.c.h.b16 %v414
    %v1730 = vunpack.c.l.b16 %v415
    %v1731 = vunpack.c.h.b16 %v415
    %v1732 = vunpack.c.l.b16 %v416
    %v1733 = vunpack.c.h.b16 %v416
    %v1734 = vunpack.c.l.b16 %v417
    %v1735 = vunpack.c.h.b16 %v417
    %v1736 = vunpack.c.l.b16 %v418
    %v1737 = vunpack.c.h.b16 %v418
    %v1738 = vunpack.c.l.b16 %v419
    %v1739 = vunpack.c.h.b16 %v419
    %v1740 = vunpack.c.l.b16 %v420
    %v1741 = vunpack.c.h.b16 %v420
    %v1742 = vunpack.c.l.b16 %v421
    %v1743 = vunpack.c.h.b16 %v421
    %v1744 = vunpack.c.l.b16 %v422
    %v1745 = vunpack.c.h.b16 %v422
    %v1746 = vunpack.c.l.b16 %v423
    %v1747 = vunpack.c.h.b16 %v423
    %v1748 = vunpack.c.l.b16 %v424
    %v1749 = vunpack.c.h.b16 %v424
    %v1750 = vunpack.c.l.b16 %v425
    %v1751 = vunpack.c.h.b16 %v425
    %v1752 = vunpack.c.l.b16 %v426
    %v1753 = vunpack.c.h.b16 %v426
    %v1754 = vunpack.c.l.b16 %v427
    %v1755 = vunpack.c.h.b16 %v427
    %v1756 = vunpack.c.l.b16 %v428
    %v1757 = vunpack.c.h.b16 %v428
    %v1758 = vunpack.c.l.b16 %v429
    %v1759 = vunpack.c.h.b16 %v429
    %v1760 = vunpack.c.l.b16 %v430
    %v1761 = vunpack.c.h.b16 %v430
    %v1762 = vunpack.c.l.b16 %v431
    %v1763 = vunpack.c.h.b16 %v431
    %v1764 = vunpack.c.l.b16 %v432
    %v1765 = vunpack.c.h.b16 %v432
    %v1766 = vunpack.c.l.b16 %v433
    %v1767 = vunpack.c.h.b16 %v433
    %v1768 = vunpack.c.l.b16 %v434
    %v1769 = vunpack.c.h.b16 %v434
    %v1770 = vunpack.c.l.b16 %v435
    %v1771 = vunpack.c.h.b16 %v435
    %v1772 = vunpack.c.l.b16 %v436
    %v1773 = vunpack.c.h.b16 %v436
    %v1774 = vunpack.c.l.b16 %v437
    %v1775 = vunpack.c.h.b16 %v437
    %v1776 = vunpack.c.l.b16 %v438
    %v1777 = vunpack.c.h.b16 %v438
    %v1778 = vunpack.c.l.b16 %v439
    %v1779 = vunpack.c.h.b16 %v439
    %v1780 = vunpack.c.l.b16 %v440
    %v1781 = vunpack.c.h.b16 %v440
    %v1782 = vunpack.c.l.b16 %v441
    %v1783 = vunpack.c.h.b16 %v441
    %v1784 = vunpack.c.l.b16 %v442
    %v1785 = vunpack.c.h.b16 %v442
    %v1786 = vunpack.c.l.b16 %v443
    %v1787 = vunpack.c.h.b16 %v443
    %v1788 = vunpack.c.l.b16 %v444
    %v1789 = vunpack.c.h.b16 %v444
    %v1790 = vunpack.c.l.b16 %v445
    %v1791 = vunpack.c.h.b16 %v445
    %v1792 = vunpack.c.l.b16 %v446
    %v1793 = vunpack.c.h.b16 %v446
    %v1794 = vunpack.c.l.b16 %v447
    %v1795 = vunpack.c.h.b16 %v447
    %v1796 = vunpack.c.l.b16 %v448
    %v1797 = vunpack.c.h.b16 %v448
    %v1798 = vunpack.c.l.b16 %v449
    %v1799 = vunpack.c.h.b16 %v449
    %v1800 = vunpack.c.l.b16 %v450
    %v1801 = vunpack.c.h.b16 %v450
    %v1802 = vunpack.c.l.b16 %v451
    %v1803 = vunpack.c.h.b16 %v451
    %v1804 = vunpack.c.l.b16 %v452
    %v1805 = vunpack.c.h.b16 %v452
    %v1806 = vunpack.c.l.b16 %v453
    %v1807 = vunpack.c.h.b16 %v453
    %v1808 = vunpack.c.l.b16 %v454
    %v1809 = vunpack.c.h.b16 %v454
    %v1810 = vunpack.c.l.b16 %v455
    %v1811 = vunpack.c.h.b16 %v455
    %v1812 = vunpack.c.l.b16 %v456
    %v1813 = vunpack.c.h.b16 %v456
    %v1814 = vunpack.c.l.b16 %v457
    %v1815 = vunpack.c.h.b16 %v457
    %v1816 = vunpack.c.l.b16 %v458
    %v1817 = vunpack.c.h.b16 %v458
    %v1818 = vunpack.c.l.b16 %v459
    %v1819 = vunpack.c.h.b16 %v459
    %v1820 = vunpack.c.l.b16 %v460
    %v1821 = vunpack.c.h.b16 %v460
    %v1822 = vunpack.c.l.b16 %v461
    %v1823 = vunpack.c.h.b16 %v461
    %v1824 = vunpack.c.l.b16 %v462
    %v1825 = vunpack.c.h.b16 %v462
    %v1826 = vunpack.c.l.b16 %v463
    %v1827 = vunpack.c.h.b16 %v463
    %v1828 = vunpack.c.l.b16 %v464
    %v1829 = vunpack.c.h.b16 %v464
    %v1830 = vunpack.c.l.b16 %v465
    %v1831 = vunpack.c.h.b16 %v465
    %v1832 = vunpack.c.l.b16 %v466
    %v1833 = vunpack.c.h.b16 %v466
    %v1834 = vunpack.c.l.b16 %v467
    %v1835 = vunpack.c.h.b16 %v467
    %v1836 = vunpack.c.l.b16 %v468
    %v1837 = vunpack.c.h.b16 %v468
    %v1838 = vunpack.c.l.b16 %v469
    %v1839 = vunpack.c.h.b16 %v469
    %v1840 = vunpack.c.l.b16 %v470
    %v1841 = vunpack.c.h.b16 %v470
    %v1842 = vunpack.c.l.b16 %v471
    %v1843 = vunpack.c.h.b16 %v471
    %v1844 = vunpack.c.l.b16 %v472
    %v1845 = vunpack.c.h.b16 %v472
    %v1846 = vunpack.c.l.b16 %v473
    %v1847 = vunpack.c.h.b16 %v473
    %v1848 = vunpack.c.l.b16 %v474
    %v1849 = vunpack.c.h.b16 %v474
    %v1850 = vunpack.c.l.b16 %v475
    %v1851 = vunpack.c.h.b16 %v475
    %v1852 = vunpack.c.l.b16 %v476
    %v1853 = vunpack.c.h.b16 %v476
    %v1854 = vunpack.c.l.b16 %v477
    %v1855 = vunpack.c.h.b16 %v477
    %v1856 = vunpack.c.l.b16 %v478
    %v1857 = vunpack.c.h.b16 %v478
    %v1858 = vunpack.c.l.b16 %v479
    %v1859 = vunpack.c.h.b16 %v479
    %v1860 = vunpack.c.l.b16 %v480
    %v1861 = vunpack.c.h.b16 %v480
    %v1862 = vunpack.c.l.b16 %v481
    %v1863 = vunpack.c.h.b16 %v481
    %v1864 = vunpack.c.l.b16 %v482
    %v1865 = vunpack.c.h.b16 %v482
    %v1866 = vunpack.c.l.b16 %v483
    %v1867 = vunpack.c.h.b16 %v483
    %v1868 = vunpack.c.l.b16 %v484
    %v1869 = vunpack.c.h.b16 %v484
    %v1870 = vunpack.c.l.b16 %v485
    %v1871 = vunpack.c.h.b16 %v485
    %v1872 = vunpack.c.l.b16 %v486
    %v1873 = vunpack.c.h.b16 %v486
    %v1874 = vunpack.c.l.b16 %v487
    %v1875 = vunpack.c.h.b16 %v487
    %v1876 = vunpack.c.l.b16 %v488
    %v1877 = vunpack.c.h.b16 %v488
    %v1878 = vunpack.c.l.b16 %v489
    %v1879 = vunpack.c.h.b16 %v489
    %v1880 = vunpack.c.l.b16 %v490
    %v1881 = vunpack.c.h.b16 %v490
    %v1882 = vunpack.c.l.b16 %v491
    %v1883 = vunpack.c.h.b16 %v491
    %v1884 = vunpack.c.l.b16 %v492
    %v1885 = vunpack.c.h.b16 %v492
    %v1886 = vunpack.c.l.b16 %v493
    %v1887 = vunpack.c.h.b16 %v493
    %v1888 = vunpack.c.l.b16 %v494
    %v1889 = vunpack.c.h.b16 %v494
    %v1890 = vunpack.c.l.b16 %v495
    %v1891 = vunpack.c.h.b16 %v495
    %v1892 = vunpack.c.l.b16 %v496
    %v1893 = vunpack.c.h.b16 %v496
    %v1894 = vunpack.c.l.b16 %v497
    %v1895 = vunpack.c.h.b16 %v497
    %v1896 = vunpack.c.l.b16 %v498
    %v1897 = vunpack.c.h.b16 %v498
    %v1898 = vunpack.c.l.b16 %v499
    %v1899 = vunpack.c.h.b16 %v499
    %v1900 = vunpack.c.l.b16 %v500
    %v1901 = vunpack.c.h.b16 %v500
    %v1902 = vunpack.c.l.b16 %v501
    %v1903 = vunpack.c.h.b16 %v501
    %v1904 = vunpack.c.l.b16 %v502
    %v1905 = vunpack.c.h.b16 %v502
    %v1906 = vunpack.c.l.b16 %v503
    %v1907 = vunpack.c.h.b16 %v503
    %v1908 = vunpack.c.l.b16 %v504
    %v1909 = vunpack.c.h.b16 %v504
    %v1910 = vunpack.c.l.b16 %v505
    %v1911 = vunpack.c.h.b16 %v505
    %v1912 = vunpack.c.l.b16 %v506
    %v1913 = vunpack.c.h.b16 %v506
    %v1914 = vunpack.c.l.b16 %v507
    %v1915 = vunpack.c.h.b16 %v507
    %v1916 = vunpack.c.l.b16 %v508
    %v1917 = vunpack.c.h.b16 %v508
    %v1918 = vunpack.c.l.b16 %v509
    %v1919 = vunpack.c.h.b16 %v509
    %v1920 = vunpack.c.l.b16 %v510
    %v1921 = vunpack.c.h.b16 %v510
    %v1922 = vunpack.c.l.b16 %v511
    %v1923 = vunpack.c.h.b16 %v511
    %v1924 = vunpack.c.l.b16 %v512
    %v1925 = vunpack.c.h.b16 %v512
    %v1926 = vunpack.c.l.b16 %v513
    %v1927 = vunpack.c.h.b16 %v513
    %v1928 = vunpack.c.l.b16 %v514
    %v1929 = vunpack.c.h.b16 %v514
    %v1930 = vunpack.c.l.b16 %v515
    %v1931 = vunpack.c.h.b16 %v515
    %v1932 = vunpack.c.l.b16 %v516
    %v1933 = vunpack.c.h.b16 %v516
    %v1934 = vunpack.c.l.b16 %v517
    %v1935 = vunpack.c.h.b16 %v517
    %v1936 = vunpack.c.l.b16 %v518
    %v1937 = vunpack.c.h.b16 %v518
    %v1938 = vunpack.c.l.b16 %v519
    %v1939 = vunpack.c.h.b16 %v519
    %v1940 = vunpack.c.l.b16 %v520
    %v1941 = vunpack.c.h.b16 %v520
    %v1942 = vunpack.c.l.b16 %v521
    %v1943 = vunpack.c.h.b16 %v521
    %v1944 = vunpack.c.l.b16 %v522
    %v1945 = vunpack.c.h.b16 %v522
    %v1946 = vunpack.c.l.b16 %v523
    %v1947 = vunpack.c.h.b16 %v523
    %v1948 = vunpack.c.l.b16 %v524
    %v1949 = vunpack.c.h.b16 %v524
    %v1950 = vunpack.c.l.b16 %v525
    %v1951 = vunpack.c.h.b16 %v525
    %v1952 = vunpack.c.l.b16 %v526
    %v1953 = vunpack.c.h.b16 %v526
    %v1954 = vunpack.c.l.b16 %v527
    %v1955 = vunpack.c.h.b16 %v527
    %v1956 = vunpack.c.l.b16 %v528
    %v1957 = vunpack.c.h.b16 %v528
    %v1958 = vunpack.c.l.b16 %v529
    %v1959 = vunpack.c.h.b16 %v529
    %v1960 = vunpack.c.l.b16 %v530
    %v1961 = vunpack.c.h.b16 %v530
    %v1962 = vunpack.c.l.b16 %v531
    %v1963 = vunpack.c.h.b16 %v531
    %v1964 = vunpack.c.l.b16 %v532
    %v1965 = vunpack.c.h.b16 %v532
    %v1966 = vunpack.c.l.b16 %v533
    %v1967 = vunpack.c.h.b16 %v533
    %v1968 = vunpack.c.l.b16 %v534
    %v1969 = vunpack.c.h.b16 %v534
    %v1970 = vunpack.c.l.b16 %v535
    %v1971 = vunpack.c.h.b16 %v535
    %v1972 = vunpack.c.l.b16 %v536
    %v1973 = vunpack.c.h.b16 %v536
    %v1974 = vunpack.c.l.b16 %v537
    %v1975 = vunpack.c.h.b16 %v537
    %v1976 = vunpack.c.l.b16 %v538
    %v1977 = vunpack.c.h.b16 %v538
    %v1978 = vunpack.c.l.b16 %v539
    %v1979 = vunpack.c.h.b16 %v539
    %v1980 = vunpack.c.l.b16 %v540
    %v1981 = vunpack.c.h.b16 %v540
    %v1982 = vunpack.c.l.b16 %v541
    %v1983 = vunpack.c.h.b16 %v541
    %v1984 = vunpack.c.l.b16 %v542
    %v1985 = vunpack.c.h.b16 %v542
    %v1986 = vunpack.c.l.b16 %v543
    %v1987 = vunpack.c.h.b16 %v543
    %v1988 = vunpack.c.l.b16 %v544
    %v1989 = vunpack.c.h.b16 %v544
    %v1990 = vunpack.c.l.b16 %v545
    %v1991 = vunpack.c.h.b16 %v545
    %v1992 = vunpack.c.l.b16 %v546
    %v1993 = vunpack.c.h.b16 %v546
    %v1994 = vunpack.c.l.b16 %v547
    %v1995 = vunpack.c.h.b16 %v547
    %v1996 = vunpack.c.l.b16 %v548
    %v1997 = vunpack.c.h.b16 %v548
    %v1998 = vunpack.c.l.b16 %v549
    %v1999 = vunpack.c.h.b16 %v549
    %v2000 = vunpack.c.l.b16 %v550
    %v2001 = vunpack.c.h.b16 %v550
    %v2002 = vunpack.c.l.b16 %v551
    %v2003 = vunpack.c.h.b16 %v551
    %v2004 = vunpack.c.l.b16 %v552
    %v2005 = vunpack.c.h.b16 %v552
    %v2006 = vunpack.c.l.b16 %v553
    %v2007 = vunpack.c.h.b16 %v553
    %v2008 = vunpack.c.l.b16 %v554
    %v2009 = vunpack.c.h.b16 %v554
    %v2010 = vunpack.c.l.b16 %v555
    %v2011 = vunpack.c.h.b16 %v555
    %v2012 = vunpack.c.l.b16 %v556
    %v2013 = vunpack.c.h.b16 %v556
    %v2014 = vunpack.c.l.b16 %v557
    %v2015 = vunpack.c.h.b16 %v557
    %v2016 = vunpack.c.l.b16 %v558
    %v2017 = vunpack.c.h.b16 %v558
    %v2018 = vunpack.c.l.b16 %v559
    %v2019 = vunpack.c.h.b16 %v559
    %v2020 = vunpack.c.l.b16 %v560
    %v2021 = vunpack.c.h.b16 %v560
    %v2022 = vunpack.c.l.b16 %v561
    %v2023 = vunpack.c.h.b16 %v561
    %v2024 = vunpack.c.l.b16 %v562
    %v2025 = vunpack.c.h.b16 %v562
    %v2026 = vunpack.c.l.b16 %v563
    %v2027 = vunpack.c.h.b16 %v563
    %v2028 = vunpack.c.l.b16 %v564
    %v2029 = vunpack.c.h.b16 %v564
    %v2030 = vunpack.c.l.b16 %v565
    %v2031 = vunpack.c.h.b16 %v565
    %v2032 = vunpack.c.l.b16 %v566
    %v2033 = vunpack.c.h.b16 %v566
    %v2034 = vunpack.c.l.b16 %v567
    %v2035 = vunpack.c.h.b16 %v567
    %v2036 = vunpack.c.l.b16 %v568
    %v2037 = vunpack.c.h.b16 %v568
    %v2038 = vunpack.c.l.b16 %v569
    %v2039 = vunpack.c.h.b16 %v569
    %v2040 = vunpack.c.l.b16 %v570
    %v2041 = vunpack.c.h.b16 %v570
    %v2042 = vunpack.c.l.b16 %v571
    %v2043 = vunpack.c.h.b16 %v571
    %v2044 = vunpack.c.l.b16 %v572
    %v2045 = vunpack.c.h.b16 %v572
    %v2046 = vunpack.c.l.b16 %v573
    %v2047 = vunpack.c.h.b16 %v573
    %v2048 = vunpack.c.l.b16 %v574
    %v2049 = vunpack.c.h.b16 %v574
    %v2050 = vunpack.c.l.b16 %v575
    %v2051 = vunpack.c.h.b16 %v575
    %v2052 = vunpack.c.l.b16 %v576
    %v2053 = vunpack.c.h.b16 %v576
    %v2054 = vunpack.c.l.b16 %v577
    %v2055 = vunpack.c.h.b16 %v577
    %v2056 = vunpack.c.l.b16 %v578
    %v2057 = vunpack.c.h.b16 %v578
    %v2058 = vunpack.c.l.b16 %v579
    %v2059 = vunpack.c.h.b16 %v579
    %v2060 = vunpack.c.l.b16 %v580
    %v2061 = vunpack.c.h.b16 %v580
    %v2062 = vunpack.c.l.b16 %v581
    %v2063 = vunpack.c.h.b16 %v581
    %v2064 = vunpack.c.l.b16 %v582
    %v2065 = vunpack.c.h.b16 %v582
    %v2066 = vunpack.c.l.b16 %v583
    %v2067 = vunpack.c.h.b16 %v583
    %v2068 = vunpack.c.l.b16 %v584
    %v2069 = vunpack.c.h.b16 %v584
    %v2070 = vunpack.c.l.b16 %v585
    %v2071 = vunpack.c.h.b16 %v585
    %v2072 = vunpack.c.l.b16 %v586
    %v2073 = vunpack.c.h.b16 %v586
    %v2074 = vunpack.c.l.b16 %v587
    %v2075 = vunpack.c.h.b16 %v587
    %v2076 = vunpack.c.l.b16 %v588
    %v2077 = vunpack.c.h.b16 %v588
    %v2078 = vunpack.c.l.b16 %v589
    %v2079 = vunpack.c.h.b16 %v589
    %v2080 = vunpack.c.l.b16 %v590
    %v2081 = vunpack.c.h.b16 %v590
    %v2082 = vunpack.c.l.b16 %v591
    %v2083 = vunpack.c.h.b16 %v591
    %v2084 = vunpack.c.l.b16 %v592
    %v2085 = vunpack.c.h.b16 %v592
    %v2086 = vunpack.c.l.b16 %v593
    %v2087 = vunpack.c.h.b16 %v593
    %v2088 = vunpack.c.l.b16 %v594
    %v2089 = vunpack.c.h.b16 %v594
    %v2090 = vunpack.c.l.b16 %v595
    %v2091 = vunpack.c.h.b16 %v595
    %v2092 = vunpack.c.l.b16 %v596
    %v2093 = vunpack.c.h.b16 %v596
    %v2094 = vunpack.c.l.b16 %v597
    %v2095 = vunpack.c.h.b16 %v597
    %v2096 = vunpack.c.l.b16 %v598
    %v2097 = vunpack.c.h.b16 %v598
    %v2098 = vunpack.c.l.b16 %v599
    %v2099 = vunpack.c.h.b16 %v599
    %v2100 = vunpack.c.l.b16 %v600
    %v2101 = vunpack.c.h.b16 %v600
    %v2102 = vunpack.c.l.b16 %v601
    %v2103 = vunpack.c.h.b16 %v601
    %v2104 = vunpack.c.l.b16 %v602
    %v2105 = vunpack.c.h.b16 %v602
    %v2106 = vunpack.c.l.b16 %v603
    %v2107 = vunpack.c.h.b16 %v603
    %v2108 = vunpack.c.l.b16 %v604
    %v2109 = vunpack.c.h.b16 %v604
    %v2110 = vunpack.c.l.b16 %v605
    %v2111 = vunpack.c.h.b16 %v605
    %v2112 = vunpack.c.l.b16 %v606
    %v2113 = vunpack.c.h.b16 %v606
    %v2114 = vunpack.c.l.b16 %v607
    %v2115 = vunpack.c.h.b16 %v607
    %v2116 = vunpack.c.l.b16 %v608
    %v2117 = vunpack.c.h.b16 %v608
    %v2118 = vunpack.c.l.b16 %v609
    %v2119 = vunpack.c.h.b16 %v609
    %v2120 = vunpack.c.l.b16 %v610
    %v2121 = vunpack.c.h.b16 %v610
    %v2122 = vunpack.c.l.b16 %v611
    %v2123 = vunpack.c.h.b16 %v611
    %v2124 = vunpack.c.l.b16 %v612
    %v2125 = vunpack.c.h.b16 %v612
    %v2126 = vunpack.c.l.b16 %v613
    %v2127 = vunpack.c.h.b16 %v613
    %v2128 = vunpack.c.l.b16 %v614
    %v2129 = vunpack.c.h.b16 %v614
    %v2130 = vunpack.c.l.b16 %v615
    %v2131 = vunpack.c.h.b16 %v615
    %v2132 = vunpack.c.l.b16 %v616
    %v2133 = vunpack.c.h.b16 %v616
    %v2134 = vunpack.c.l.b16 %v617
    %v2135 = vunpack.c.h.b16 %v617
    %v2136 = vunpack.c.l.b16 %v618
    %v2137 = vunpack.c.h.b16 %v618
    %v2138 = vunpack.c.l.b16 %v619
    %v2139 = vunpack.c.h.b16 %v619
    %v2140 = vunpack.c.l.b16 %v620
    %v2141 = vunpack.c.h.b16 %v620
    %v2142 = vunpack.c.l.b16 %v621
    %v2143 = vunpack.c.h.b16 %v621
    %v2144 = vunpack.c.l.b16 %v622
    %v2145 = vunpack.c.h.b16 %v622
    %v2146 = vunpack.c.l.b16 %v623
    %v2147 = vunpack.c.h.b16 %v623
    %v2148 = vunpack.c.l.b16 %v624
    %v2149 = vunpack.c.h.b16 %v624
    %v2150 = vunpack.c.l.b16 %v625
    %v2151 = vunpack.c.h.b16 %v625
    %v2152 = vunpack.c.l.b16 %v626
    %v2153 = vunpack.c.h.b16 %v626
    %v2154 = vunpack.c.l.b16 %v627
    %v2155 = vunpack.c.h.b16 %v627
    %v2156 = vunpack.c.l.b16 %v628
    %v2157 = vunpack.c.h.b16 %v628
    %v2158 = vunpack.c.l.b16 %v629
    %v2159 = vunpack.c.h.b16 %v629
    %v2160 = vunpack.c.l.b16 %v630
    %v2161 = vunpack.c.h.b16 %v630
    %v2162 = vunpack.c.l.b16 %v631
    %v2163 = vunpack.c.h.b16 %v631
    %v2164 = vunpack.c.l.b16 %v632
    %v2165 = vunpack.c.h.b16 %v632
    %v2166 = vunpack.c.l.b16 %v633
    %v2167 = vunpack.c.h.b16 %v633
    %v2168 = vunpack.c.l.b16 %v634
    %v2169 = vunpack.c.h.b16 %v634
    %v2170 = vunpack.c.l.b16 %v635
    %v2171 = vunpack.c.h.b16 %v635
    %v2172 = vunpack.c.l.b16 %v636
    %v2173 = vunpack.c.h.b16 %v636
    %v2174 = vunpack.c.l.b16 %v637
    %v2175 = vunpack.c.h.b16 %v637
    %v2176 = vunpack.c.l.b16 %v638
    %v2177 = vunpack.c.h.b16 %v638
    %v2178 = vunpack.c.l.b16 %v639
    %v2179 = vunpack.c.h.b16 %v639
    %v2180 = vunpack.c.l.b16 %v640
    %v2181 = vunpack.c.h.b16 %v640
    %v2182 = vunpack.c.l.b16 %v641
    %v2183 = vunpack.c.h.b16 %v641
    %v2184 = vunpack.c.l.b16 %v642
    %v2185 = vunpack.c.h.b16 %v642
    %v2186 = vunpack.c.l.b16 %v643
    %v2187 = vunpack.c.h.b16 %v643
    %v2188 = vunpack.c.l.b16 %v644
    %v2189 = vunpack.c.h.b16 %v644
    %v2190 = vunpack.c.l.b16 %v645
    %v2191 = vunpack.c.h.b16 %v645
    %v2192 = vunpack.c.l.b16 %v646
    %v2193 = vunpack.c.h.b16 %v646
    %v2194 = vunpack.c.l.b16 %v647
    %v2195 = vunpack.c.h.b16 %v647
    %v2196 = vunpack.c.l.b16 %v648
    %v2197 = vunpack.c.h.b16 %v648
    %v2198 = vunpack.c.l.b16 %v649
    %v2199 = vunpack.c.h.b16 %v649
    %v2200 = vunpack.c.l.b16 %v650
    %v2201 = vunpack.c.h.b16 %v650
    %v2202 = vunpack.c.l.b16 %v651
    %v2203 = vunpack.c.h.b16 %v651
    %v2204 = vunpack.c.l.b16 %v652
    %v2205 = vunpack.c.h.b16 %v652
    %v2206 = vunpack.c.l.b16 %v653
    %v2207 = vunpack.c.h.b16 %v653
    %v2208 = vunpack.c.l.b16 %v654
    %v2209 = vunpack.c.h.b16 %v654
    %v2210 = vunpack.c.l.b16 %v655
    %v2211 = vunpack.c.h.b16 %v655
    %v2212 = vpack.c.b16 %v1204, %v1188
    %v2213 = vpack.c.b16 %v1205, %v1189
    %v2214 = vpack.c.b16 %v1206, %v1190
    %v2215 = vpack.c.b16 %v1207, %v1191
    %v2216 = vpack.c.b16 %v1208, %v1192
    %v2217 = vpack.c.b16 %v1209, %v1193
    %v2218 = vpack.c.b16 %v1210, %v1194
    %v2219 = vpack.c.b16 %v1211, %v1195
    %v2220 = vpack.c.b16 %v1212, %v1196
    %v2221 = vpack.c.b16 %v1213, %v1197
    %v2222 = vpack.c.b16 %v1214, %v1198
    %v2223 = vpack.c.b16 %v1215, %v1199
    %v2224 = vpack.c.b16 %v1216, %v1200
    %v2225 = vpack.c.b16 %v1217, %v1201
    %v2226 = vpack.c.b16 %v1218, %v1202
    %v2227 = vpack.c.b16 %v1219, %v1203
    %v2228 = vpack.c.b16 %v1236, %v1220
    %v2229 = vpack.c.b16 %v1237, %v1221
    %v2230 = vpack.c.b16 %v1238, %v1222
    %v2231 = vpack.c.b16 %v1239, %v1223
    %v2232 = vpack.c.b16 %v1240, %v1224
    %v2233 = vpack.c.b16 %v1241, %v1225
    %v2234 = vpack.c.b16 %v1242, %v1226
    %v2235 = vpack.c.b16 %v1243, %v1227
    %v2236 = vpack.c.b16 %v1244, %v1228
    %v2237 = vpack.c.b16 %v1245, %v1229
    %v2238 = vpack.c.b16 %v1246, %v1230
    %v2239 = vpack.c.b16 %v1247, %v1231
    %v2240 = vpack.c.b16 %v1248, %v1232
    %v2241 = vpack.c.b16 %v1249, %v1233
    %v2242 = vpack.c.b16 %v1250, %v1234
    %v2243 = vpack.c.b16 %v1251, %v1235
    %v2244 = vpack.c.b16 %v1268, %v1252
    %v2245 = vpack.c.b16 %v1269, %v1253
    %v2246 = vpack.c.b16 %v1270, %v1254
    %v2247 = vpack.c.b16 %v1271, %v1255
    %v2248 = vpack.c.b16 %v1272, %v1256
    %v2249 = vpack.c.b16 %v1273, %v1257
    %v2250 = vpack.c.b16 %v1274, %v1258
    %v2251 = vpack.c.b16 %v1275, %v1259
    %v2252 = vpack.c.b16 %v1276, %v1260
    %v2253 = vpack.c.b16 %v1277, %v1261
    %v2254 = vpack.c.b16 %v1278, %v1262
    %v2255 = vpack.c.b16 %v1279, %v1263
    %v2256 = vpack.c.b16 %v1280, %v1264
    %v2257 = vpack.c.b16 %v1281, %v1265
    %v2258 = vpack.c.b16 %v1282, %v1266
    %v2259 = vpack.c.b16 %v1283, %v1267
    %v2260 = vpack.c.b16 %v1300, %v1284
    %v2261 = vpack.c.b16 %v1301, %v1285
    %v2262 = vpack.c.b16 %v1302, %v1286
    %v2263 = vpack.c.b16 %v1303, %v1287
    %v2264 = vpack.c.b16 %v1304, %v1288
    %v2265 = vpack.c.b16 %v1305, %v1289
    %v2266 = vpack.c.b16 %v1306, %v1290
    %v2267 = vpack.c.b16 %v1307, %v1291
    %v2268 = vpack.c.b16 %v1308, %v1292
    %v2269 = vpack.c.b16 %v1309, %v1293
    %v2270 = vpack.c.b16 %v1310, %v1294
    %v2271 = vpack.c.b16 %v1311, %v1295
    %v2272 = vpack.c.b16 %v1312, %v1296
    %v2273 = vpack.c.b16 %v1313, %v1297
    %v2274 = vpack.c.b16 %v1314, %v1298
    %v2275 = vpack.c.b16 %v1315, %v1299
    %v2276 = vpack.c.b16 %v1332, %v1316
    %v2277 = vpack.c.b16 %v1333, %v1317
    %v2278 = vpack.c.b16 %v1334, %v1318
    %v2279 = vpack.c.b16 %v1335, %v1319
    %v2280 = vpack.c.b16 %v1336, %v1320
    %v2281 = vpack.c.b16 %v1337, %v1321
    %v2282 = vpack.c.b16 %v1338, %v1322
    %v2283 = vpack.c.b16 %v1339, %v1323
    %v2284 = vpack.c.b16 %v1340, %v1324
    %v2285 = vpack.c.b16 %v1341, %v1325
    %v2286 = vpack.c.b16 %v1342, %v1326
    %v2287 = vpack.c.b16 %v1343, %v1327
    %v2288 = vpack.c.b16 %v1344, %v1328
    %v2289 = vpack.c.b16 %v1345, %v1329
    %v2290 = vpack.c.b16 %v1346, %v1330
    %v2291 = vpack.c.b16 %v1347, %v1331
    %v2292 = vpack.c.b16 %v1364, %v1348
    %v2293 = vpack.c.b16 %v1365, %v1349
    %v2294 = vpack.c.b16 %v1366, %v1350
    %v2295 = vpack.c.b16 %v1367, %v1351
    %v2296 = vpack.c.b16 %v1368, %v1352
    %v2297 = vpack.c.b16 %v1369, %v1353
    %v2298 = vpack.c.b16 %v1370, %v1354
    %v2299 = vpack.c.b16 %v1371, %v1355
    %v2300 = vpack.c.b16 %v1372, %v1356
    %v2301 = vpack.c.b16 %v1373, %v1357
    %v2302 = vpack.c.b16 %v1374, %v1358
    %v2303 = vpack.c.b16 %v1375, %v1359
    %v2304 = vpack.c.b16 %v1376, %v1360
    %v2305 = vpack.c.b16 %v1377, %v1361
    %v2306 = vpack.c.b16 %v1378, %v1362
    %v2307 = vpack.c.b16 %v1379, %v1363
    %v2308 = vpack.c.b16 %v1396, %v1380
    %v2309 = vpack.c.b16 %v1397, %v1381
    %v2310 = vpack.c.b16 %v1398, %v1382
    %v2311 = vpack.c.b16 %v1399, %v1383
    %v2312 = vpack.c.b16 %v1400, %v1384
    %v2313 = vpack.c.b16 %v1401, %v1385
    %v2314 = vpack.c.b16 %v1402, %v1386
    %v2315 = vpack.c.b16 %v1403, %v1387
    %v2316 = vpack.c.b16 %v1404, %v1388
    %v2317 = vpack.c.b16 %v1405, %v1389
    %v2318 = vpack.c.b16 %v1406, %v1390
    %v2319 = vpack.c.b16 %v1407, %v1391
    %v2320 = vpack.c.b16 %v1408, %v1392
    %v2321 = vpack.c.b16 %v1409, %v1393
    %v2322 = vpack.c.b16 %v1410, %v1394
    %v2323 = vpack.c.b16 %v1411, %v1395
    %v2324 = vpack.c.b16 %v1428, %v1412
    %v2325 = vpack.c.b16 %v1429, %v1413
    %v2326 = vpack.c.b16 %v1430, %v1414
    %v2327 = vpack.c.b16 %v1431, %v1415
    %v2328 = vpack.c.b16 %v1432, %v1416
    %v2329 = vpack.c.b16 %v1433, %v1417
    %v2330 = vpack.c.b16 %v1434, %v1418
    %v2331 = vpack.c.b16 %v1435, %v1419
    %v2332 = vpack.c.b16 %v1436, %v1420
    %v2333 = vpack.c.b16 %v1437, %v1421
    %v2334 = vpack.c.b16 %v1438, %v1422
    %v2335 = vpack.c.b16 %v1439, %v1423
    %v2336 = vpack.c.b16 %v1440, %v1424
    %v2337 = vpack.c.b16 %v1441, %v1425
    %v2338 = vpack.c.b16 %v1442, %v1426
    %v2339 = vpack.c.b16 %v1443, %v1427
    %v2340 = vpack.c.b16 %v1460, %v1444
    %v2341 = vpack.c.b16 %v1461, %v1445
    %v2342 = vpack.c.b16 %v1462, %v1446
    %v2343 = vpack.c.b16 %v1463, %v1447
    %v2344 = vpack.c.b16 %v1464, %v1448
    %v2345 = vpack.c.b16 %v1465, %v1449
    %v2346 = vpack.c.b16 %v1466, %v1450
    %v2347 = vpack.c.b16 %v1467, %v1451
    %v2348 = vpack.c.b16 %v1468, %v1452
    %v2349 = vpack.c.b16 %v1469, %v1453
    %v2350 = vpack.c.b16 %v1470, %v1454
    %v2351 = vpack.c.b16 %v1471, %v1455
    %v2352 = vpack.c.b16 %v1472, %v1456
    %v2353 = vpack.c.b16 %v1473, %v1457
    %v2354 = vpack.c.b16 %v1474, %v1458
    %v2355 = vpack.c.b16 %v1475, %v1459
    %v2356 = vpack.c.b16 %v1492, %v1476
    %v2357 = vpack.c.b16 %v1493, %v1477
    %v2358 = vpack.c.b16 %v1494, %v1478
    %v2359 = vpack.c.b16 %v1495, %v1479
    %v2360 = vpack.c.b16 %v1496, %v1480
    %v2361 = vpack.c.b16 %v1497, %v1481
    %v2362 = vpack.c.b16 %v1498, %v1482
    %v2363 = vpack.c.b16 %v1499, %v1483
    %v2364 = vpack.c.b16 %v1500, %v1484
    %v2365 = vpack.c.b16 %v1501, %v1485
    %v2366 = vpack.c.b16 %v1502, %v1486
    %v2367 = vpack.c.b16 %v1503, %v1487
    %v2368 = vpack.c.b16 %v1504, %v1488
    %v2369 = vpack.c.b16 %v1505, %v1489
    %v2370 = vpack.c.b16 %v1506, %v1490
    %v2371 = vpack.c.b16 %v1507, %v1491
    %v2372 = vpack.c.b16 %v1524, %v1508
    %v2373 = vpack.c.b16 %v1525, %v1509
    %v2374 = vpack.c.b16 %v1526, %v1510
    %v2375 = vpack.c.b16 %v1527, %v1511
    %v2376 = vpack.c.b16 %v1528, %v1512
    %v2377 = vpack.c.b16 %v1529, %v1513
    %v2378 = vpack.c.b16 %v1530, %v1514
    %v2379 = vpack.c.b16 %v1531, %v1515
    %v2380 = vpack.c.b16 %v1532, %v1516
    %v2381 = vpack.c.b16 %v1533, %v1517
    %v2382 = vpack.c.b16 %v1534, %v1518
    %v2383 = vpack.c.b16 %v1535, %v1519
    %v2384 = vpack.c.b16 %v1536, %v1520
    %v2385 = vpack.c.b16 %v1537, %v1521
    %v2386 = vpack.c.b16 %v1538, %v1522
    %v2387 = vpack.c.b16 %v1539, %v1523
    %v2388 = vpack.c.b16 %v1556, %v1540
    %v2389 = vpack.c.b16 %v1557, %v1541
    %v2390 = vpack.c.b16 %v1558, %v1542
    %v2391 = vpack.c.b16 %v1559, %v1543
    %v2392 = vpack.c.b16 %v1560, %v1544
    %v2393 = vpack.c.b16 %v1561, %v1545
    %v2394 = vpack.c.b16 %v1562, %v1546
    %v2395 = vpack.c.b16 %v1563, %v1547
    %v2396 = vpack.c.b16 %v1564, %v1548
    %v2397 = vpack.c.b16 %v1565, %v1549
    %v2398 = vpack.c.b16 %v1566, %v1550
    %v2399 = vpack.c.b16 %v1567, %v1551
    %v2400 = vpack.c.b16 %v1568, %v1552
    %v2401 = vpack.c.b16 %v1569, %v1553
    %v2402 = vpack.c.b16 %v1570, %v1554
    %v2403 = vpack.c.b16 %v1571, %v1555
    %v2404 = vpack.c.b16 %v1588, %v1572
    %v2405 = vpack.c.b16 %v1589, %v1573
    %v2406 = vpack.c.b16 %v1590, %v1574
    %v2407 = vpack.c.b16 %v1591, %v1575
    %v2408 = vpack.c.b16 %v1592, %v1576
    %v2409 = vpack.c.b16 %v1593, %v1577
    %v2410 = vpack.c.b16 %v1594, %v1578
    %v2411 = vpack.c.b16 %v1595, %v1579
    %v2412 = vpack.c.b16 %v1596, %v1580
    %v2413 = vpack.c.b16 %v1597, %v1581
    %v2414 = vpack.c.b16 %v1598, %v1582
    %v2415 = vpack.c.b16 %v1599, %v1583
    %v2416 = vpack.c.b16 %v1600, %v1584
    %v2417 = vpack.c.b16 %v1601, %v1585
    %v2418 = vpack.c.b16 %v1602, %v1586
    %v2419 = vpack.c.b16 %v1603, %v1587
    %v2420 = vpack.c.b16 %v1620, %v1604
    %v2421 = vpack.c.b16 %v1621, %v1605
    %v2422 = vpack.c.b16 %v1622, %v1606
    %v2423 = vpack.c.b16 %v1623, %v1607
    %v2424 = vpack.c.b16 %v1624, %v1608
    %v2425 = vpack.c.b16 %v1625, %v1609
    %v2426 = vpack.c.b16 %v1626, %v1610
    %v2427 = vpack.c.b16 %v1627, %v1611
    %v2428 = vpack.c.b16 %v1628, %v1612
    %v2429 = vpack.c.b16 %v1629, %v1613
    %v2430 = vpack.c.b16 %v1630, %v1614
    %v2431 = vpack.c.b16 %v1631, %v1615
    %v2432 = vpack.c.b16 %v1632, %v1616
    %v2433 = vpack.c.b16 %v1633, %v1617
    %v2434 = vpack.c.b16 %v1634, %v1618
    %v2435 = vpack.c.b16 %v1635, %v1619
    %v2436 = vpack.c.b16 %v1652, %v1636
    %v2437 = vpack.c.b16 %v1653, %v1637
    %v2438 = vpack.c.b16 %v1654, %v1638
    %v2439 = vpack.c.b16 %v1655, %v1639
    %v2440 = vpack.c.b16 %v1656, %v1640
    %v2441 = vpack.c.b16 %v1657, %v1641
    %v2442 = vpack.c.b16 %v1658, %v1642
    %v2443 = vpack.c.b16 %v1659, %v1643
    %v2444 = vpack.c.b16 %v1660, %v1644
    %v2445 = vpack.c.b16 %v1661, %v1645
    %v2446 = vpack.c.b16 %v1662, %v1646
    %v2447 = vpack.c.b16 %v1663, %v1647
    %v2448 = vpack.c.b16 %v1664, %v1648
    %v2449 = vpack.c.b16 %v1665, %v1649
    %v2450 = vpack.c.b16 %v1666, %v1650
    %v2451 = vpack.c.b16 %v1667, %v1651
    %v2452 = vpack.c.b16 %v1684, %v1668
    %v2453 = vpack.c.b16 %v1685, %v1669
    %v2454 = vpack.c.b16 %v1686, %v1670
    %v2455 = vpack.c.b16 %v1687, %v1671
    %v2456 = vpack.c.b16 %v1688, %v1672
    %v2457 = vpack.c.b16 %v1689, %v1673
    %v2458 = vpack.c.b16 %v1690, %v1674
    %v2459 = vpack.c.b16 %v1691, %v1675
    %v2460 = vpack.c.b16 %v1692, %v1676
    %v2461 = vpack.c.b16 %v1693, %v1677
    %v2462 = vpack.c.b16 %v1694, %v1678
    %v2463 = vpack.c.b16 %v1695, %v1679
    %v2464 = vpack.c.b16 %v1696, %v1680
    %v2465 = vpack.c.b16 %v1697, %v1681
    %v2466 = vpack.c.b16 %v1698, %v1682
    %v2467 = vpack.c.b16 %v1699, %v1683
    %v2468 = vpack.c.b16 %v1716, %v1700
    %v2469 = vpack.c.b16 %v1717, %v1701
    %v2470 = vpack.c.b16 %v1718, %v1702
    %v2471 = vpack.c.b16 %v1719, %v1703
    %v2472 = vpack.c.b16 %v1720, %v1704
    %v2473 = vpack.c.b16 %v1721, %v1705
    %v2474 = vpack.c.b16 %v1722, %v1706
    %v2475 = vpack.c.b16 %v1723, %v1707
    %v2476 = vpack.c.b16 %v1724, %v1708
    %v2477 = vpack.c.b16 %v1725, %v1709
    %v2478 = vpack.c.b16 %v1726, %v1710
    %v2479 = vpack.c.b16 %v1727, %v1711
    %v2480 = vpack.c.b16 %v1728, %v1712
    %v2481 = vpack.c.b16 %v1729, %v1713
    %v2482 = vpack.c.b16 %v1730, %v1714
    %v2483 = vpack.c.b16 %v1731, %v1715
    %v2484 = vpack.c.b16 %v1748, %v1732
    %v2485 = vpack.c.b16 %v1749, %v1733
    %v2486 = vpack.c.b16 %v1750, %v1734
    %v2487 = vpack.c.b16 %v1751, %v1735
    %v2488 = vpack.c.b16 %v1752, %v1736
    %v2489 = vpack.c.b16 %v1753, %v1737
    %v2490 = vpack.c.b16 %v1754, %v1738
    %v2491 = vpack.c.b16 %v1755, %v1739
    %v2492 = vpack.c.b16 %v1756, %v1740
    %v2493 = vpack.c.b16 %v1757, %v1741
    %v2494 = vpack.c.b16 %v1758, %v1742
    %v2495 = vpack.c.b16 %v1759, %v1743
    %v2496 = vpack.c.b16 %v1760, %v1744
    %v2497 = vpack.c.b16 %v1761, %v1745
    %v2498 = vpack.c.b16 %v1762, %v1746
    %v2499 = vpack.c.b16 %v1763, %v1747
    %v2500 = vpack.c.b16 %v1780, %v1764
    %v2501 = vpack.c.b16 %v1781, %v1765
    %v2502 = vpack.c.b16 %v1782, %v1766
    %v2503 = vpack.c.b16 %v1783, %v1767
    %v2504 = vpack.c.b16 %v1784, %v1768
    %v2505 = vpack.c.b16 %v1785, %v1769
    %v2506 = vpack.c.b16 %v1786, %v1770
    %v2507 = vpack.c.b16 %v1787, %v1771
    %v2508 = vpack.c.b16 %v1788, %v1772
    %v2509 = vpack.c.b16 %v1789, %v1773
    %v2510 = vpack.c.b16 %v1790, %v1774
    %v2511 = vpack.c.b16 %v1791, %v1775
    %v2512 = vpack.c.b16 %v1792, %v1776
    %v2513 = vpack.c.b16 %v1793, %v1777
    %v2514 = vpack.c.b16 %v1794, %v1778
    %v2515 = vpack.c.b16 %v1795, %v1779
    %v2516 = vpack.c.b16 %v1812, %v1796
    %v2517 = vpack.c.b16 %v1813, %v1797
    %v2518 = vpack.c.b16 %v1814, %v1798
    %v2519 = vpack.c.b16 %v1815, %v1799
    %v2520 = vpack.c.b16 %v1816, %v1800
    %v2521 = vpack.c.b16 %v1817, %v1801
    %v2522 = vpack.c.b16 %v1818, %v1802
    %v2523 = vpack.c.b16 %v1819, %v1803
    %v2524 = vpack.c.b16 %v1820, %v1804
    %v2525 = vpack.c.b16 %v1821, %v1805
    %v2526 = vpack.c.b16 %v1822, %v1806
    %v2527 = vpack.c.b16 %v1823, %v1807
    %v2528 = vpack.c.b16 %v1824, %v1808
    %v2529 = vpack.c.b16 %v1825, %v1809
    %v2530 = vpack.c.b16 %v1826, %v1810
    %v2531 = vpack.c.b16 %v1827, %v1811
    %v2532 = vpack.c.b16 %v1844, %v1828
    %v2533 = vpack.c.b16 %v1845, %v1829
    %v2534 = vpack.c.b16 %v1846, %v1830
    %v2535 = vpack.c.b16 %v1847, %v1831
    %v2536 = vpack.c.b16 %v1848, %v1832
    %v2537 = vpack.c.b16 %v1849, %v1833
    %v2538 = vpack.c.b16 %v1850, %v1834
    %v2539 = vpack.c.b16 %v1851, %v1835
    %v2540 = vpack.c.b16 %v1852, %v1836
    %v2541 = vpack.c.b16 %v1853, %v1837
    %v2542 = vpack.c.b16 %v1854, %v1838
    %v2543 = vpack.c.b16 %v1855, %v1839
    %v2544 = vpack.c.b16 %v1856, %v1840
    %v2545 = vpack.c.b16 %v1857, %v1841
    %v2546 = vpack.c.b16 %v1858, %v1842
    %v2547 = vpack.c.b16 %v1859, %v1843
    %v2548 = vpack.c.b16 %v1876, %v1860
    %v2549 = vpack.c.b16 %v1877, %v1861
    %v2550 = vpack.c.b16 %v1878, %v1862
    %v2551 = vpack.c.b16 %v1879, %v1863
    %v2552 = vpack.c.b16 %v1880, %v1864
    %v2553 = vpack.c.b16 %v1881, %v1865
    %v2554 = vpack.c.b16 %v1882, %v1866
    %v2555 = vpack.c.b16 %v1883, %v1867
    %v2556 = vpack.c.b16 %v1884, %v1868
    %v2557 = vpack.c.b16 %v1885, %v1869
    %v2558 = vpack.c.b16 %v1886, %v1870
    %v2559 = vpack.c.b16 %v1887, %v1871
    %v2560 = vpack.c.b16 %v1888, %v1872
    %v2561 = vpack.c.b16 %v1889, %v1873
    %v2562 = vpack.c.b16 %v1890, %v1874
    %v2563 = vpack.c.b16 %v1891, %v1875
    %v2564 = vpack.c.b16 %v1908, %v1892
    %v2565 = vpack.c.b16 %v1909, %v1893
    %v2566 = vpack.c.b16 %v1910, %v1894
    %v2567 = vpack.c.b16 %v1911, %v1895
    %v2568 = vpack.c.b16 %v1912, %v1896
    %v2569 = vpack.c.b16 %v1913, %v1897
    %v2570 = vpack.c.b16 %v1914, %v1898
    %v2571 = vpack.c.b16 %v1915, %v1899
    %v2572 = vpack.c.b16 %v1916, %v1900
    %v2573 = vpack.c.b16 %v1917, %v1901
    %v2574 = vpack.c.b16 %v1918, %v1902
    %v2575 = vpack.c.b16 %v1919, %v1903
    %v2576 = vpack.c.b16 %v1920, %v1904
    %v2577 = vpack.c.b16 %v1921, %v1905
    %v2578 = vpack.c.b16 %v1922, %v1906
    %v2579 = vpack.c.b16 %v1923, %v1907
    %v2580 = vpack.c.b16 %v1940, %v1924
    %v2581 = vpack.c.b16 %v1941, %v1925
    %v2582 = vpack.c.b16 %v1942, %v1926
    %v2583 = vpack.c.b16 %v1943, %v1927
    %v2584 = vpack.c.b16 %v1944, %v1928
    %v2585 = vpack.c.b16 %v1945, %v1929
    %v2586 = vpack.c.b16 %v1946, %v1930
    %v2587 = vpack.c.b16 %v1947, %v1931
    %v2588 = vpack.c.b16 %v1948, %v1932
    %v2589 = vpack.c.b16 %v1949, %v1933
    %v2590 = vpack.c.b16 %v1950, %v1934
    %v2591 = vpack.c.b16 %v1951, %v1935
    %v2592 = vpack.c.b16 %v1952, %v1936
    %v2593 = vpack.c.b16 %v1953, %v1937
    %v2594 = vpack.c.b16 %v1954, %v1938
    %v2595 = vpack.c.b16 %v1955, %v1939
    %v2596 = vpack.c.b16 %v1972, %v1956
    %v2597 = vpack.c.b16 %v1973, %v1957
    %v2598 = vpack.c.b16 %v1974, %v1958
    %v2599 = vpack.c.b16 %v1975, %v1959
    %v2600 = vpack.c.b16 %v1976, %v1960
    %v2601 = vpack.c.b16 %v1977, %v1961
    %v2602 = vpack.c.b16 %v1978, %v1962
    %v2603 = vpack.c.b16 %v1979, %v1963
    %v2604 = vpack.c.b16 %v1980, %v1964
    %v2605 = vpack.c.b16 %v1981, %v1965
    %v2606 = vpack.c.b16 %v1982, %v1966
    %v2607 = vpack.c.b16 %v1983, %v1967
    %v2608 = vpack.c.b16 %v1984, %v1968
    %v2609 = vpack.c.b16 %v1985, %v1969
    %v2610 = vpack.c.b16 %v1986, %v1970
    %v2611 = vpack.c.b16 %v1987, %v1971
    %v2612 = vpack.c.b16 %v2004, %v1988
    %v2613 = vpack.c.b16 %v2005, %v1989
    %v2614 = vpack.c.b16 %v2006, %v1990
    %v2615 = vpack.c.b16 %v2007, %v1991
    %v2616 = vpack.c.b16 %v2008, %v1992
    %v2617 = vpack.c.b16 %v2009, %v1993
    %v2618 = vpack.c.b16 %v2010, %v1994
    %v2619 = vpack.c.b16 %v2011, %v1995
    %v2620 = vpack.c.b16 %v2012, %v1996
    %v2621 = vpack.c.b16 %v2013, %v1997
    %v2622 = vpack.c.b16 %v2014, %v1998
    %v2623 = vpack.c.b16 %v2015, %v1999
    %v2624 = vpack.c.b16 %v2016, %v2000
    %v2625 = vpack.c.b16 %v2017, %v2001
    %v2626 = vpack.c.b16 %v2018, %v2002
    %v2627 = vpack.c.b16 %v2019, %v2003
    %v2628 = vpack.c.b16 %v2036, %v2020
    %v2629 = vpack.c.b16 %v2037, %v2021
    %v2630 = vpack.c.b16 %v2038, %v2022
    %v2631 = vpack.c.b16 %v2039, %v2023
    %v2632 = vpack.c.b16 %v2040, %v2024
    %v2633 = vpack.c.b16 %v2041, %v2025
    %v2634 = vpack.c.b16 %v2042, %v2026
    %v2635 = vpack.c.b16 %v2043, %v2027
    %v2636 = vpack.c.b16 %v2044, %v2028
    %v2637 = vpack.c.b16 %v2045, %v2029
    %v2638 = vpack.c.b16 %v2046, %v2030
    %v2639 = vpack.c.b16 %v2047, %v2031
    %v2640 = vpack.c.b16 %v2048, %v2032
    %v2641 = vpack.c.b16 %v2049, %v2033
    %v2642 = vpack.c.b16 %v2050, %v2034
    %v2643 = vpack.c.b16 %v2051, %v2035
    %v2644 = vpack.c.b16 %v2068, %v2052
    %v2645 = vpack.c.b16 %v2069, %v2053
    %v2646 = vpack.c.b16 %v2070, %v2054
    %v2647 = vpack.c.b16 %v2071, %v2055
    %v2648 = vpack.c.b16 %v2072, %v2056
    %v2649 = vpack.c.b16 %v2073, %v2057
    %v2650 = vpack.c.b16 %v2074, %v2058
    %v2651 = vpack.c.b16 %v2075, %v2059
    %v2652 = vpack.c.b16 %v2076, %v2060
    %v2653 = vpack.c.b16 %v2077, %v2061
    %v2654 = vpack.c.b16 %v2078, %v2062
    %v2655 = vpack.c.b16 %v2079, %v2063
    %v2656 = vpack.c.b16 %v2080, %v2064
    %v2657 = vpack.c.b16 %v2081, %v2065
    %v2658 = vpack.c.b16 %v2082, %v2066
    %v2659 = vpack.c.b16 %v2083, %v2067
    %v2660 = vpack.c.b16 %v2100, %v2084
    %v2661 = vpack.c.b16 %v2101, %v2085
    %v2662 = vpack.c.b16 %v2102, %v2086
    %v2663 = vpack.c.b16 %v2103, %v2087
    %v2664 = vpack.c.b16 %v2104, %v2088
    %v2665 = vpack.c.b16 %v2105, %v2089
    %v2666 = vpack.c.b16 %v2106, %v2090
    %v2667 = vpack.c.b16 %v2107, %v2091
    %v2668 = vpack.c.b16 %v2108, %v2092
    %v2669 = vpack.c.b16 %v2109, %v2093
    %v2670 = vpack.c.b16 %v2110, %v2094
    %v2671 = vpack.c.b16 %v2111, %v2095
    %v2672 = vpack.c.b16 %v2112, %v2096
    %v2673 = vpack.c.b16 %v2113, %v2097
    %v2674 = vpack.c.b16 %v2114, %v2098
    %v2675 = vpack.c.b16 %v2115, %v2099
    %v2676 = vpack.c.b16 %v2132, %v2116
    %v2677 = vpack.c.b16 %v2133, %v2117
    %v2678 = vpack.c.b16 %v2134, %v2118
    %v2679 = vpack.c.b16 %v2135, %v2119
    %v2680 = vpack.c.b16 %v2136, %v2120
    %v2681 = vpack.c.b16 %v2137, %v2121
    %v2682 = vpack.c.b16 %v2138, %v2122
    %v2683 = vpack.c.b16 %v2139, %v2123
    %v2684 = vpack.c.b16 %v2140, %v2124
    %v2685 = vpack.c.b16 %v2141, %v2125
    %v2686 = vpack.c.b16 %v2142, %v2126
    %v2687 = vpack.c.b16 %v2143, %v2127
    %v2688 = vpack.c.b16 %v2144, %v2128
    %v2689 = vpack.c.b16 %v2145, %v2129
    %v2690 = vpack.c.b16 %v2146, %v2130
    %v2691 = vpack.c.b16 %v2147, %v2131
    %v2692 = vpack.c.b16 %v2164, %v2148
    %v2693 = vpack.c.b16 %v2165, %v2149
    %v2694 = vpack.c.b16 %v2166, %v2150
    %v2695 = vpack.c.b16 %v2167, %v2151
    %v2696 = vpack.c.b16 %v2168, %v2152
    %v2697 = vpack.c.b16 %v2169, %v2153
    %v2698 = vpack.c.b16 %v2170, %v2154
    %v2699 = vpack.c.b16 %v2171, %v2155
    %v2700 = vpack.c.b16 %v2172, %v2156
    %v2701 = vpack.c.b16 %v2173, %v2157
    %v2702 = vpack.c.b16 %v2174, %v2158
    %v2703 = vpack.c.b16 %v2175, %v2159
    %v2704 = vpack.c.b16 %v2176, %v2160
    %v2705 = vpack.c.b16 %v2177, %v2161
    %v2706 = vpack.c.b16 %v2178, %v2162
    %v2707 = vpack.c.b16 %v2179, %v2163
    %v2708 = vpack.c.b16 %v2196, %v2180
    %v2709 = vpack.c.b16 %v2197, %v2181
    %v2710 = vpack.c.b16 %v2198, %v2182
    %v2711 = vpack.c.b16 %v2199, %v2183
    %v2712 = vpack.c.b16 %v2200, %v2184
    %v2713 = vpack.c.b16 %v2201, %v2185
    %v2714 = vpack.c.b16 %v2202, %v2186
    %v2715 = vpack.c.b16 %v2203, %v2187
    %v2716 = vpack.c.b16 %v2204, %v2188
    %v2717 = vpack.c.b16 %v2205, %v2189
    %v2718 = vpack.c.b16 %v2206, %v2190
    %v2719 = vpack.c.b16 %v2207, %v2191
    %v2720 = vpack.c.b16 %v2208, %v2192
    %v2721 = vpack.c.b16 %v2209, %v2193
    %v2722 = vpack.c.b16 %v2210, %v2194
    %v2723 = vpack.c.b16 %v2211, %v2195
    %3236 = vmatprep.subr.bf16.mxu0 %v2213
    %3237 = vmatpush1.bf16.msra.mxu0 %v2212
    %3238 = vmatprep.subr.bf16.mxu0 %v2229
    %3239 = vmatpush1.bf16.msra.mxu0 %v2228
    %3240 = vmatprep.subr.bf16.mxu0 %v2245
    %3241 = vmatpush1.bf16.msra.mxu0 %v2244
    %3242 = vmatprep.subr.bf16.mxu0 %v2261
    %3243 = vmatpush1.bf16.msra.mxu0 %v2260
    %3244 = vmatprep.subr.bf16.mxu0 %v2277
    %3245 = vmatpush1.bf16.msra.mxu0 %v2276
    %3246 = vmatprep.subr.bf16.mxu0 %v2293
    %3247 = vmatpush1.bf16.msra.mxu0 %v2292
    %3248 = vmatprep.subr.bf16.mxu0 %v2309
    %3249 = vmatpush1.bf16.msra.mxu0 %v2308
    %3250 = vmatprep.subr.bf16.mxu0 %v2325
    %3251 = vmatpush1.bf16.msra.mxu0 %v2324
    %3252 = vmatprep.subr.bf16.mxu0 %v2341
    %3253 = vmatpush1.bf16.msra.mxu0 %v2340
    %3254 = vmatprep.subr.bf16.mxu0 %v2357
    %3255 = vmatpush1.bf16.msra.mxu0 %v2356
    %3256 = vmatprep.subr.bf16.mxu0 %v2373
    %3257 = vmatpush1.bf16.msra.mxu0 %v2372
    %3258 = vmatprep.subr.bf16.mxu0 %v2389
    %3259 = vmatpush1.bf16.msra.mxu0 %v2388
    %3260 = vmatprep.subr.bf16.mxu0 %v2405
    %3261 = vmatpush1.bf16.msra.mxu0 %v2404
    %3262 = vmatprep.subr.bf16.mxu0 %v2421
    %3263 = vmatpush1.bf16.msra.mxu0 %v2420
    %3264 = vmatprep.subr.bf16.mxu0 %v2437
    %3265 = vmatpush1.bf16.msra.mxu0 %v2436
    %3266 = vmatprep.subr.bf16.mxu0 %v2453
    %3267 = vmatpush1.bf16.msra.mxu0 %v2452
    %3268 = vmatprep.mubr.bf16.mxu0 %v669
    %3269 = vmatmul.mubr.bf16.gmra.mrb[0].mxu0 %v668
    %v3270 = vpop.f32.mrb[0].mxu0
    %v3271 = vadd.f32 0.0, %v3270
    %v3272 = vpop.f32.mrb[0].mxu0
    %v3273 = vadd.f32 0.0, %v3272
    %v3274 = vpop.f32.mrb[0].mxu0
    %v3275 = vadd.f32 0.0, %v3274
    %v3276 = vpop.f32.mrb[0].mxu0
    %v3277 = vadd.f32 0.0, %v3276
    %3278 = vdwg.mxu0
    %3279 = vmatprep.subr.bf16.mxu0 %v2469
    %3280 = vmatpush1.bf16.msra.mxu0 %v2468
    %3281 = vmatprep.subr.bf16.mxu0 %v2485
    %3282 = vmatpush1.bf16.msra.mxu0 %v2484
    %3283 = vmatprep.subr.bf16.mxu0 %v2501
    %3284 = vmatpush1.bf16.msra.mxu0 %v2500
    %3285 = vmatprep.subr.bf16.mxu0 %v2517
    %3286 = vmatpush1.bf16.msra.mxu0 %v2516
    %3287 = vmatprep.subr.bf16.mxu0 %v2533
    %3288 = vmatpush1.bf16.msra.mxu0 %v2532
    %3289 = vmatprep.subr.bf16.mxu0 %v2549
    %3290 = vmatpush1.bf16.msra.mxu0 %v2548
    %3291 = vmatprep.subr.bf16.mxu0 %v2565
    %3292 = vmatpush1.bf16.msra.mxu0 %v2564
    %3293 = vmatprep.subr.bf16.mxu0 %v2581
    %3294 = vmatpush1.bf16.msra.mxu0 %v2580
    %3295 = vmatprep.subr.bf16.mxu0 %v2597
    %3296 = vmatpush1.bf16.msra.mxu0 %v2596
    %3297 = vmatprep.subr.bf16.mxu0 %v2613
    %3298 = vmatpush1.bf16.msra.mxu0 %v2612
    %3299 = vmatprep.subr.bf16.mxu0 %v2629
    %3300 = vmatpush1.bf16.msra.mxu0 %v2628
    %3301 = vmatprep.subr.bf16.mxu0 %v2645
    %3302 = vmatpush1.bf16.msra.mxu0 %v2644
    %3303 = vmatprep.subr.bf16.mxu0 %v2661
    %3304 = vmatpush1.bf16.msra.mxu0 %v2660
    %3305 = vmatprep.subr.bf16.mxu0 %v2677
    %3306 = vmatpush1.bf16.msra.mxu0 %v2676
    %3307 = vmatprep.subr.bf16.mxu0 %v2693
    %3308 = vmatpush1.bf16.msra.mxu0 %v2692
    %3309 = vmatprep.subr.bf16.mxu0 %v2709
    %3310 = vmatpush1.bf16.msra.mxu0 %v2708
    %3311 = vmatprep.mubr.bf16.mxu0 %v671
    %3312 = vmatmul.mubr.bf16.gmra.mrb[0].mxu0 %v670
    %v3313 = vpop.f32.mrb[0].mxu0
    %v3314 = vadd.f32 %v3271, %v3313
    %v3315 = vpop.f32.mrb[0].mxu0
    %v3316 = vadd.f32 %v3273, %v3315
    %v3317 = vpop.f32.mrb[0].mxu0
    %v3318 = vadd.f32 %v3275, %v3317
    %v3319 = vpop.f32.mrb[0].mxu0
    %v3320 = vadd.f32 %v3277, %v3319
    %3321 = vdwg.mxu0
    %3322 = vmatprep.subr.bf16.mxu0 %v2215
    %3323 = vmatpush1.bf16.msra.mxu0 %v2214
    %3324 = vmatprep.subr.bf16.mxu0 %v2231
    %3325 = vmatpush1.bf16.msra.mxu0 %v2230
    %3326 = vmatprep.subr.bf16.mxu0 %v2247
    %3327 = vmatpush1.bf16.msra.mxu0 %v2246
    %3328 = vmatprep.subr.bf16.mxu0 %v2263
    %3329 = vmatpush1.bf16.msra.mxu0 %v2262
    %3330 = vmatprep.subr.bf16.mxu0 %v2279
    %3331 = vmatpush1.bf16.msra.mxu0 %v2278
    %3332 = vmatprep.subr.bf16.mxu0 %v2295
    %3333 = vmatpush1.bf16.msra.mxu0 %v2294
    %3334 = vmatprep.subr.bf16.mxu0 %v2311
    %3335 = vmatpush1.bf16.msra.mxu0 %v2310
    %3336 = vmatprep.subr.bf16.mxu0 %v2327
    %3337 = vmatpush1.bf16.msra.mxu0 %v2326
    %3338 = vmatprep.subr.bf16.mxu0 %v2343
    %3339 = vmatpush1.bf16.msra.mxu0 %v2342
    %3340 = vmatprep.subr.bf16.mxu0 %v2359
    %3341 = vmatpush1.bf16.msra.mxu0 %v2358
    %3342 = vmatprep.subr.bf16.mxu0 %v2375
    %3343 = vmatpush1.bf16.msra.mxu0 %v2374
    %3344 = vmatprep.subr.bf16.mxu0 %v2391
    %3345 = vmatpush1.bf16.msra.mxu0 %v2390
    %3346 = vmatprep.subr.bf16.mxu0 %v2407
    %3347 = vmatpush1.bf16.msra.mxu0 %v2406
    %3348 = vmatprep.subr.bf16.mxu0 %v2423
    %3349 = vmatpush1.bf16.msra.mxu0 %v2422
    %3350 = vmatprep.subr.bf16.mxu0 %v2439
    %3351 = vmatpush1.bf16.msra.mxu0 %v2438
    %3352 = vmatprep.subr.bf16.mxu0 %v2455
    %3353 = vmatpush1.bf16.msra.mxu0 %v2454
    %3354 = vmatprep.mubr.bf16.mxu0 %v669
    %3355 = vmatmul.mubr.bf16.gmra.mrb[0].mxu0 %v668
    %v3356 = vpop.f32.mrb[0].mxu0
    %v3357 = vadd.f32 0.0, %v3356
    %v3358 = vpop.f32.mrb[0].mxu0
    %v3359 = vadd.f32 0.0, %v3358
    %v3360 = vpop.f32.mrb[0].mxu0
    %v3361 = vadd.f32 0.0, %v3360
    %v3362 = vpop.f32.mrb[0].mxu0
    %v3363 = vadd.f32 0.0, %v3362
    %3364 = vdwg.mxu0
    %3365 = vmatprep.subr.bf16.mxu0 %v2471
    %3366 = vmatpush1.bf16.msra.mxu0 %v2470
    %3367 = vmatprep.subr.bf16.mxu0 %v2487
    %3368 = vmatpush1.bf16.msra.mxu0 %v2486
    %3369 = vmatprep.subr.bf16.mxu0 %v2503
    %3370 = vmatpush1.bf16.msra.mxu0 %v2502
    %3371 = vmatprep.subr.bf16.mxu0 %v2519
    %3372 = vmatpush1.bf16.msra.mxu0 %v2518
    %3373 = vmatprep.subr.bf16.mxu0 %v2535
    %3374 = vmatpush1.bf16.msra.mxu0 %v2534
    %3375 = vmatprep.subr.bf16.mxu0 %v2551
    %3376 = vmatpush1.bf16.msra.mxu0 %v2550
    %3377 = vmatprep.subr.bf16.mxu0 %v2567
    %3378 = vmatpush1.bf16.msra.mxu0 %v2566
    %3379 = vmatprep.subr.bf16.mxu0 %v2583
    %3380 = vmatpush1.bf16.msra.mxu0 %v2582
    %3381 = vmatprep.subr.bf16.mxu0 %v2599
    %3382 = vmatpush1.bf16.msra.mxu0 %v2598
    %3383 = vmatprep.subr.bf16.mxu0 %v2615
    %3384 = vmatpush1.bf16.msra.mxu0 %v2614
    %3385 = vmatprep.subr.bf16.mxu0 %v2631
    %3386 = vmatpush1.bf16.msra.mxu0 %v2630
    %3387 = vmatprep.subr.bf16.mxu0 %v2647
    %3388 = vmatpush1.bf16.msra.mxu0 %v2646
    %3389 = vmatprep.subr.bf16.mxu0 %v2663
    %3390 = vmatpush1.bf16.msra.mxu0 %v2662
    %3391 = vmatprep.subr.bf16.mxu0 %v2679
    %3392 = vmatpush1.bf16.msra.mxu0 %v2678
    %3393 = vmatprep.subr.bf16.mxu0 %v2695
    %3394 = vmatpush1.bf16.msra.mxu0 %v2694
    %3395 = vmatprep.subr.bf16.mxu0 %v2711
    %3396 = vmatpush1.bf16.msra.mxu0 %v2710
    %3397 = vmatprep.mubr.bf16.mxu0 %v671
    %3398 = vmatmul.mubr.bf16.gmra.mrb[0].mxu0 %v670
    %v3399 = vpop.f32.mrb[0].mxu0
    %v3400 = vadd.f32 %v3357, %v3399
    %v3401 = vpop.f32.mrb[0].mxu0
    %v3402 = vadd.f32 %v3359, %v3401
    %v3403 = vpop.f32.mrb[0].mxu0
    %v3404 = vadd.f32 %v3361, %v3403
    %v3405 = vpop.f32.mrb[0].mxu0
    %v3406 = vadd.f32 %v3363, %v3405
    %3407 = vdwg.mxu0
    %3408 = vmatprep.subr.bf16.mxu0 %v2217
    %3409 = vmatpush1.bf16.msra.mxu0 %v2216
    %3410 = vmatprep.subr.bf16.mxu0 %v2233
    %3411 = vmatpush1.bf16.msra.mxu0 %v2232
    %3412 = vmatprep.subr.bf16.mxu0 %v2249
    %3413 = vmatpush1.bf16.msra.mxu0 %v2248
    %3414 = vmatprep.subr.bf16.mxu0 %v2265
    %3415 = vmatpush1.bf16.msra.mxu0 %v2264
    %3416 = vmatprep.subr.bf16.mxu0 %v2281
    %3417 = vmatpush1.bf16.msra.mxu0 %v2280
    %3418 = vmatprep.subr.bf16.mxu0 %v2297
    %3419 = vmatpush1.bf16.msra.mxu0 %v2296
    %3420 = vmatprep.subr.bf16.mxu0 %v2313
    %3421 = vmatpush1.bf16.msra.mxu0 %v2312
    %3422 = vmatprep.subr.bf16.mxu0 %v2329
    %3423 = vmatpush1.bf16.msra.mxu0 %v2328
    %3424 = vmatprep.subr.bf16.mxu0 %v2345
    %3425 = vmatpush1.bf16.msra.mxu0 %v2344
    %3426 = vmatprep.subr.bf16.mxu0 %v2361
    %3427 = vmatpush1.bf16.msra.mxu0 %v2360
    %3428 = vmatprep.subr.bf16.mxu0 %v2377
    %3429 = vmatpush1.bf16.msra.mxu0 %v2376
    %3430 = vmatprep.subr.bf16.mxu0 %v2393
    %3431 = vmatpush1.bf16.msra.mxu0 %v2392
    %3432 = vmatprep.subr.bf16.mxu0 %v2409
    %3433 = vmatpush1.bf16.msra.mxu0 %v2408
    %3434 = vmatprep.subr.bf16.mxu0 %v2425
    %3435 = vmatpush1.bf16.msra.mxu0 %v2424
    %3436 = vmatprep.subr.bf16.mxu0 %v2441
    %3437 = vmatpush1.bf16.msra.mxu0 %v2440
    %3438 = vmatprep.subr.bf16.mxu0 %v2457
    %3439 = vmatpush1.bf16.msra.mxu0 %v2456
    %3440 = vmatprep.mubr.bf16.mxu0 %v669
    %3441 = vmatmul.mubr.bf16.gmra.mrb[0].mxu0 %v668
    %v3442 = vpop.f32.mrb[0].mxu0
    %v3443 = vadd.f32 0.0, %v3442
    %v3444 = vpop.f32.mrb[0].mxu0
    %v3445 = vadd.f32 0.0, %v3444
    %v3446 = vpop.f32.mrb[0].mxu0
    %v3447 = vadd.f32 0.0, %v3446
    %v3448 = vpop.f32.mrb[0].mxu0
    %v3449 = vadd.f32 0.0, %v3448
    %3450 = vdwg.mxu0
    %3451 = vmatprep.subr.bf16.mxu0 %v2473
    %3452 = vmatpush1.bf16.msra.mxu0 %v2472
    %3453 = vmatprep.subr.bf16.mxu0 %v2489
    %3454 = vmatpush1.bf16.msra.mxu0 %v2488
    %3455 = vmatprep.subr.bf16.mxu0 %v2505
    %3456 = vmatpush1.bf16.msra.mxu0 %v2504
    %3457 = vmatprep.subr.bf16.mxu0 %v2521
    %3458 = vmatpush1.bf16.msra.mxu0 %v2520
    %3459 = vmatprep.subr.bf16.mxu0 %v2537
    %3460 = vmatpush1.bf16.msra.mxu0 %v2536
    %3461 = vmatprep.subr.bf16.mxu0 %v2553
    %3462 = vmatpush1.bf16.msra.mxu0 %v2552
    %3463 = vmatprep.subr.bf16.mxu0 %v2569
    %3464 = vmatpush1.bf16.msra.mxu0 %v2568
    %3465 = vmatprep.subr.bf16.mxu0 %v2585
    %3466 = vmatpush1.bf16.msra.mxu0 %v2584
    %3467 = vmatprep.subr.bf16.mxu0 %v2601
    %3468 = vmatpush1.bf16.msra.mxu0 %v2600
    %3469 = vmatprep.subr.bf16.mxu0 %v2617
    %3470 = vmatpush1.bf16.msra.mxu0 %v2616
    %3471 = vmatprep.subr.bf16.mxu0 %v2633
    %3472 = vmatpush1.bf16.msra.mxu0 %v2632
    %3473 = vmatprep.subr.bf16.mxu0 %v2649
    %3474 = vmatpush1.bf16.msra.mxu0 %v2648
    %3475 = vmatprep.subr.bf16.mxu0 %v2665
    %3476 = vmatpush1.bf16.msra.mxu0 %v2664
    %3477 = vmatprep.subr.bf16.mxu0 %v2681
    %3478 = vmatpush1.bf16.msra.mxu0 %v2680
    %3479 = vmatprep.subr.bf16.mxu0 %v2697
    %3480 = vmatpush1.bf16.msra.mxu0 %v2696
    %3481 = vmatprep.subr.bf16.mxu0 %v2713
    %3482 = vmatpush1.bf16.msra.mxu0 %v2712
    %3483 = vmatprep.mubr.bf16.mxu0 %v671
    %3484 = vmatmul.mubr.bf16.gmra.mrb[0].mxu0 %v670
    %v3485 = vpop.f32.mrb[0].mxu0
    %v3486 = vadd.f32 %v3443, %v3485
    %v3487 = vpop.f32.mrb[0].mxu0
    %v3488 = vadd.f32 %v3445, %v3487
    %v3489 = vpop.f32.mrb[0].mxu0
    %v3490 = vadd.f32 %v3447, %v3489
    %v3491 = vpop.f32.mrb[0].mxu0
    %v3492 = vadd.f32 %v3449, %v3491
    %3493 = vdwg.mxu0
    %3494 = vmatprep.subr.bf16.mxu0 %v2219
    %3495 = vmatpush1.bf16.msra.mxu0 %v2218
    %3496 = vmatprep.subr.bf16.mxu0 %v2235
    %3497 = vmatpush1.bf16.msra.mxu0 %v2234
    %3498 = vmatprep.subr.bf16.mxu0 %v2251
    %3499 = vmatpush1.bf16.msra.mxu0 %v2250
    %3500 = vmatprep.subr.bf16.mxu0 %v2267
    %3501 = vmatpush1.bf16.msra.mxu0 %v2266
    %3502 = vmatprep.subr.bf16.mxu0 %v2283
    %3503 = vmatpush1.bf16.msra.mxu0 %v2282
    %3504 = vmatprep.subr.bf16.mxu0 %v2299
    %3505 = vmatpush1.bf16.msra.mxu0 %v2298
    %3506 = vmatprep.subr.bf16.mxu0 %v2315
    %3507 = vmatpush1.bf16.msra.mxu0 %v2314
    %3508 = vmatprep.subr.bf16.mxu0 %v2331
    %3509 = vmatpush1.bf16.msra.mxu0 %v2330
    %3510 = vmatprep.subr.bf16.mxu0 %v2347
    %3511 = vmatpush1.bf16.msra.mxu0 %v2346
    %3512 = vmatprep.subr.bf16.mxu0 %v2363
    %3513 = vmatpush1.bf16.msra.mxu0 %v2362
    %3514 = vmatprep.subr.bf16.mxu0 %v2379
    %3515 = vmatpush1.bf16.msra.mxu0 %v2378
    %3516 = vmatprep.subr.bf16.mxu0 %v2395
    %3517 = vmatpush1.bf16.msra.mxu0 %v2394
    %3518 = vmatprep.subr.bf16.mxu0 %v2411
    %3519 = vmatpush1.bf16.msra.mxu0 %v2410
    %3520 = vmatprep.subr.bf16.mxu0 %v2427
    %3521 = vmatpush1.bf16.msra.mxu0 %v2426
    %3522 = vmatprep.subr.bf16.mxu0 %v2443
    %3523 = vmatpush1.bf16.msra.mxu0 %v2442
    %3524 = vmatprep.subr.bf16.mxu0 %v2459
    %3525 = vmatpush1.bf16.msra.mxu0 %v2458
    %3526 = vmatprep.mubr.bf16.mxu0 %v669
    %3527 = vmatmul.mubr.bf16.gmra.mrb[0].mxu0 %v668
    %v3528 = vpop.f32.mrb[0].mxu0
    %v3529 = vadd.f32 0.0, %v3528
    %v3530 = vpop.f32.mrb[0].mxu0
    %v3531 = vadd.f32 0.0, %v3530
    %v3532 = vpop.f32.mrb[0].mxu0
    %v3533 = vadd.f32 0.0, %v3532
    %v3534 = vpop.f32.mrb[0].mxu0
    %v3535 = vadd.f32 0.0, %v3534
    %3536 = vdwg.mxu0
    %3537 = vmatprep.subr.bf16.mxu0 %v2475
    %3538 = vmatpush1.bf16.msra.mxu0 %v2474
    %3539 = vmatprep.subr.bf16.mxu0 %v2491
    %3540 = vmatpush1.bf16.msra.mxu0 %v2490
    %3541 = vmatprep.subr.bf16.mxu0 %v2507
    %3542 = vmatpush1.bf16.msra.mxu0 %v2506
    %3543 = vmatprep.subr.bf16.mxu0 %v2523
    %3544 = vmatpush1.bf16.msra.mxu0 %v2522
    %3545 = vmatprep.subr.bf16.mxu0 %v2539
    %3546 = vmatpush1.bf16.msra.mxu0 %v2538
    %3547 = vmatprep.subr.bf16.mxu0 %v2555
    %3548 = vmatpush1.bf16.msra.mxu0 %v2554
    %3549 = vmatprep.subr.bf16.mxu0 %v2571
    %3550 = vmatpush1.bf16.msra.mxu0 %v2570
    %3551 = vmatprep.subr.bf16.mxu0 %v2587
    %3552 = vmatpush1.bf16.msra.mxu0 %v2586
    %3553 = vmatprep.subr.bf16.mxu0 %v2603
    %3554 = vmatpush1.bf16.msra.mxu0 %v2602
    %3555 = vmatprep.subr.bf16.mxu0 %v2619
    %3556 = vmatpush1.bf16.msra.mxu0 %v2618
    %3557 = vmatprep.subr.bf16.mxu0 %v2635
    %3558 = vmatpush1.bf16.msra.mxu0 %v2634
    %3559 = vmatprep.subr.bf16.mxu0 %v2651
    %3560 = vmatpush1.bf16.msra.mxu0 %v2650
    %3561 = vmatprep.subr.bf16.mxu0 %v2667
    %3562 = vmatpush1.bf16.msra.mxu0 %v2666
    %3563 = vmatprep.subr.bf16.mxu0 %v2683
    %3564 = vmatpush1.bf16.msra.mxu0 %v2682
    %3565 = vmatprep.subr.bf16.mxu0 %v2699
    %3566 = vmatpush1.bf16.msra.mxu0 %v2698
    %3567 = vmatprep.subr.bf16.mxu0 %v2715
    %3568 = vmatpush1.bf16.msra.mxu0 %v2714
    %3569 = vmatprep.mubr.bf16.mxu0 %v671
    %3570 = vmatmul.mubr.bf16.gmra.mrb[0].mxu0 %v670
    %v3571 = vpop.f32.mrb[0].mxu0
    %v3572 = vadd.f32 %v3529, %v3571
    %v3573 = vpop.f32.mrb[0].mxu0
    %v3574 = vadd.f32 %v3531, %v3573
    %v3575 = vpop.f32.mrb[0].mxu0
    %v3576 = vadd.f32 %v3533, %v3575
    %v3577 = vpop.f32.mrb[0].mxu0
    %v3578 = vadd.f32 %v3535, %v3577
    %3579 = vdwg.mxu0
    %3580 = vmatprep.subr.bf16.mxu0 %v2221
    %3581 = vmatpush1.bf16.msra.mxu0 %v2220
    %3582 = vmatprep.subr.bf16.mxu0 %v2237
    %3583 = vmatpush1.bf16.msra.mxu0 %v2236
    %3584 = vmatprep.subr.bf16.mxu0 %v2253
    %3585 = vmatpush1.bf16.msra.mxu0 %v2252
    %3586 = vmatprep.subr.bf16.mxu0 %v2269
    %3587 = vmatpush1.bf16.msra.mxu0 %v2268
    %3588 = vmatprep.subr.bf16.mxu0 %v2285
    %3589 = vmatpush1.bf16.msra.mxu0 %v2284
    %3590 = vmatprep.subr.bf16.mxu0 %v2301
    %3591 = vmatpush1.bf16.msra.mxu0 %v2300
    %3592 = vmatprep.subr.bf16.mxu0 %v2317
    %3593 = vmatpush1.bf16.msra.mxu0 %v2316
    %3594 = vmatprep.subr.bf16.mxu0 %v2333
    %3595 = vmatpush1.bf16.msra.mxu0 %v2332
    %3596 = vmatprep.subr.bf16.mxu0 %v2349
    %3597 = vmatpush1.bf16.msra.mxu0 %v2348
    %3598 = vmatprep.subr.bf16.mxu0 %v2365
    %3599 = vmatpush1.bf16.msra.mxu0 %v2364
    %3600 = vmatprep.subr.bf16.mxu0 %v2381
    %3601 = vmatpush1.bf16.msra.mxu0 %v2380
    %3602 = vmatprep.subr.bf16.mxu0 %v2397
    %3603 = vmatpush1.bf16.msra.mxu0 %v2396
    %3604 = vmatprep.subr.bf16.mxu0 %v2413
    %3605 = vmatpush1.bf16.msra.mxu0 %v2412
    %3606 = vmatprep.subr.bf16.mxu0 %v2429
    %3607 = vmatpush1.bf16.msra.mxu0 %v2428
    %3608 = vmatprep.subr.bf16.mxu0 %v2445
    %3609 = vmatpush1.bf16.msra.mxu0 %v2444
    %3610 = vmatprep.subr.bf16.mxu0 %v2461
    %3611 = vmatpush1.bf16.msra.mxu0 %v2460
    %3612 = vmatprep.mubr.bf16.mxu0 %v669
    %3613 = vmatmul.mubr.bf16.gmra.mrb[0].mxu0 %v668
    %v3614 = vpop.f32.mrb[0].mxu0
    %v3615 = vadd.f32 0.0, %v3614
    %v3616 = vpop.f32.mrb[0].mxu0
    %v3617 = vadd.f32 0.0, %v3616
    %v3618 = vpop.f32.mrb[0].mxu0
    %v3619 = vadd.f32 0.0, %v3618
    %v3620 = vpop.f32.mrb[0].mxu0
    %v3621 = vadd.f32 0.0, %v3620
    %3622 = vdwg.mxu0
    %3623 = vmatprep.subr.bf16.mxu0 %v2477
    %3624 = vmatpush1.bf16.msra.mxu0 %v2476
    %3625 = vmatprep.subr.bf16.mxu0 %v2493
    %3626 = vmatpush1.bf16.msra.mxu0 %v2492
    %3627 = vmatprep.subr.bf16.mxu0 %v2509
    %3628 = vmatpush1.bf16.msra.mxu0 %v2508
    %3629 = vmatprep.subr.bf16.mxu0 %v2525
    %3630 = vmatpush1.bf16.msra.mxu0 %v2524
    %3631 = vmatprep.subr.bf16.mxu0 %v2541
    %3632 = vmatpush1.bf16.msra.mxu0 %v2540
    %3633 = vmatprep.subr.bf16.mxu0 %v2557
    %3634 = vmatpush1.bf16.msra.mxu0 %v2556
    %3635 = vmatprep.subr.bf16.mxu0 %v2573
    %3636 = vmatpush1.bf16.msra.mxu0 %v2572
    %3637 = vmatprep.subr.bf16.mxu0 %v2589
    %3638 = vmatpush1.bf16.msra.mxu0 %v2588
    %3639 = vmatprep.subr.bf16.mxu0 %v2605
    %3640 = vmatpush1.bf16.msra.mxu0 %v2604
    %3641 = vmatprep.subr.bf16.mxu0 %v2621
    %3642 = vmatpush1.bf16.msra.mxu0 %v2620
    %3643 = vmatprep.subr.bf16.mxu0 %v2637
    %3644 = vmatpush1.bf16.msra.mxu0 %v2636
    %3645 = vmatprep.subr.bf16.mxu0 %v2653
    %3646 = vmatpush1.bf16.msra.mxu0 %v2652
    %3647 = vmatprep.subr.bf16.mxu0 %v2669
    %3648 = vmatpush1.bf16.msra.mxu0 %v2668
    %3649 = vmatprep.subr.bf16.mxu0 %v2685
    %3650 = vmatpush1.bf16.msra.mxu0 %v2684
    %3651 = vmatprep.subr.bf16.mxu0 %v2701
    %3652 = vmatpush1.bf16.msra.mxu0 %v2700
    %3653 = vmatprep.subr.bf16.mxu0 %v2717
    %3654 = vmatpush1.bf16.msra.mxu0 %v2716
    %3655 = vmatprep.mubr.bf16.mxu0 %v671
    %3656 = vmatmul.mubr.bf16.gmra.mrb[0].mxu0 %v670
    %v3657 = vpop.f32.mrb[0].mxu0
    %v3658 = vadd.f32 %v3615, %v3657
    %v3659 = vpop.f32.mrb[0].mxu0
    %v3660 = vadd.f32 %v3617, %v3659
    %v3661 = vpop.f32.mrb[0].mxu0
    %v3662 = vadd.f32 %v3619, %v3661
    %v3663 = vpop.f32.mrb[0].mxu0
    %v3664 = vadd.f32 %v3621, %v3663
    %3665 = vdwg.mxu0
    %3666 = vmatprep.subr.bf16.mxu0 %v2223
    %3667 = vmatpush1.bf16.msra.mxu0 %v2222
    %3668 = vmatprep.subr.bf16.mxu0 %v2239
    %3669 = vmatpush1.bf16.msra.mxu0 %v2238
    %3670 = vmatprep.subr.bf16.mxu0 %v2255
    %3671 = vmatpush1.bf16.msra.mxu0 %v2254
    %3672 = vmatprep.subr.bf16.mxu0 %v2271
    %3673 = vmatpush1.bf16.msra.mxu0 %v2270
    %3674 = vmatprep.subr.bf16.mxu0 %v2287
    %3675 = vmatpush1.bf16.msra.mxu0 %v2286
    %3676 = vmatprep.subr.bf16.mxu0 %v2303
    %3677 = vmatpush1.bf16.msra.mxu0 %v2302
    %3678 = vmatprep.subr.bf16.mxu0 %v2319
    %3679 = vmatpush1.bf16.msra.mxu0 %v2318
    %3680 = vmatprep.subr.bf16.mxu0 %v2335
    %3681 = vmatpush1.bf16.msra.mxu0 %v2334
    %3682 = vmatprep.subr.bf16.mxu0 %v2351
    %3683 = vmatpush1.bf16.msra.mxu0 %v2350
    %3684 = vmatprep.subr.bf16.mxu0 %v2367
    %3685 = vmatpush1.bf16.msra.mxu0 %v2366
    %3686 = vmatprep.subr.bf16.mxu0 %v2383
    %3687 = vmatpush1.bf16.msra.mxu0 %v2382
    %3688 = vmatprep.subr.bf16.mxu0 %v2399
    %3689 = vmatpush1.bf16.msra.mxu0 %v2398
    %3690 = vmatprep.subr.bf16.mxu0 %v2415
    %3691 = vmatpush1.bf16.msra.mxu0 %v2414
    %3692 = vmatprep.subr.bf16.mxu0 %v2431
    %3693 = vmatpush1.bf16.msra.mxu0 %v2430
    %3694 = vmatprep.subr.bf16.mxu0 %v2447
    %3695 = vmatpush1.bf16.msra.mxu0 %v2446
    %3696 = vmatprep.subr.bf16.mxu0 %v2463
    %3697 = vmatpush1.bf16.msra.mxu0 %v2462
    %3698 = vmatprep.mubr.bf16.mxu0 %v669
    %3699 = vmatmul.mubr.bf16.gmra.mrb[0].mxu0 %v668
    %v3700 = vpop.f32.mrb[0].mxu0
    %v3701 = vadd.f32 0.0, %v3700
    %v3702 = vpop.f32.mrb[0].mxu0
    %v3703 = vadd.f32 0.0, %v3702
    %v3704 = vpop.f32.mrb[0].mxu0
    %v3705 = vadd.f32 0.0, %v3704
    %v3706 = vpop.f32.mrb[0].mxu0
    %v3707 = vadd.f32 0.0, %v3706
    %3708 = vdwg.mxu0
    %3709 = vmatprep.subr.bf16.mxu0 %v2479
    %3710 = vmatpush1.bf16.msra.mxu0 %v2478
    %3711 = vmatprep.subr.bf16.mxu0 %v2495
    %3712 = vmatpush1.bf16.msra.mxu0 %v2494
    %3713 = vmatprep.subr.bf16.mxu0 %v2511
    %3714 = vmatpush1.bf16.msra.mxu0 %v2510
    %3715 = vmatprep.subr.bf16.mxu0 %v2527
    %3716 = vmatpush1.bf16.msra.mxu0 %v2526
    %3717 = vmatprep.subr.bf16.mxu0 %v2543
    %3718 = vmatpush1.bf16.msra.mxu0 %v2542
    %3719 = vmatprep.subr.bf16.mxu0 %v2559
    %3720 = vmatpush1.bf16.msra.mxu0 %v2558
    %3721 = vmatprep.subr.bf16.mxu0 %v2575
    %3722 = vmatpush1.bf16.msra.mxu0 %v2574
    %3723 = vmatprep.subr.bf16.mxu0 %v2591
    %3724 = vmatpush1.bf16.msra.mxu0 %v2590
    %3725 = vmatprep.subr.bf16.mxu0 %v2607
    %3726 = vmatpush1.bf16.msra.mxu0 %v2606
    %3727 = vmatprep.subr.bf16.mxu0 %v2623
    %3728 = vmatpush1.bf16.msra.mxu0 %v2622
    %3729 = vmatprep.subr.bf16.mxu0 %v2639
    %3730 = vmatpush1.bf16.msra.mxu0 %v2638
    %3731 = vmatprep.subr.bf16.mxu0 %v2655
    %3732 = vmatpush1.bf16.msra.mxu0 %v2654
    %3733 = vmatprep.subr.bf16.mxu0 %v2671
    %3734 = vmatpush1.bf16.msra.mxu0 %v2670
    %3735 = vmatprep.subr.bf16.mxu0 %v2687
    %3736 = vmatpush1.bf16.msra.mxu0 %v2686
    %3737 = vmatprep.subr.bf16.mxu0 %v2703
    %3738 = vmatpush1.bf16.msra.mxu0 %v2702
    %3739 = vmatprep.subr.bf16.mxu0 %v2719
    %3740 = vmatpush1.bf16.msra.mxu0 %v2718
    %3741 = vmatprep.mubr.bf16.mxu0 %v671
    %3742 = vmatmul.mubr.bf16.gmra.mrb[0].mxu0 %v670
    %v3743 = vpop.f32.mrb[0].mxu0
    %v3744 = vadd.f32 %v3701, %v3743
    %v3745 = vpop.f32.mrb[0].mxu0
    %v3746 = vadd.f32 %v3703, %v3745
    %v3747 = vpop.f32.mrb[0].mxu0
    %v3748 = vadd.f32 %v3705, %v3747
    %v3749 = vpop.f32.mrb[0].mxu0
    %v3750 = vadd.f32 %v3707, %v3749
    %3751 = vdwg.mxu0
    %3752 = vmatprep.subr.bf16.mxu0 %v2225
    %3753 = vmatpush1.bf16.msra.mxu0 %v2224
    %3754 = vmatprep.subr.bf16.mxu0 %v2241
    %3755 = vmatpush1.bf16.msra.mxu0 %v2240
    %3756 = vmatprep.subr.bf16.mxu0 %v2257
    %3757 = vmatpush1.bf16.msra.mxu0 %v2256
    %3758 = vmatprep.subr.bf16.mxu0 %v2273
    %3759 = vmatpush1.bf16.msra.mxu0 %v2272
    %3760 = vmatprep.subr.bf16.mxu0 %v2289
    %3761 = vmatpush1.bf16.msra.mxu0 %v2288
    %3762 = vmatprep.subr.bf16.mxu0 %v2305
    %3763 = vmatpush1.bf16.msra.mxu0 %v2304
    %3764 = vmatprep.subr.bf16.mxu0 %v2321
    %3765 = vmatpush1.bf16.msra.mxu0 %v2320
    %3766 = vmatprep.subr.bf16.mxu0 %v2337
    %3767 = vmatpush1.bf16.msra.mxu0 %v2336
    %3768 = vmatprep.subr.bf16.mxu0 %v2353
    %3769 = vmatpush1.bf16.msra.mxu0 %v2352
    %3770 = vmatprep.subr.bf16.mxu0 %v2369
    %3771 = vmatpush1.bf16.msra.mxu0 %v2368
    %3772 = vmatprep.subr.bf16.mxu0 %v2385
    %3773 = vmatpush1.bf16.msra.mxu0 %v2384
    %3774 = vmatprep.subr.bf16.mxu0 %v2401
    %3775 = vmatpush1.bf16.msra.mxu0 %v2400
    %3776 = vmatprep.subr.bf16.mxu0 %v2417
    %3777 = vmatpush1.bf16.msra.mxu0 %v2416
    %3778 = vmatprep.subr.bf16.mxu0 %v2433
    %3779 = vmatpush1.bf16.msra.mxu0 %v2432
    %3780 = vmatprep.subr.bf16.mxu0 %v2449
    %3781 = vmatpush1.bf16.msra.mxu0 %v2448
    %3782 = vmatprep.subr.bf16.mxu0 %v2465
    %3783 = vmatpush1.bf16.msra.mxu0 %v2464
    %3784 = vmatprep.mubr.bf16.mxu0 %v669
    %3785 = vmatmul.mubr.bf16.gmra.mrb[0].mxu0 %v668
    %v3786 = vpop.f32.mrb[0].mxu0
    %v3787 = vadd.f32 0.0, %v3786
    %v3788 = vpop.f32.mrb[0].mxu0
    %v3789 = vadd.f32 0.0, %v3788
    %v3790 = vpop.f32.mrb[0].mxu0
    %v3791 = vadd.f32 0.0, %v3790
    %v3792 = vpop.f32.mrb[0].mxu0
    %v3793 = vadd.f32 0.0, %v3792
    %3794 = vdwg.mxu0
    %3795 = vmatprep.subr.bf16.mxu0 %v2481
    %3796 = vmatpush1.bf16.msra.mxu0 %v2480
    %3797 = vmatprep.subr.bf16.mxu0 %v2497
    %3798 = vmatpush1.bf16.msra.mxu0 %v2496
    %3799 = vmatprep.subr.bf16.mxu0 %v2513
    %3800 = vmatpush1.bf16.msra.mxu0 %v2512
    %3801 = vmatprep.subr.bf16.mxu0 %v2529
    %3802 = vmatpush1.bf16.msra.mxu0 %v2528
    %3803 = vmatprep.subr.bf16.mxu0 %v2545
    %3804 = vmatpush1.bf16.msra.mxu0 %v2544
    %3805 = vmatprep.subr.bf16.mxu0 %v2561
    %3806 = vmatpush1.bf16.msra.mxu0 %v2560
    %3807 = vmatprep.subr.bf16.mxu0 %v2577
    %3808 = vmatpush1.bf16.msra.mxu0 %v2576
    %3809 = vmatprep.subr.bf16.mxu0 %v2593
    %3810 = vmatpush1.bf16.msra.mxu0 %v2592
    %3811 = vmatprep.subr.bf16.mxu0 %v2609
    %3812 = vmatpush1.bf16.msra.mxu0 %v2608
    %3813 = vmatprep.subr.bf16.mxu0 %v2625
    %3814 = vmatpush1.bf16.msra.mxu0 %v2624
    %3815 = vmatprep.subr.bf16.mxu0 %v2641
    %3816 = vmatpush1.bf16.msra.mxu0 %v2640
    %3817 = vmatprep.subr.bf16.mxu0 %v2657
    %3818 = vmatpush1.bf16.msra.mxu0 %v2656
    %3819 = vmatprep.subr.bf16.mxu0 %v2673
    %3820 = vmatpush1.bf16.msra.mxu0 %v2672
    %3821 = vmatprep.subr.bf16.mxu0 %v2689
    %3822 = vmatpush1.bf16.msra.mxu0 %v2688
    %3823 = vmatprep.subr.bf16.mxu0 %v2705
    %3824 = vmatpush1.bf16.msra.mxu0 %v2704
    %3825 = vmatprep.subr.bf16.mxu0 %v2721
    %3826 = vmatpush1.bf16.msra.mxu0 %v2720
    %3827 = vmatprep.mubr.bf16.mxu0 %v671
    %3828 = vmatmul.mubr.bf16.gmra.mrb[0].mxu0 %v670
    %v3829 = vpop.f32.mrb[0].mxu0
    %v3830 = vadd.f32 %v3787, %v3829
    %v3831 = vpop.f32.mrb[0].mxu0
    %v3832 = vadd.f32 %v3789, %v3831
    %v3833 = vpop.f32.mrb[0].mxu0
    %v3834 = vadd.f32 %v3791, %v3833
    %v3835 = vpop.f32.mrb[0].mxu0
    %v3836 = vadd.f32 %v3793, %v3835
    %3837 = vdwg.mxu0
    %3838 = vmatprep.subr.bf16.mxu0 %v2227
    %3839 = vmatpush1.bf16.msra.mxu0 %v2226
    %3840 = vmatprep.subr.bf16.mxu0 %v2243
    %3841 = vmatpush1.bf16.msra.mxu0 %v2242
    %3842 = vmatprep.subr.bf16.mxu0 %v2259
    %3843 = vmatpush1.bf16.msra.mxu0 %v2258
    %3844 = vmatprep.subr.bf16.mxu0 %v2275
    %3845 = vmatpush1.bf16.msra.mxu0 %v2274
    %3846 = vmatprep.subr.bf16.mxu0 %v2291
    %3847 = vmatpush1.bf16.msra.mxu0 %v2290
    %3848 = vmatprep.subr.bf16.mxu0 %v2307
    %3849 = vmatpush1.bf16.msra.mxu0 %v2306
    %3850 = vmatprep.subr.bf16.mxu0 %v2323
    %3851 = vmatpush1.bf16.msra.mxu0 %v2322
    %3852 = vmatprep.subr.bf16.mxu0 %v2339
    %3853 = vmatpush1.bf16.msra.mxu0 %v2338
    %3854 = vmatprep.subr.bf16.mxu0 %v2355
    %3855 = vmatpush1.bf16.msra.mxu0 %v2354
    %3856 = vmatprep.subr.bf16.mxu0 %v2371
    %3857 = vmatpush1.bf16.msra.mxu0 %v2370
    %3858 = vmatprep.subr.bf16.mxu0 %v2387
    %3859 = vmatpush1.bf16.msra.mxu0 %v2386
    %3860 = vmatprep.subr.bf16.mxu0 %v2403
    %3861 = vmatpush1.bf16.msra.mxu0 %v2402
    %3862 = vmatprep.subr.bf16.mxu0 %v2419
    %3863 = vmatpush1.bf16.msra.mxu0 %v2418
    %3864 = vmatprep.subr.bf16.mxu0 %v2435
    %3865 = vmatpush1.bf16.msra.mxu0 %v2434
    %3866 = vmatprep.subr.bf16.mxu0 %v2451
    %3867 = vmatpush1.bf16.msra.mxu0 %v2450
    %3868 = vmatprep.subr.bf16.mxu0 %v2467
    %3869 = vmatpush1.bf16.msra.mxu0 %v2466
    %3870 = vmatprep.mubr.bf16.mxu0 %v669
    %3871 = vmatmul.mubr.bf16.gmra.mrb[0].mxu0 %v668
    %v3872 = vpop.f32.mrb[0].mxu0
    %v3873 = vadd.f32 0.0, %v3872
    %v3874 = vpop.f32.mrb[0].mxu0
    %v3875 = vadd.f32 0.0, %v3874
    %v3876 = vpop.f32.mrb[0].mxu0
    %v3877 = vadd.f32 0.0, %v3876
    %v3878 = vpop.f32.mrb[0].mxu0
    %v3879 = vadd.f32 0.0, %v3878
    %3880 = vdwg.mxu0
    %3881 = vmatprep.subr.bf16.mxu0 %v2483
    %3882 = vmatpush1.bf16.msra.mxu0 %v2482
    %3883 = vmatprep.subr.bf16.mxu0 %v2499
    %3884 = vmatpush1.bf16.msra.mxu0 %v2498
    %3885 = vmatprep.subr.bf16.mxu0 %v2515
    %3886 = vmatpush1.bf16.msra.mxu0 %v2514
    %3887 = vmatprep.subr.bf16.mxu0 %v2531
    %3888 = vmatpush1.bf16.msra.mxu0 %v2530
    %3889 = vmatprep.subr.bf16.mxu0 %v2547
    %3890 = vmatpush1.bf16.msra.mxu0 %v2546
    %3891 = vmatprep.subr.bf16.mxu0 %v2563
    %3892 = vmatpush1.bf16.msra.mxu0 %v2562
    %3893 = vmatprep.subr.bf16.mxu0 %v2579
    %3894 = vmatpush1.bf16.msra.mxu0 %v2578
    %3895 = vmatprep.subr.bf16.mxu0 %v2595
    %3896 = vmatpush1.bf16.msra.mxu0 %v2594
    %3897 = vmatprep.subr.bf16.mxu0 %v2611
    %3898 = vmatpush1.bf16.msra.mxu0 %v2610
    %3899 = vmatprep.subr.bf16.mxu0 %v2627
    %3900 = vmatpush1.bf16.msra.mxu0 %v2626
    %3901 = vmatprep.subr.bf16.mxu0 %v2643
    %3902 = vmatpush1.bf16.msra.mxu0 %v2642
    %3903 = vmatprep.subr.bf16.mxu0 %v2659
    %3904 = vmatpush1.bf16.msra.mxu0 %v2658
    %3905 = vmatprep.subr.bf16.mxu0 %v2675
    %3906 = vmatpush1.bf16.msra.mxu0 %v2674
    %3907 = vmatprep.subr.bf16.mxu0 %v2691
    %3908 = vmatpush1.bf16.msra.mxu0 %v2690
    %3909 = vmatprep.subr.bf16.mxu0 %v2707
    %3910 = vmatpush1.bf16.msra.mxu0 %v2706
    %3911 = vmatprep.subr.bf16.mxu0 %v2723
    %3912 = vmatpush1.bf16.msra.mxu0 %v2722
    %3913 = vmatprep.mubr.bf16.mxu0 %v671
    %3914 = vmatmul.mubr.bf16.gmra.mrb[0].mxu0 %v670
    %v3915 = vpop.f32.mrb[0].mxu0
    %v3916 = vadd.f32 %v3873, %v3915
    %v3917 = vpop.f32.mrb[0].mxu0
    %v3918 = vadd.f32 %v3875, %v3917
    %v3919 = vpop.f32.mrb[0].mxu0
    %v3920 = vadd.f32 %v3877, %v3919
    %v3921 = vpop.f32.mrb[0].mxu0
    %v3922 = vadd.f32 %v3879, %v3921
    %3923 = vdwg.mxu0
    %v3924 = vmax.f32 %v3314, %v3486
    %v3925 = vmax.f32 %v3316, %v3488
    %v3926 = vmax.f32 %v3400, %v3572
    %v3927 = vmax.f32 %v3402, %v3574
    %v3928 = vmax.f32 %v3318, %v3490
    %v3929 = vmax.f32 %v3320, %v3492
    %v3930 = vmax.f32 %v3404, %v3576
    %v3931 = vmax.f32 %v3406, %v3578
    %v3932 = vmax.f32 %v3658, %v3830
    %v3933 = vmax.f32 %v3660, %v3832
    %v3934 = vmax.f32 %v3744, %v3916
    %v3935 = vmax.f32 %v3746, %v3918
    %v3936 = vmax.f32 %v3662, %v3834
    %v3937 = vmax.f32 %v3664, %v3836
    %v3938 = vmax.f32 %v3748, %v3920
    %v3939 = vmax.f32 %v3750, %v3922
    %v3940 = vmax.f32 %v3924, %v3932
    %v3941 = vmax.f32 %v3925, %v3933
    %v3942 = vmax.f32 %v3926, %v3934
    %v3943 = vmax.f32 %v3927, %v3935
    %v3944 = vmax.f32 %v3928, %v3936
    %v3945 = vmax.f32 %v3929, %v3937
    %v3946 = vmax.f32 %v3930, %v3938
    %v3947 = vmax.f32 %v3931, %v3939
    %v3948 = vld [vmem:[#allocation5] sm:$0xf]
    %v3950 = vlaneseq
    %v3951 = vshrl.u32 %v3950, 7
    %v3952 = vsub.s32 0, %v3951
    %v3953 = vrot.slane %v3948, %v3952
    %v3954 = vlaneseq
    %v3955 = vshrl.u32 %v3954, 7
    %v3956 = vsub.s32 1, %v3955
    %v3957 = vrot.slane %v3948, %v3956
    %v3958 = vlaneseq
    %v3959 = vshrl.u32 %v3958, 7
    %v3960 = vsub.s32 2, %v3959
    %v3961 = vrot.slane %v3948, %v3960
    %v3962 = vlaneseq
    %v3963 = vshrl.u32 %v3962, 7
    %v3964 = vsub.s32 3, %v3963
    %v3965 = vrot.slane %v3948, %v3964
    %v3970 = vadd.f32 %v3940, %v3953
    %v3971 = vadd.f32 %v3941, %v3957
    %v3972 = vadd.f32 %v3942, %v3961
    %v3973 = vadd.f32 %v3943, %v3965
    %v3974 = vadd.f32 %v3944, %v3953
    %v3975 = vadd.f32 %v3945, %v3957
    %v3976 = vadd.f32 %v3946, %v3961
    %v3977 = vadd.f32 %v3947, %v3965
    %v3978 = vpack.c.bf16 %v3974, %v3970
    %v3979 = vpack.c.bf16 %v3975, %v3971
    %v3980 = vpack.c.bf16 %v3976, %v3972
    %v3981 = vpack.c.bf16 %v3977, %v3973
    %v3982 = vld [vmem:[#allocation7] sm:$0xff]
    %v3983 = vld [vmem:[#allocation7 + $0x8] sm:$0xff]
    %v3984 = vld [vmem:[#allocation7 + $0x10] sm:$0xff]
    %v3985 = vld [vmem:[#allocation7 + $0x18] sm:$0xff]
    %v3986 = vld [vmem:[#allocation7 + $0x20] sm:$0xff]
    %v3987 = vld [vmem:[#allocation7 + $0x28] sm:$0xff]
    %v3988 = vld [vmem:[#allocation7 + $0x30] sm:$0xff]
    %v3989 = vld [vmem:[#allocation7 + $0x38] sm:$0xff]
    %v3990 = vld [vmem:[#allocation7 + $0x40] sm:$0xff]
    %v3991 = vld [vmem:[#allocation7 + $0x48] sm:$0xff]
    %v3992 = vld [vmem:[#allocation7 + $0x50] sm:$0xff]
    %v3993 = vld [vmem:[#allocation7 + $0x58] sm:$0xff]
    %v3994 = vld [vmem:[#allocation7 + $0x60] sm:$0xff]
    %v3995 = vld [vmem:[#allocation7 + $0x68] sm:$0xff]
    %v3996 = vld [vmem:[#allocation7 + $0x70] sm:$0xff]
    %v3997 = vld [vmem:[#allocation7 + $0x78] sm:$0xff]
    %v3998 = vld [vmem:[#allocation7 + $0x80] sm:$0xff]
    %v3999 = vld [vmem:[#allocation7 + $0x88] sm:$0xff]
    %v4000 = vld [vmem:[#allocation7 + $0x90] sm:$0xff]
    %v4001 = vld [vmem:[#allocation7 + $0x98] sm:$0xff]
    %v4002 = vld [vmem:[#allocation7 + $0xa0] sm:$0xff]
    %v4003 = vld [vmem:[#allocation7 + $0xa8] sm:$0xff]
    %v4004 = vld [vmem:[#allocation7 + $0xb0] sm:$0xff]
    %v4005 = vld [vmem:[#allocation7 + $0xb8] sm:$0xff]
    %v4006 = vld [vmem:[#allocation7 + $0xc0] sm:$0xff]
    %v4007 = vld [vmem:[#allocation7 + $0xc8] sm:$0xff]
    %v4008 = vld [vmem:[#allocation7 + $0xd0] sm:$0xff]
    %v4009 = vld [vmem:[#allocation7 + $0xd8] sm:$0xff]
    %v4010 = vld [vmem:[#allocation7 + $0xe0] sm:$0xff]
    %v4011 = vld [vmem:[#allocation7 + $0xe8] sm:$0xff]
    %v4012 = vld [vmem:[#allocation7 + $0xf0] sm:$0xff]
    %v4013 = vld [vmem:[#allocation7 + $0xf8] sm:$0xff]
    %v4014 = vld [vmem:[#allocation7 + $0x100] sm:$0xff]
    %v4015 = vld [vmem:[#allocation7 + $0x108] sm:$0xff]
    %v4016 = vld [vmem:[#allocation7 + $0x110] sm:$0xff]
    %v4017 = vld [vmem:[#allocation7 + $0x118] sm:$0xff]
    %v4018 = vld [vmem:[#allocation7 + $0x120] sm:$0xff]
    %v4019 = vld [vmem:[#allocation7 + $0x128] sm:$0xff]
    %v4020 = vld [vmem:[#allocation7 + $0x130] sm:$0xff]
    %v4021 = vld [vmem:[#allocation7 + $0x138] sm:$0xff]
    %v4022 = vld [vmem:[#allocation7 + $0x140] sm:$0xff]
    %v4023 = vld [vmem:[#allocation7 + $0x148] sm:$0xff]
    %v4024 = vld [vmem:[#allocation7 + $0x150] sm:$0xff]
    %v4025 = vld [vmem:[#allocation7 + $0x158] sm:$0xff]
    %v4026 = vld [vmem:[#allocation7 + $0x160] sm:$0xff]
    %v4027 = vld [vmem:[#allocation7 + $0x168] sm:$0xff]
    %v4028 = vld [vmem:[#allocation7 + $0x170] sm:$0xff]
    %v4029 = vld [vmem:[#allocation7 + $0x178] sm:$0xff]
    %v4030 = vld [vmem:[#allocation7 + $0x180] sm:$0xff]
    %v4031 = vld [vmem:[#allocation7 + $0x188] sm:$0xff]
    %v4032 = vld [vmem:[#allocation7 + $0x190] sm:$0xff]
    %v4033 = vld [vmem:[#allocation7 + $0x198] sm:$0xff]
    %v4034 = vld [vmem:[#allocation7 + $0x1a0] sm:$0xff]
    %v4035 = vld [vmem:[#allocation7 + $0x1a8] sm:$0xff]
    %v4036 = vld [vmem:[#allocation7 + $0x1b0] sm:$0xff]
    %v4037 = vld [vmem:[#allocation7 + $0x1b8] sm:$0xff]
    %v4038 = vld [vmem:[#allocation7 + $0x1c0] sm:$0xff]
    %v4039 = vld [vmem:[#allocation7 + $0x1c8] sm:$0xff]
    %v4040 = vld [vmem:[#allocation7 + $0x1d0] sm:$0xff]
    %v4041 = vld [vmem:[#allocation7 + $0x1d8] sm:$0xff]
    %v4042 = vld [vmem:[#allocation7 + $0x1e0] sm:$0xff]
    %v4043 = vld [vmem:[#allocation7 + $0x1e8] sm:$0xff]
    %v4044 = vld [vmem:[#allocation7 + $0x1f0] sm:$0xff]
    %v4045 = vld [vmem:[#allocation7 + $0x1f8] sm:$0xff]
    %v4046 = vld [vmem:[#allocation7 + $0x200] sm:$0xff]
    %v4047 = vld [vmem:[#allocation7 + $0x208] sm:$0xff]
    %v4048 = vld [vmem:[#allocation7 + $0x210] sm:$0xff]
    %v4049 = vld [vmem:[#allocation7 + $0x218] sm:$0xff]
    %v4050 = vld [vmem:[#allocation7 + $0x220] sm:$0xff]
    %v4051 = vld [vmem:[#allocation7 + $0x228] sm:$0xff]
    %v4052 = vld [vmem:[#allocation7 + $0x230] sm:$0xff]
    %v4053 = vld [vmem:[#allocation7 + $0x238] sm:$0xff]
    %v4054 = vld [vmem:[#allocation7 + $0x240] sm:$0xff]
    %v4055 = vld [vmem:[#allocation7 + $0x248] sm:$0xff]
    %v4056 = vld [vmem:[#allocation7 + $0x250] sm:$0xff]
    %v4057 = vld [vmem:[#allocation7 + $0x258] sm:$0xff]
    %v4058 = vld [vmem:[#allocation7 + $0x260] sm:$0xff]
    %v4059 = vld [vmem:[#allocation7 + $0x268] sm:$0xff]
    %v4060 = vld [vmem:[#allocation7 + $0x270] sm:$0xff]
    %v4061 = vld [vmem:[#allocation7 + $0x278] sm:$0xff]
    %v4062 = vld [vmem:[#allocation7 + $0x280] sm:$0xff]
    %v4063 = vld [vmem:[#allocation7 + $0x288] sm:$0xff]
    %v4064 = vld [vmem:[#allocation7 + $0x290] sm:$0xff]
    %v4065 = vld [vmem:[#allocation7 + $0x298] sm:$0xff]
    %v4066 = vld [vmem:[#allocation7 + $0x2a0] sm:$0xff]
    %v4067 = vld [vmem:[#allocation7 + $0x2a8] sm:$0xff]
    %v4068 = vld [vmem:[#allocation7 + $0x2b0] sm:$0xff]
    %v4069 = vld [vmem:[#allocation7 + $0x2b8] sm:$0xff]
    %v4070 = vld [vmem:[#allocation7 + $0x2c0] sm:$0xff]
    %v4071 = vld [vmem:[#allocation7 + $0x2c8] sm:$0xff]
    %v4072 = vld [vmem:[#allocation7 + $0x2d0] sm:$0xff]
    %v4073 = vld [vmem:[#allocation7 + $0x2d8] sm:$0xff]
    %v4074 = vld [vmem:[#allocation7 + $0x2e0] sm:$0xff]
    %v4075 = vld [vmem:[#allocation7 + $0x2e8] sm:$0xff]
    %v4076 = vld [vmem:[#allocation7 + $0x2f0] sm:$0xff]
    %v4077 = vld [vmem:[#allocation7 + $0x2f8] sm:$0xff]
    %v4078 = vld [vmem:[#allocation7 + $0x300] sm:$0xff]
    %v4079 = vld [vmem:[#allocation7 + $0x308] sm:$0xff]
    %v4080 = vld [vmem:[#allocation7 + $0x310] sm:$0xff]
    %v4081 = vld [vmem:[#allocation7 + $0x318] sm:$0xff]
    %v4082 = vld [vmem:[#allocation7 + $0x320] sm:$0xff]
    %v4083 = vld [vmem:[#allocation7 + $0x328] sm:$0xff]
    %v4084 = vld [vmem:[#allocation7 + $0x330] sm:$0xff]
    %v4085 = vld [vmem:[#allocation7 + $0x338] sm:$0xff]
    %v4086 = vld [vmem:[#allocation7 + $0x340] sm:$0xff]
    %v4087 = vld [vmem:[#allocation7 + $0x348] sm:$0xff]
    %v4088 = vld [vmem:[#allocation7 + $0x350] sm:$0xff]
    %v4089 = vld [vmem:[#allocation7 + $0x358] sm:$0xff]
    %v4090 = vld [vmem:[#allocation7 + $0x360] sm:$0xff]
    %v4091 = vld [vmem:[#allocation7 + $0x368] sm:$0xff]
    %v4092 = vld [vmem:[#allocation7 + $0x370] sm:$0xff]
    %v4093 = vld [vmem:[#allocation7 + $0x378] sm:$0xff]
    %v4094 = vld [vmem:[#allocation7 + $0x380] sm:$0xff]
    %v4095 = vld [vmem:[#allocation7 + $0x388] sm:$0xff]
    %v4096 = vld [vmem:[#allocation7 + $0x390] sm:$0xff]
    %v4097 = vld [vmem:[#allocation7 + $0x398] sm:$0xff]
    %v4098 = vld [vmem:[#allocation7 + $0x3a0] sm:$0xff]
    %v4099 = vld [vmem:[#allocation7 + $0x3a8] sm:$0xff]
    %v4100 = vld [vmem:[#allocation7 + $0x3b0] sm:$0xff]
    %v4101 = vld [vmem:[#allocation7 + $0x3b8] sm:$0xff]
    %v4102 = vld [vmem:[#allocation7 + $0x3c0] sm:$0xff]
    %v4103 = vld [vmem:[#allocation7 + $0x3c8] sm:$0xff]
    %v4104 = vld [vmem:[#allocation7 + $0x3d0] sm:$0xff]
    %v4105 = vld [vmem:[#allocation7 + $0x3d8] sm:$0xff]
    %v4106 = vld [vmem:[#allocation7 + $0x3e0] sm:$0xff]
    %v4107 = vld [vmem:[#allocation7 + $0x3e8] sm:$0xff]
    %v4108 = vld [vmem:[#allocation7 + $0x3f0] sm:$0xff]
    %v4109 = vld [vmem:[#allocation7 + $0x3f8] sm:$0xff]
    %v4238 = vunpack.c.l.b16 %v3982
    %v4239 = vunpack.c.h.b16 %v3982
    %v4240 = vunpack.c.l.b16 %v3983
    %v4241 = vunpack.c.h.b16 %v3983
    %v4242 = vunpack.c.l.b16 %v3984
    %v4243 = vunpack.c.h.b16 %v3984
    %v4244 = vunpack.c.l.b16 %v3985
    %v4245 = vunpack.c.h.b16 %v3985
    %v4246 = vunpack.c.l.b16 %v3986
    %v4247 = vunpack.c.h.b16 %v3986
    %v4248 = vunpack.c.l.b16 %v3987
    %v4249 = vunpack.c.h.b16 %v3987
    %v4250 = vunpack.c.l.b16 %v3988
    %v4251 = vunpack.c.h.b16 %v3988
    %v4252 = vunpack.c.l.b16 %v3989
    %v4253 = vunpack.c.h.b16 %v3989
    %v4254 = vunpack.c.l.b16 %v3990
    %v4255 = vunpack.c.h.b16 %v3990
    %v4256 = vunpack.c.l.b16 %v3991
    %v4257 = vunpack.c.h.b16 %v3991
    %v4258 = vunpack.c.l.b16 %v3992
    %v4259 = vunpack.c.h.b16 %v3992
    %v4260 = vunpack.c.l.b16 %v3993
    %v4261 = vunpack.c.h.b16 %v3993
    %v4262 = vunpack.c.l.b16 %v3994
    %v4263 = vunpack.c.h.b16 %v3994
    %v4264 = vunpack.c.l.b16 %v3995
    %v4265 = vunpack.c.h.b16 %v3995
    %v4266 = vunpack.c.l.b16 %v3996
    %v4267 = vunpack.c.h.b16 %v3996
    %v4268 = vunpack.c.l.b16 %v3997
    %v4269 = vunpack.c.h.b16 %v3997
    %v4270 = vunpack.c.l.b16 %v3998
    %v4271 = vunpack.c.h.b16 %v3998
    %v4272 = vunpack.c.l.b16 %v3999
    %v4273 = vunpack.c.h.b16 %v3999
    %v4274 = vunpack.c.l.b16 %v4000
    %v4275 = vunpack.c.h.b16 %v4000
    %v4276 = vunpack.c.l.b16 %v4001
    %v4277 = vunpack.c.h.b16 %v4001
    %v4278 = vunpack.c.l.b16 %v4002
    %v4279 = vunpack.c.h.b16 %v4002
    %v4280 = vunpack.c.l.b16 %v4003
    %v4281 = vunpack.c.h.b16 %v4003
    %v4282 = vunpack.c.l.b16 %v4004
    %v4283 = vunpack.c.h.b16 %v4004
    %v4284 = vunpack.c.l.b16 %v4005
    %v4285 = vunpack.c.h.b16 %v4005
    %v4286 = vunpack.c.l.b16 %v4006
    %v4287 = vunpack.c.h.b16 %v4006
    %v4288 = vunpack.c.l.b16 %v4007
    %v4289 = vunpack.c.h.b16 %v4007
    %v4290 = vunpack.c.l.b16 %v4008
    %v4291 = vunpack.c.h.b16 %v4008
    %v4292 = vunpack.c.l.b16 %v4009
    %v4293 = vunpack.c.h.b16 %v4009
    %v4294 = vunpack.c.l.b16 %v4010
    %v4295 = vunpack.c.h.b16 %v4010
    %v4296 = vunpack.c.l.b16 %v4011
    %v4297 = vunpack.c.h.b16 %v4011
    %v4298 = vunpack.c.l.b16 %v4012
    %v4299 = vunpack.c.h.b16 %v4012
    %v4300 = vunpack.c.l.b16 %v4013
    %v4301 = vunpack.c.h.b16 %v4013
    %v4302 = vunpack.c.l.b16 %v4014
    %v4303 = vunpack.c.h.b16 %v4014
    %v4304 = vunpack.c.l.b16 %v4015
    %v4305 = vunpack.c.h.b16 %v4015
    %v4306 = vunpack.c.l.b16 %v4016
    %v4307 = vunpack.c.h.b16 %v4016
    %v4308 = vunpack.c.l.b16 %v4017
    %v4309 = vunpack.c.h.b16 %v4017
    %v4310 = vunpack.c.l.b16 %v4018
    %v4311 = vunpack.c.h.b16 %v4018
    %v4312 = vunpack.c.l.b16 %v4019
    %v4313 = vunpack.c.h.b16 %v4019
    %v4314 = vunpack.c.l.b16 %v4020
    %v4315 = vunpack.c.h.b16 %v4020
    %v4316 = vunpack.c.l.b16 %v4021
    %v4317 = vunpack.c.h.b16 %v4021
    %v4318 = vunpack.c.l.b16 %v4022
    %v4319 = vunpack.c.h.b16 %v4022
    %v4320 = vunpack.c.l.b16 %v4023
    %v4321 = vunpack.c.h.b16 %v4023
    %v4322 = vunpack.c.l.b16 %v4024
    %v4323 = vunpack.c.h.b16 %v4024
    %v4324 = vunpack.c.l.b16 %v4025
    %v4325 = vunpack.c.h.b16 %v4025
    %v4326 = vunpack.c.l.b16 %v4026
    %v4327 = vunpack.c.h.b16 %v4026
    %v4328 = vunpack.c.l.b16 %v4027
    %v4329 = vunpack.c.h.b16 %v4027
    %v4330 = vunpack.c.l.b16 %v4028
    %v4331 = vunpack.c.h.b16 %v4028
    %v4332 = vunpack.c.l.b16 %v4029
    %v4333 = vunpack.c.h.b16 %v4029
    %v4334 = vunpack.c.l.b16 %v4030
    %v4335 = vunpack.c.h.b16 %v4030
    %v4336 = vunpack.c.l.b16 %v4031
    %v4337 = vunpack.c.h.b16 %v4031
    %v4338 = vunpack.c.l.b16 %v4032
    %v4339 = vunpack.c.h.b16 %v4032
    %v4340 = vunpack.c.l.b16 %v4033
    %v4341 = vunpack.c.h.b16 %v4033
    %v4342 = vunpack.c.l.b16 %v4034
    %v4343 = vunpack.c.h.b16 %v4034
    %v4344 = vunpack.c.l.b16 %v4035
    %v4345 = vunpack.c.h.b16 %v4035
    %v4346 = vunpack.c.l.b16 %v4036
    %v4347 = vunpack.c.h.b16 %v4036
    %v4348 = vunpack.c.l.b16 %v4037
    %v4349 = vunpack.c.h.b16 %v4037
    %v4350 = vunpack.c.l.b16 %v4038
    %v4351 = vunpack.c.h.b16 %v4038
    %v4352 = vunpack.c.l.b16 %v4039
    %v4353 = vunpack.c.h.b16 %v4039
    %v4354 = vunpack.c.l.b16 %v4040
    %v4355 = vunpack.c.h.b16 %v4040
    %v4356 = vunpack.c.l.b16 %v4041
    %v4357 = vunpack.c.h.b16 %v4041
    %v4358 = vunpack.c.l.b16 %v4042
    %v4359 = vunpack.c.h.b16 %v4042
    %v4360 = vunpack.c.l.b16 %v4043
    %v4361 = vunpack.c.h.b16 %v4043
    %v4362 = vunpack.c.l.b16 %v4044
    %v4363 = vunpack.c.h.b16 %v4044
    %v4364 = vunpack.c.l.b16 %v4045
    %v4365 = vunpack.c.h.b16 %v4045
    %v4366 = vunpack.c.l.b16 %v4046
    %v4367 = vunpack.c.h.b16 %v4046
    %v4368 = vunpack.c.l.b16 %v4047
    %v4369 = vunpack.c.h.b16 %v4047
    %v4370 = vunpack.c.l.b16 %v4048
    %v4371 = vunpack.c.h.b16 %v4048
    %v4372 = vunpack.c.l.b16 %v4049
    %v4373 = vunpack.c.h.b16 %v4049
    %v4374 = vunpack.c.l.b16 %v4050
    %v4375 = vunpack.c.h.b16 %v4050
    %v4376 = vunpack.c.l.b16 %v4051
    %v4377 = vunpack.c.h.b16 %v4051
    %v4378 = vunpack.c.l.b16 %v4052
    %v4379 = vunpack.c.h.b16 %v4052
    %v4380 = vunpack.c.l.b16 %v4053
    %v4381 = vunpack.c.h.b16 %v4053
    %v4382 = vunpack.c.l.b16 %v4054
    %v4383 = vunpack.c.h.b16 %v4054
    %v4384 = vunpack.c.l.b16 %v4055
    %v4385 = vunpack.c.h.b16 %v4055
    %v4386 = vunpack.c.l.b16 %v4056
    %v4387 = vunpack.c.h.b16 %v4056
    %v4388 = vunpack.c.l.b16 %v4057
    %v4389 = vunpack.c.h.b16 %v4057
    %v4390 = vunpack.c.l.b16 %v4058
    %v4391 = vunpack.c.h.b16 %v4058
    %v4392 = vunpack.c.l.b16 %v4059
    %v4393 = vunpack.c.h.b16 %v4059
    %v4394 = vunpack.c.l.b16 %v4060
    %v4395 = vunpack.c.h.b16 %v4060
    %v4396 = vunpack.c.l.b16 %v4061
    %v4397 = vunpack.c.h.b16 %v4061
    %v4398 = vunpack.c.l.b16 %v4062
    %v4399 = vunpack.c.h.b16 %v4062
    %v4400 = vunpack.c.l.b16 %v4063
    %v4401 = vunpack.c.h.b16 %v4063
    %v4402 = vunpack.c.l.b16 %v4064
    %v4403 = vunpack.c.h.b16 %v4064
    %v4404 = vunpack.c.l.b16 %v4065
    %v4405 = vunpack.c.h.b16 %v4065
    %v4406 = vunpack.c.l.b16 %v4066
    %v4407 = vunpack.c.h.b16 %v4066
    %v4408 = vunpack.c.l.b16 %v4067
    %v4409 = vunpack.c.h.b16 %v4067
    %v4410 = vunpack.c.l.b16 %v4068
    %v4411 = vunpack.c.h.b16 %v4068
    %v4412 = vunpack.c.l.b16 %v4069
    %v4413 = vunpack.c.h.b16 %v4069
    %v4414 = vunpack.c.l.b16 %v4070
    %v4415 = vunpack.c.h.b16 %v4070
    %v4416 = vunpack.c.l.b16 %v4071
    %v4417 = vunpack.c.h.b16 %v4071
    %v4418 = vunpack.c.l.b16 %v4072
    %v4419 = vunpack.c.h.b16 %v4072
    %v4420 = vunpack.c.l.b16 %v4073
    %v4421 = vunpack.c.h.b16 %v4073
    %v4422 = vunpack.c.l.b16 %v4074
    %v4423 = vunpack.c.h.b16 %v4074
    %v4424 = vunpack.c.l.b16 %v4075
    %v4425 = vunpack.c.h.b16 %v4075
    %v4426 = vunpack.c.l.b16 %v4076
    %v4427 = vunpack.c.h.b16 %v4076
    %v4428 = vunpack.c.l.b16 %v4077
    %v4429 = vunpack.c.h.b16 %v4077
    %v4430 = vunpack.c.l.b16 %v4078
    %v4431 = vunpack.c.h.b16 %v4078
    %v4432 = vunpack.c.l.b16 %v4079
    %v4433 = vunpack.c.h.b16 %v4079
    %v4434 = vunpack.c.l.b16 %v4080
    %v4435 = vunpack.c.h.b16 %v4080
    %v4436 = vunpack.c.l.b16 %v4081
    %v4437 = vunpack.c.h.b16 %v4081
    %v4438 = vunpack.c.l.b16 %v4082
    %v4439 = vunpack.c.h.b16 %v4082
    %v4440 = vunpack.c.l.b16 %v4083
    %v4441 = vunpack.c.h.b16 %v4083
    %v4442 = vunpack.c.l.b16 %v4084
    %v4443 = vunpack.c.h.b16 %v4084
    %v4444 = vunpack.c.l.b16 %v4085
    %v4445 = vunpack.c.h.b16 %v4085
    %v4446 = vunpack.c.l.b16 %v4086
    %v4447 = vunpack.c.h.b16 %v4086
    %v4448 = vunpack.c.l.b16 %v4087
    %v4449 = vunpack.c.h.b16 %v4087
    %v4450 = vunpack.c.l.b16 %v4088
    %v4451 = vunpack.c.h.b16 %v4088
    %v4452 = vunpack.c.l.b16 %v4089
    %v4453 = vunpack.c.h.b16 %v4089
    %v4454 = vunpack.c.l.b16 %v4090
    %v4455 = vunpack.c.h.b16 %v4090
    %v4456 = vunpack.c.l.b16 %v4091
    %v4457 = vunpack.c.h.b16 %v4091
    %v4458 = vunpack.c.l.b16 %v4092
    %v4459 = vunpack.c.h.b16 %v4092
    %v4460 = vunpack.c.l.b16 %v4093
    %v4461 = vunpack.c.h.b16 %v4093
    %v4462 = vunpack.c.l.b16 %v4094
    %v4463 = vunpack.c.h.b16 %v4094
    %v4464 = vunpack.c.l.b16 %v4095
    %v4465 = vunpack.c.h.b16 %v4095
    %v4466 = vunpack.c.l.b16 %v4096
    %v4467 = vunpack.c.h.b16 %v4096
    %v4468 = vunpack.c.l.b16 %v4097
    %v4469 = vunpack.c.h.b16 %v4097
    %v4470 = vunpack.c.l.b16 %v4098
    %v4471 = vunpack.c.h.b16 %v4098
    %v4472 = vunpack.c.l.b16 %v4099
    %v4473 = vunpack.c.h.b16 %v4099
    %v4474 = vunpack.c.l.b16 %v4100
    %v4475 = vunpack.c.h.b16 %v4100
    %v4476 = vunpack.c.l.b16 %v4101
    %v4477 = vunpack.c.h.b16 %v4101
    %v4478 = vunpack.c.l.b16 %v4102
    %v4479 = vunpack.c.h.b16 %v4102
    %v4480 = vunpack.c.l.b16 %v4103
    %v4481 = vunpack.c.h.b16 %v4103
    %v4482 = vunpack.c.l.b16 %v4104
    %v4483 = vunpack.c.h.b16 %v4104
    %v4484 = vunpack.c.l.b16 %v4105
    %v4485 = vunpack.c.h.b16 %v4105
    %v4486 = vunpack.c.l.b16 %v4106
    %v4487 = vunpack.c.h.b16 %v4106
    %v4488 = vunpack.c.l.b16 %v4107
    %v4489 = vunpack.c.h.b16 %v4107
    %v4490 = vunpack.c.l.b16 %v4108
    %v4491 = vunpack.c.h.b16 %v4108
    %v4492 = vunpack.c.l.b16 %v4109
    %v4493 = vunpack.c.h.b16 %v4109
    %v4494 = vpack.c.b16 %v4242, %v4238
    %v4495 = vpack.c.b16 %v4243, %v4239
    %v4496 = vpack.c.b16 %v4244, %v4240
    %v4497 = vpack.c.b16 %v4245, %v4241
    %v4498 = vpack.c.b16 %v4250, %v4246
    %v4499 = vpack.c.b16 %v4251, %v4247
    %v4500 = vpack.c.b16 %v4252, %v4248
    %v4501 = vpack.c.b16 %v4253, %v4249
    %v4502 = vpack.c.b16 %v4258, %v4254
    %v4503 = vpack.c.b16 %v4259, %v4255
    %v4504 = vpack.c.b16 %v4260, %v4256
    %v4505 = vpack.c.b16 %v4261, %v4257
    %v4506 = vpack.c.b16 %v4266, %v4262
    %v4507 = vpack.c.b16 %v4267, %v4263
    %v4508 = vpack.c.b16 %v4268, %v4264
    %v4509 = vpack.c.b16 %v4269, %v4265
    %v4510 = vpack.c.b16 %v4274, %v4270
    %v4511 = vpack.c.b16 %v4275, %v4271
    %v4512 = vpack.c.b16 %v4276, %v4272
    %v4513 = vpack.c.b16 %v4277, %v4273
    %v4514 = vpack.c.b16 %v4282, %v4278
    %v4515 = vpack.c.b16 %v4283, %v4279
    %v4516 = vpack.c.b16 %v4284, %v4280
    %v4517 = vpack.c.b16 %v4285, %v4281
    %v4518 = vpack.c.b16 %v4290, %v4286
    %v4519 = vpack.c.b16 %v4291, %v4287
    %v4520 = vpack.c.b16 %v4292, %v4288
    %v4521 = vpack.c.b16 %v4293, %v4289
    %v4522 = vpack.c.b16 %v4298, %v4294
    %v4523 = vpack.c.b16 %v4299, %v4295
    %v4524 = vpack.c.b16 %v4300, %v4296
    %v4525 = vpack.c.b16 %v4301, %v4297
    %v4526 = vpack.c.b16 %v4306, %v4302
    %v4527 = vpack.c.b16 %v4307, %v4303
    %v4528 = vpack.c.b16 %v4308, %v4304
    %v4529 = vpack.c.b16 %v4309, %v4305
    %v4530 = vpack.c.b16 %v4314, %v4310
    %v4531 = vpack.c.b16 %v4315, %v4311
    %v4532 = vpack.c.b16 %v4316, %v4312
    %v4533 = vpack.c.b16 %v4317, %v4313
    %v4534 = vpack.c.b16 %v4322, %v4318
    %v4535 = vpack.c.b16 %v4323, %v4319
    %v4536 = vpack.c.b16 %v4324, %v4320
    %v4537 = vpack.c.b16 %v4325, %v4321
    %v4538 = vpack.c.b16 %v4330, %v4326
    %v4539 = vpack.c.b16 %v4331, %v4327
    %v4540 = vpack.c.b16 %v4332, %v4328
    %v4541 = vpack.c.b16 %v4333, %v4329
    %v4542 = vpack.c.b16 %v4338, %v4334
    %v4543 = vpack.c.b16 %v4339, %v4335
    %v4544 = vpack.c.b16 %v4340, %v4336
    %v4545 = vpack.c.b16 %v4341, %v4337
    %v4546 = vpack.c.b16 %v4346, %v4342
    %v4547 = vpack.c.b16 %v4347, %v4343
    %v4548 = vpack.c.b16 %v4348, %v4344
    %v4549 = vpack.c.b16 %v4349, %v4345
    %v4550 = vpack.c.b16 %v4354, %v4350
    %v4551 = vpack.c.b16 %v4355, %v4351
    %v4552 = vpack.c.b16 %v4356, %v4352
    %v4553 = vpack.c.b16 %v4357, %v4353
    %v4554 = vpack.c.b16 %v4362, %v4358
    %v4555 = vpack.c.b16 %v4363, %v4359
    %v4556 = vpack.c.b16 %v4364, %v4360
    %v4557 = vpack.c.b16 %v4365, %v4361
    %v4558 = vpack.c.b16 %v4370, %v4366
    %v4559 = vpack.c.b16 %v4371, %v4367
    %v4560 = vpack.c.b16 %v4372, %v4368
    %v4561 = vpack.c.b16 %v4373, %v4369
    %v4562 = vpack.c.b16 %v4378, %v4374
    %v4563 = vpack.c.b16 %v4379, %v4375
    %v4564 = vpack.c.b16 %v4380, %v4376
    %v4565 = vpack.c.b16 %v4381, %v4377
    %v4566 = vpack.c.b16 %v4386, %v4382
    %v4567 = vpack.c.b16 %v4387, %v4383
    %v4568 = vpack.c.b16 %v4388, %v4384
    %v4569 = vpack.c.b16 %v4389, %v4385
    %v4570 = vpack.c.b16 %v4394, %v4390
    %v4571 = vpack.c.b16 %v4395, %v4391
    %v4572 = vpack.c.b16 %v4396, %v4392
    %v4573 = vpack.c.b16 %v4397, %v4393
    %v4574 = vpack.c.b16 %v4402, %v4398
    %v4575 = vpack.c.b16 %v4403, %v4399
    %v4576 = vpack.c.b16 %v4404, %v4400
    %v4577 = vpack.c.b16 %v4405, %v4401
    %v4578 = vpack.c.b16 %v4410, %v4406
    %v4579 = vpack.c.b16 %v4411, %v4407
    %v4580 = vpack.c.b16 %v4412, %v4408
    %v4581 = vpack.c.b16 %v4413, %v4409
    %v4582 = vpack.c.b16 %v4418, %v4414
    %v4583 = vpack.c.b16 %v4419, %v4415
    %v4584 = vpack.c.b16 %v4420, %v4416
    %v4585 = vpack.c.b16 %v4421, %v4417
    %v4586 = vpack.c.b16 %v4426, %v4422
    %v4587 = vpack.c.b16 %v4427, %v4423
    %v4588 = vpack.c.b16 %v4428, %v4424
    %v4589 = vpack.c.b16 %v4429, %v4425
    %v4590 = vpack.c.b16 %v4434, %v4430
    %v4591 = vpack.c.b16 %v4435, %v4431
    %v4592 = vpack.c.b16 %v4436, %v4432
    %v4593 = vpack.c.b16 %v4437, %v4433
    %v4594 = vpack.c.b16 %v4442, %v4438
    %v4595 = vpack.c.b16 %v4443, %v4439
    %v4596 = vpack.c.b16 %v4444, %v4440
    %v4597 = vpack.c.b16 %v4445, %v4441
    %v4598 = vpack.c.b16 %v4450, %v4446
    %v4599 = vpack.c.b16 %v4451, %v4447
    %v4600 = vpack.c.b16 %v4452, %v4448
    %v4601 = vpack.c.b16 %v4453, %v4449
    %v4602 = vpack.c.b16 %v4458, %v4454
    %v4603 = vpack.c.b16 %v4459, %v4455
    %v4604 = vpack.c.b16 %v4460, %v4456
    %v4605 = vpack.c.b16 %v4461, %v4457
    %v4606 = vpack.c.b16 %v4466, %v4462
    %v4607 = vpack.c.b16 %v4467, %v4463
    %v4608 = vpack.c.b16 %v4468, %v4464
    %v4609 = vpack.c.b16 %v4469, %v4465
    %v4610 = vpack.c.b16 %v4474, %v4470
    %v4611 = vpack.c.b16 %v4475, %v4471
    %v4612 = vpack.c.b16 %v4476, %v4472
    %v4613 = vpack.c.b16 %v4477, %v4473
    %v4614 = vpack.c.b16 %v4482, %v4478
    %v4615 = vpack.c.b16 %v4483, %v4479
    %v4616 = vpack.c.b16 %v4484, %v4480
    %v4617 = vpack.c.b16 %v4485, %v4481
    %v4618 = vpack.c.b16 %v4490, %v4486
    %v4619 = vpack.c.b16 %v4491, %v4487
    %v4620 = vpack.c.b16 %v4492, %v4488
    %v4621 = vpack.c.b16 %v4493, %v4489
    %4750 = vmatprep.subr.bf16.mxu0 %v4495
    %4751 = vmatpush1.bf16.msra.mxu0 %v4494
    %4752 = vmatprep.subr.bf16.mxu0 %v4499
    %4753 = vmatpush1.bf16.msra.mxu0 %v4498
    %4754 = vmatprep.subr.bf16.mxu0 %v4503
    %4755 = vmatpush1.bf16.msra.mxu0 %v4502
    %4756 = vmatprep.subr.bf16.mxu0 %v4507
    %4757 = vmatpush1.bf16.msra.mxu0 %v4506
    %4758 = vmatprep.subr.bf16.mxu0 %v4511
    %4759 = vmatpush1.bf16.msra.mxu0 %v4510
    %4760 = vmatprep.subr.bf16.mxu0 %v4515
    %4761 = vmatpush1.bf16.msra.mxu0 %v4514
    %4762 = vmatprep.subr.bf16.mxu0 %v4519
    %4763 = vmatpush1.bf16.msra.mxu0 %v4518
    %4764 = vmatprep.subr.bf16.mxu0 %v4523
    %4765 = vmatpush1.bf16.msra.mxu0 %v4522
    %4766 = vmatprep.subr.bf16.mxu0 %v4527
    %4767 = vmatpush1.bf16.msra.mxu0 %v4526
    %4768 = vmatprep.subr.bf16.mxu0 %v4531
    %4769 = vmatpush1.bf16.msra.mxu0 %v4530
    %4770 = vmatprep.subr.bf16.mxu0 %v4535
    %4771 = vmatpush1.bf16.msra.mxu0 %v4534
    %4772 = vmatprep.subr.bf16.mxu0 %v4539
    %4773 = vmatpush1.bf16.msra.mxu0 %v4538
    %4774 = vmatprep.subr.bf16.mxu0 %v4543
    %4775 = vmatpush1.bf16.msra.mxu0 %v4542
    %4776 = vmatprep.subr.bf16.mxu0 %v4547
    %4777 = vmatpush1.bf16.msra.mxu0 %v4546
    %4778 = vmatprep.subr.bf16.mxu0 %v4551
    %4779 = vmatpush1.bf16.msra.mxu0 %v4550
    %4780 = vmatprep.subr.bf16.mxu0 %v4555
    %4781 = vmatpush1.bf16.msra.mxu0 %v4554
    %4782 = vmatprep.mubr.bf16.mxu0 %v3979
    %4783 = vmatmul.mubr.bf16.gmra.mrb[0].mxu0 %v3978
    %v4784 = vpop.f32.mrb[0].mxu0
    %v4785 = vadd.f32 0.0, %v4784
    %v4786 = vpop.f32.mrb[0].mxu0
    %v4787 = vadd.f32 0.0, %v4786
    %v4788 = vpop.f32.mrb[0].mxu0
    %v4789 = vadd.f32 0.0, %v4788
    %v4790 = vpop.f32.mrb[0].mxu0
    %v4791 = vadd.f32 0.0, %v4790
    %4792 = vdwg.mxu0
    %4793 = vmatprep.subr.bf16.mxu0 %v4559
    %4794 = vmatpush1.bf16.msra.mxu0 %v4558
    %4795 = vmatprep.subr.bf16.mxu0 %v4563
    %4796 = vmatpush1.bf16.msra.mxu0 %v4562
    %4797 = vmatprep.subr.bf16.mxu0 %v4567
    %4798 = vmatpush1.bf16.msra.mxu0 %v4566
    %4799 = vmatprep.subr.bf16.mxu0 %v4571
    %4800 = vmatpush1.bf16.msra.mxu0 %v4570
    %4801 = vmatprep.subr.bf16.mxu0 %v4575
    %4802 = vmatpush1.bf16.msra.mxu0 %v4574
    %4803 = vmatprep.subr.bf16.mxu0 %v4579
    %4804 = vmatpush1.bf16.msra.mxu0 %v4578
    %4805 = vmatprep.subr.bf16.mxu0 %v4583
    %4806 = vmatpush1.bf16.msra.mxu0 %v4582
    %4807 = vmatprep.subr.bf16.mxu0 %v4587
    %4808 = vmatpush1.bf16.msra.mxu0 %v4586
    %4809 = vmatprep.subr.bf16.mxu0 %v4591
    %4810 = vmatpush1.bf16.msra.mxu0 %v4590
    %4811 = vmatprep.subr.bf16.mxu0 %v4595
    %4812 = vmatpush1.bf16.msra.mxu0 %v4594
    %4813 = vmatprep.subr.bf16.mxu0 %v4599
    %4814 = vmatpush1.bf16.msra.mxu0 %v4598
    %4815 = vmatprep.subr.bf16.mxu0 %v4603
    %4816 = vmatpush1.bf16.msra.mxu0 %v4602
    %4817 = vmatprep.subr.bf16.mxu0 %v4607
    %4818 = vmatpush1.bf16.msra.mxu0 %v4606
    %4819 = vmatprep.subr.bf16.mxu0 %v4611
    %4820 = vmatpush1.bf16.msra.mxu0 %v4610
    %4821 = vmatprep.subr.bf16.mxu0 %v4615
    %4822 = vmatpush1.bf16.msra.mxu0 %v4614
    %4823 = vmatprep.subr.bf16.mxu0 %v4619
    %4824 = vmatpush1.bf16.msra.mxu0 %v4618
    %4825 = vmatprep.mubr.bf16.mxu0 %v3981
    %4826 = vmatmul.mubr.bf16.gmra.mrb[0].mxu0 %v3980
    %v4827 = vpop.f32.mrb[0].mxu0
    %v4828 = vadd.f32 %v4785, %v4827
    %v4829 = vpop.f32.mrb[0].mxu0
    %v4830 = vadd.f32 %v4787, %v4829
    %v4831 = vpop.f32.mrb[0].mxu0
    %v4832 = vadd.f32 %v4789, %v4831
    %v4833 = vpop.f32.mrb[0].mxu0
    %v4834 = vadd.f32 %v4791, %v4833
    %4835 = vdwg.mxu0
    %4836 = vmatprep.subr.bf16.mxu0 %v4497
    %4837 = vmatpush1.bf16.msra.mxu0 %v4496
    %4838 = vmatprep.subr.bf16.mxu0 %v4501
    %4839 = vmatpush1.bf16.msra.mxu0 %v4500
    %4840 = vmatprep.subr.bf16.mxu0 %v4505
    %4841 = vmatpush1.bf16.msra.mxu0 %v4504
    %4842 = vmatprep.subr.bf16.mxu0 %v4509
    %4843 = vmatpush1.bf16.msra.mxu0 %v4508
    %4844 = vmatprep.subr.bf16.mxu0 %v4513
    %4845 = vmatpush1.bf16.msra.mxu0 %v4512
    %4846 = vmatprep.subr.bf16.mxu0 %v4517
    %4847 = vmatpush1.bf16.msra.mxu0 %v4516
    %4848 = vmatprep.subr.bf16.mxu0 %v4521
    %4849 = vmatpush1.bf16.msra.mxu0 %v4520
    %4850 = vmatprep.subr.bf16.mxu0 %v4525
    %4851 = vmatpush1.bf16.msra.mxu0 %v4524
    %4852 = vmatprep.subr.bf16.mxu0 %v4529
    %4853 = vmatpush1.bf16.msra.mxu0 %v4528
    %4854 = vmatprep.subr.bf16.mxu0 %v4533
    %4855 = vmatpush1.bf16.msra.mxu0 %v4532
    %4856 = vmatprep.subr.bf16.mxu0 %v4537
    %4857 = vmatpush1.bf16.msra.mxu0 %v4536
    %4858 = vmatprep.subr.bf16.mxu0 %v4541
    %4859 = vmatpush1.bf16.msra.mxu0 %v4540
    %4860 = vmatprep.subr.bf16.mxu0 %v4545
    %4861 = vmatpush1.bf16.msra.mxu0 %v4544
    %4862 = vmatprep.subr.bf16.mxu0 %v4549
    %4863 = vmatpush1.bf16.msra.mxu0 %v4548
    %4864 = vmatprep.subr.bf16.mxu0 %v4553
    %4865 = vmatpush1.bf16.msra.mxu0 %v4552
    %4866 = vmatprep.subr.bf16.mxu0 %v4557
    %4867 = vmatpush1.bf16.msra.mxu0 %v4556
    %4868 = vmatprep.mubr.bf16.mxu0 %v3979
    %4869 = vmatmul.mubr.bf16.gmra.mrb[0].mxu0 %v3978
    %v4870 = vpop.f32.mrb[0].mxu0
    %v4871 = vadd.f32 0.0, %v4870
    %v4872 = vpop.f32.mrb[0].mxu0
    %v4873 = vadd.f32 0.0, %v4872
    %v4874 = vpop.f32.mrb[0].mxu0
    %v4875 = vadd.f32 0.0, %v4874
    %v4876 = vpop.f32.mrb[0].mxu0
    %v4877 = vadd.f32 0.0, %v4876
    %4878 = vdwg.mxu0
    %4879 = vmatprep.subr.bf16.mxu0 %v4561
    %4880 = vmatpush1.bf16.msra.mxu0 %v4560
    %4881 = vmatprep.subr.bf16.mxu0 %v4565
    %4882 = vmatpush1.bf16.msra.mxu0 %v4564
    %4883 = vmatprep.subr.bf16.mxu0 %v4569
    %4884 = vmatpush1.bf16.msra.mxu0 %v4568
    %4885 = vmatprep.subr.bf16.mxu0 %v4573
    %4886 = vmatpush1.bf16.msra.mxu0 %v4572
    %4887 = vmatprep.subr.bf16.mxu0 %v4577
    %4888 = vmatpush1.bf16.msra.mxu0 %v4576
    %4889 = vmatprep.subr.bf16.mxu0 %v4581
    %4890 = vmatpush1.bf16.msra.mxu0 %v4580
    %4891 = vmatprep.subr.bf16.mxu0 %v4585
    %4892 = vmatpush1.bf16.msra.mxu0 %v4584
    %4893 = vmatprep.subr.bf16.mxu0 %v4589
    %4894 = vmatpush1.bf16.msra.mxu0 %v4588
    %4895 = vmatprep.subr.bf16.mxu0 %v4593
    %4896 = vmatpush1.bf16.msra.mxu0 %v4592
    %4897 = vmatprep.subr.bf16.mxu0 %v4597
    %4898 = vmatpush1.bf16.msra.mxu0 %v4596
    %4899 = vmatprep.subr.bf16.mxu0 %v4601
    %4900 = vmatpush1.bf16.msra.mxu0 %v4600
    %4901 = vmatprep.subr.bf16.mxu0 %v4605
    %4902 = vmatpush1.bf16.msra.mxu0 %v4604
    %4903 = vmatprep.subr.bf16.mxu0 %v4609
    %4904 = vmatpush1.bf16.msra.mxu0 %v4608
    %4905 = vmatprep.subr.bf16.mxu0 %v4613
    %4906 = vmatpush1.bf16.msra.mxu0 %v4612
    %4907 = vmatprep.subr.bf16.mxu0 %v4617
    %4908 = vmatpush1.bf16.msra.mxu0 %v4616
    %4909 = vmatprep.subr.bf16.mxu0 %v4621
    %4910 = vmatpush1.bf16.msra.mxu0 %v4620
    %4911 = vmatprep.mubr.bf16.mxu0 %v3981
    %4912 = vmatmul.mubr.bf16.gmra.mrb[0].mxu0 %v3980
    %v4913 = vpop.f32.mrb[0].mxu0
    %v4914 = vadd.f32 %v4871, %v4913
    %v4915 = vpop.f32.mrb[0].mxu0
    %v4916 = vadd.f32 %v4873, %v4915
    %v4917 = vpop.f32.mrb[0].mxu0
    %v4918 = vadd.f32 %v4875, %v4917
    %v4919 = vpop.f32.mrb[0].mxu0
    %v4920 = vadd.f32 %v4877, %v4919
    %4921 = vdwg.mxu0
    %v4922 = vmax.f32 %v4828, %v4830
    %v4923 = vmax.f32 %v4832, %v4834
    %v4924 = vmax.f32 %v4914, %v4916
    %v4925 = vmax.f32 %v4918, %v4920
    %v4926 = vmax.f32 %v4922, %v4924
    %v4927 = vmax.f32 %v4923, %v4925
    %v4928 = vld [vmem:[#allocation8] sm:$0x1]
    %v4930 = vlaneseq
    %v4931 = vshrl.u32 %v4930, 7
    %v4932 = vsub.s32 0, %v4931
    %v4933 = vrot.slane %v4928, %v4932
    %v4935 = vadd.f32 %v4926, %v4933
    %v4936 = vadd.f32 %v4927, %v4933
    %v4937 = vpack.c.bf16 %v4936, %v4935
    %v4938 = vld [vmem:[%s5] sm:$0xf]
    %v4939 = vld [vmem:[%s5 + $0x4] sm:$0xf]
    %v4940 = vld [vmem:[%s5 + $0x8] sm:$0xf]
    %v4941 = vld [vmem:[%s5 + $0xc] sm:$0xf]
    %v4942 = vld [vmem:[%s5 + $0x10] sm:$0xf]
    %v4943 = vld [vmem:[%s5 + $0x14] sm:$0xf]
    %v4944 = vld [vmem:[%s5 + $0x18] sm:$0xf]
    %v4945 = vld [vmem:[%s5 + $0x1c] sm:$0xf]
    %v4946 = vld [vmem:[%s5 + $0x20] sm:$0xf]
    %v4947 = vld [vmem:[%s5 + $0x24] sm:$0xf]
    %v4948 = vld [vmem:[%s5 + $0x28] sm:$0xf]
    %v4949 = vld [vmem:[%s5 + $0x2c] sm:$0xf]
    %v4950 = vld [vmem:[%s5 + $0x30] sm:$0xf]
    %v4951 = vld [vmem:[%s5 + $0x34] sm:$0xf]
    %v4952 = vld [vmem:[%s5 + $0x38] sm:$0xf]
    %v4953 = vld [vmem:[%s5 + $0x3c] sm:$0xf]
    %v4970 = vunpack.c.l.b16 %v4938
    %v4971 = vunpack.c.l.b16 %v4939
    %v4972 = vunpack.c.l.b16 %v4940
    %v4973 = vunpack.c.l.b16 %v4941
    %v4974 = vunpack.c.l.b16 %v4942
    %v4975 = vunpack.c.l.b16 %v4943
    %v4976 = vunpack.c.l.b16 %v4944
    %v4977 = vunpack.c.l.b16 %v4945
    %v4978 = vunpack.c.l.b16 %v4946
    %v4979 = vunpack.c.l.b16 %v4947
    %v4980 = vunpack.c.l.b16 %v4948
    %v4981 = vunpack.c.l.b16 %v4949
    %v4982 = vunpack.c.l.b16 %v4950
    %v4983 = vunpack.c.l.b16 %v4951
    %v4984 = vunpack.c.l.b16 %v4952
    %v4985 = vunpack.c.l.b16 %v4953
    %v4986 = vpack.c.b16 %v4971, %v4970
    %v4987 = vpack.c.b16 %v4973, %v4972
    %v4988 = vpack.c.b16 %v4975, %v4974
    %v4989 = vpack.c.b16 %v4977, %v4976
    %v4990 = vpack.c.b16 %v4979, %v4978
    %v4991 = vpack.c.b16 %v4981, %v4980
    %v4992 = vpack.c.b16 %v4983, %v4982
    %v4993 = vpack.c.b16 %v4985, %v4984
    %5002 = vmatprep.subr.bf16.mxu0 0
    %5003 = vmatpush1.bf16.msra.mxu0 %v4986
    %5004 = vmatprep.subr.bf16.mxu0 0
    %5005 = vmatpush1.bf16.msra.mxu0 %v4987
    %5006 = vmatprep.subr.bf16.mxu0 0
    %5007 = vmatpush1.bf16.msra.mxu0 %v4988
    %5008 = vmatprep.subr.bf16.mxu0 0
    %5009 = vmatpush1.bf16.msra.mxu0 %v4989
    %5010 = vmatprep.subr.bf16.mxu0 0
    %5011 = vmatpush1.bf16.msra.mxu0 %v4990
    %5012 = vmatprep.subr.bf16.mxu0 0
    %5013 = vmatpush1.bf16.msra.mxu0 %v4991
    %5014 = vmatprep.subr.bf16.mxu0 0
    %5015 = vmatpush1.bf16.msra.mxu0 %v4992
    %5016 = vmatprep.subr.bf16.mxu0 0
    %5017 = vmatpush1.bf16.msra.mxu0 %v4993
    %5018 = vmatprep.subr.bf16.mxu0 0
    %5019 = vmatpush1.bf16.msra.mxu0 0
    %5020 = vmatprep.subr.bf16.mxu0 0
    %5021 = vmatpush1.bf16.msra.mxu0 0
    %5022 = vmatprep.subr.bf16.mxu0 0
    %5023 = vmatpush1.bf16.msra.mxu0 0
    %5024 = vmatprep.subr.bf16.mxu0 0
    %5025 = vmatpush1.bf16.msra.mxu0 0
    %5026 = vmatprep.subr.bf16.mxu0 0
    %5027 = vmatpush1.bf16.msra.mxu0 0
    %5028 = vmatprep.subr.bf16.mxu0 0
    %5029 = vmatpush1.bf16.msra.mxu0 0
    %5030 = vmatprep.subr.bf16.mxu0 0
    %5031 = vmatpush1.bf16.msra.mxu0 0
    %5032 = vmatprep.subr.bf16.mxu0 0
    %5033 = vmatpush1.bf16.msra.mxu0 0
    %5034 = vmatprep.mubr.bf16.mxu0 0
    %5035 = vmatmul.mubr.bf16.gmra.mrb[0].mxu0 %v4937
    %v5036 = vpop.f32.mrb[0].mxu0
    %v5037 = vadd.f32 0.0, %v5036
    %v5038 = vpop.f32.mrb[0].mxu0
    %v5039 = vpop.f32.mrb[0].mxu0
    %v5040 = vadd.f32 0.0, %v5039
    %v5041 = vpop.f32.mrb[0].mxu0
    %5042 = vdwg.mxu0
    %s5043 = scalar_lea.vmem %s5, 64
    %v5044 = vld [vmem:[%s5043] sm:$0xf]
    %v5045 = vld [vmem:[%s5043 + $0x4] sm:$0xf]
    %v5046 = vld [vmem:[%s5043 + $0x8] sm:$0xf]
    %v5047 = vld [vmem:[%s5043 + $0xc] sm:$0xf]
    %v5048 = vld [vmem:[%s5043 + $0x10] sm:$0xf]
    %v5049 = vld [vmem:[%s5043 + $0x14] sm:$0xf]
    %v5050 = vld [vmem:[%s5043 + $0x18] sm:$0xf]
    %v5051 = vld [vmem:[%s5043 + $0x1c] sm:$0xf]
    %v5052 = vld [vmem:[%s5043 + $0x20] sm:$0xf]
    %v5053 = vld [vmem:[%s5043 + $0x24] sm:$0xf]
    %v5054 = vld [vmem:[%s5043 + $0x28] sm:$0xf]
    %v5055 = vld [vmem:[%s5043 + $0x2c] sm:$0xf]
    %v5056 = vld [vmem:[%s5043 + $0x30] sm:$0xf]
    %v5057 = vld [vmem:[%s5043 + $0x34] sm:$0xf]
    %v5058 = vld [vmem:[%s5043 + $0x38] sm:$0xf]
    %v5059 = vld [vmem:[%s5043 + $0x3c] sm:$0xf]
    %v5076 = vunpack.c.l.b16 %v5044
    %v5077 = vunpack.c.l.b16 %v5045
    %v5078 = vunpack.c.l.b16 %v5046
    %v5079 = vunpack.c.l.b16 %v5047
    %v5080 = vunpack.c.l.b16 %v5048
    %v5081 = vunpack.c.l.b16 %v5049
    %v5082 = vunpack.c.l.b16 %v5050
    %v5083 = vunpack.c.l.b16 %v5051
    %v5084 = vunpack.c.l.b16 %v5052
    %v5085 = vunpack.c.l.b16 %v5053
    %v5086 = vunpack.c.l.b16 %v5054
    %v5087 = vunpack.c.l.b16 %v5055
    %v5088 = vunpack.c.l.b16 %v5056
    %v5089 = vunpack.c.l.b16 %v5057
    %v5090 = vunpack.c.l.b16 %v5058
    %v5091 = vunpack.c.l.b16 %v5059
    %v5092 = vpack.c.b16 %v5077, %v5076
    %v5093 = vpack.c.b16 %v5079, %v5078
    %v5094 = vpack.c.b16 %v5081, %v5080
    %v5095 = vpack.c.b16 %v5083, %v5082
    %v5096 = vpack.c.b16 %v5085, %v5084
    %v5097 = vpack.c.b16 %v5087, %v5086
    %v5098 = vpack.c.b16 %v5089, %v5088
    %v5099 = vpack.c.b16 %v5091, %v5090
    %5108 = vmatprep.subr.bf16.mxu0 0
    %5109 = vmatpush1.bf16.msra.mxu0 %v5092
    %5110 = vmatprep.subr.bf16.mxu0 0
    %5111 = vmatpush1.bf16.msra.mxu0 %v5093
    %5112 = vmatprep.subr.bf16.mxu0 0
    %5113 = vmatpush1.bf16.msra.mxu0 %v5094
    %5114 = vmatprep.subr.bf16.mxu0 0
    %5115 = vmatpush1.bf16.msra.mxu0 %v5095
    %5116 = vmatprep.subr.bf16.mxu0 0
    %5117 = vmatpush1.bf16.msra.mxu0 %v5096
    %5118 = vmatprep.subr.bf16.mxu0 0
    %5119 = vmatpush1.bf16.msra.mxu0 %v5097
    %5120 = vmatprep.subr.bf16.mxu0 0
    %5121 = vmatpush1.bf16.msra.mxu0 %v5098
    %5122 = vmatprep.subr.bf16.mxu0 0
    %5123 = vmatpush1.bf16.msra.mxu0 %v5099
    %5124 = vmatprep.subr.bf16.mxu0 0
    %5125 = vmatpush1.bf16.msra.mxu0 0
    %5126 = vmatprep.subr.bf16.mxu0 0
    %5127 = vmatpush1.bf16.msra.mxu0 0
    %5128 = vmatprep.subr.bf16.mxu0 0
    %5129 = vmatpush1.bf16.msra.mxu0 0
    %5130 = vmatprep.subr.bf16.mxu0 0
    %5131 = vmatpush1.bf16.msra.mxu0 0
    %5132 = vmatprep.subr.bf16.mxu0 0
    %5133 = vmatpush1.bf16.msra.mxu0 0
    %5134 = vmatprep.subr.bf16.mxu0 0
    %5135 = vmatpush1.bf16.msra.mxu0 0
    %5136 = vmatprep.subr.bf16.mxu0 0
    %5137 = vmatpush1.bf16.msra.mxu0 0
    %5138 = vmatprep.subr.bf16.mxu0 0
    %5139 = vmatpush1.bf16.msra.mxu0 0
    %5140 = vmatprep.mubr.bf16.mxu0 0
    %5141 = vmatmul.mubr.bf16.gmra.mrb[0].mxu0 %v4937
    %v5142 = vpop.f32.mrb[0].mxu0
    %v5143 = vadd.f32 0.0, %v5142
    %v5144 = vpop.f32.mrb[0].mxu0
    %v5145 = vpop.f32.mrb[0].mxu0
    %v5146 = vadd.f32 0.0, %v5145
    %v5147 = vpop.f32.mrb[0].mxu0
    %5148 = vdwg.mxu0
    %v5149 = vmax.f32 %v5037, %v5143
    %v5150 = vmax.f32 %v5040, %v5146
    %s5151 = scalar_lea.vmem %s5, 128
    %v5152 = vld [vmem:[%s5151] sm:$0xf]
    %v5153 = vld [vmem:[%s5151 + $0x4] sm:$0xf]
    %v5154 = vld [vmem:[%s5151 + $0x8] sm:$0xf]
    %v5155 = vld [vmem:[%s5151 + $0xc] sm:$0xf]
    %v5156 = vld [vmem:[%s5151 + $0x10] sm:$0xf]
    %v5157 = vld [vmem:[%s5151 + $0x14] sm:$0xf]
    %v5158 = vld [vmem:[%s5151 + $0x18] sm:$0xf]
    %v5159 = vld [vmem:[%s5151 + $0x1c] sm:$0xf]
    %v5160 = vld [vmem:[%s5151 + $0x20] sm:$0xf]
    %v5161 = vld [vmem:[%s5151 + $0x24] sm:$0xf]
    %v5162 = vld [vmem:[%s5151 + $0x28] sm:$0xf]
    %v5163 = vld [vmem:[%s5151 + $0x2c] sm:$0xf]
    %v5164 = vld [vmem:[%s5151 + $0x30] sm:$0xf]
    %v5165 = vld [vmem:[%s5151 + $0x34] sm:$0xf]
    %v5166 = vld [vmem:[%s5151 + $0x38] sm:$0xf]
    %v5167 = vld [vmem:[%s5151 + $0x3c] sm:$0xf]
    %v5184 = vunpack.c.l.b16 %v5152
    %v5185 = vunpack.c.l.b16 %v5153
    %v5186 = vunpack.c.l.b16 %v5154
    %v5187 = vunpack.c.l.b16 %v5155
    %v5188 = vunpack.c.l.b16 %v5156
    %v5189 = vunpack.c.l.b16 %v5157
    %v5190 = vunpack.c.l.b16 %v5158
    %v5191 = vunpack.c.l.b16 %v5159
    %v5192 = vunpack.c.l.b16 %v5160
    %v5193 = vunpack.c.l.b16 %v5161
    %v5194 = vunpack.c.l.b16 %v5162
    %v5195 = vunpack.c.l.b16 %v5163
    %v5196 = vunpack.c.l.b16 %v5164
    %v5197 = vunpack.c.l.b16 %v5165
    %v5198 = vunpack.c.l.b16 %v5166
    %v5199 = vunpack.c.l.b16 %v5167
    %v5200 = vpack.c.b16 %v5185, %v5184
    %v5201 = vpack.c.b16 %v5187, %v5186
    %v5202 = vpack.c.b16 %v5189, %v5188
    %v5203 = vpack.c.b16 %v5191, %v5190
    %v5204 = vpack.c.b16 %v5193, %v5192
    %v5205 = vpack.c.b16 %v5195, %v5194
    %v5206 = vpack.c.b16 %v5197, %v5196
    %v5207 = vpack.c.b16 %v5199, %v5198
    %5216 = vmatprep.subr.bf16.mxu0 0
    %5217 = vmatpush1.bf16.msra.mxu0 %v5200
    %5218 = vmatprep.subr.bf16.mxu0 0
    %5219 = vmatpush1.bf16.msra.mxu0 %v5201
    %5220 = vmatprep.subr.bf16.mxu0 0
    %5221 = vmatpush1.bf16.msra.mxu0 %v5202
    %5222 = vmatprep.subr.bf16.mxu0 0
    %5223 = vmatpush1.bf16.msra.mxu0 %v5203
    %5224 = vmatprep.subr.bf16.mxu0 0
    %5225 = vmatpush1.bf16.msra.mxu0 %v5204
    %5226 = vmatprep.subr.bf16.mxu0 0
    %5227 = vmatpush1.bf16.msra.mxu0 %v5205
    %5228 = vmatprep.subr.bf16.mxu0 0
    %5229 = vmatpush1.bf16.msra.mxu0 %v5206
    %5230 = vmatprep.subr.bf16.mxu0 0
    %5231 = vmatpush1.bf16.msra.mxu0 %v5207
    %5232 = vmatprep.subr.bf16.mxu0 0
    %5233 = vmatpush1.bf16.msra.mxu0 0
    %5234 = vmatprep.subr.bf16.mxu0 0
    %5235 = vmatpush1.bf16.msra.mxu0 0
    %5236 = vmatprep.subr.bf16.mxu0 0
    %5237 = vmatpush1.bf16.msra.mxu0 0
    %5238 = vmatprep.subr.bf16.mxu0 0
    %5239 = vmatpush1.bf16.msra.mxu0 0
    %5240 = vmatprep.subr.bf16.mxu0 0
    %5241 = vmatpush1.bf16.msra.mxu0 0
    %5242 = vmatprep.subr.bf16.mxu0 0
    %5243 = vmatpush1.bf16.msra.mxu0 0
    %5244 = vmatprep.subr.bf16.mxu0 0
    %5245 = vmatpush1.bf16.msra.mxu0 0
    %5246 = vmatprep.subr.bf16.mxu0 0
    %5247 = vmatpush1.bf16.msra.mxu0 0
    %5248 = vmatprep.mubr.bf16.mxu0 0
    %5249 = vmatmul.mubr.bf16.gmra.mrb[0].mxu0 %v4937
    %v5250 = vpop.f32.mrb[0].mxu0
    %v5251 = vadd.f32 0.0, %v5250
    %v5252 = vpop.f32.mrb[0].mxu0
    %v5253 = vpop.f32.mrb[0].mxu0
    %v5254 = vadd.f32 0.0, %v5253
    %v5255 = vpop.f32.mrb[0].mxu0
    %5256 = vdwg.mxu0
    %v5257 = vmax.f32 %v5149, %v5251
    %v5258 = vmax.f32 %v5150, %v5254
    %s5259 = scalar_lea.vmem %s5, 192
    %v5260 = vld [vmem:[%s5259] sm:$0xf]
    %v5261 = vld [vmem:[%s5259 + $0x4] sm:$0xf]
    %v5262 = vld [vmem:[%s5259 + $0x8] sm:$0xf]
    %v5263 = vld [vmem:[%s5259 + $0xc] sm:$0xf]
    %v5264 = vld [vmem:[%s5259 + $0x10] sm:$0xf]
    %v5265 = vld [vmem:[%s5259 + $0x14] sm:$0xf]
    %v5266 = vld [vmem:[%s5259 + $0x18] sm:$0xf]
    %v5267 = vld [vmem:[%s5259 + $0x1c] sm:$0xf]
    %v5268 = vld [vmem:[%s5259 + $0x20] sm:$0xf]
    %v5269 = vld [vmem:[%s5259 + $0x24] sm:$0xf]
    %v5270 = vld [vmem:[%s5259 + $0x28] sm:$0xf]
    %v5271 = vld [vmem:[%s5259 + $0x2c] sm:$0xf]
    %v5272 = vld [vmem:[%s5259 + $0x30] sm:$0xf]
    %v5273 = vld [vmem:[%s5259 + $0x34] sm:$0xf]
    %v5274 = vld [vmem:[%s5259 + $0x38] sm:$0xf]
    %v5275 = vld [vmem:[%s5259 + $0x3c] sm:$0xf]
    %v5292 = vunpack.c.l.b16 %v5260
    %v5293 = vunpack.c.l.b16 %v5261
    %v5294 = vunpack.c.l.b16 %v5262
    %v5295 = vunpack.c.l.b16 %v5263
    %v5296 = vunpack.c.l.b16 %v5264
    %v5297 = vunpack.c.l.b16 %v5265
    %v5298 = vunpack.c.l.b16 %v5266
    %v5299 = vunpack.c.l.b16 %v5267
    %v5300 = vunpack.c.l.b16 %v5268
    %v5301 = vunpack.c.l.b16 %v5269
    %v5302 = vunpack.c.l.b16 %v5270
    %v5303 = vunpack.c.l.b16 %v5271
    %v5304 = vunpack.c.l.b16 %v5272
    %v5305 = vunpack.c.l.b16 %v5273
    %v5306 = vunpack.c.l.b16 %v5274
    %v5307 = vunpack.c.l.b16 %v5275
    %v5308 = vpack.c.b16 %v5293, %v5292
    %v5309 = vpack.c.b16 %v5295, %v5294
    %v5310 = vpack.c.b16 %v5297, %v5296
    %v5311 = vpack.c.b16 %v5299, %v5298
    %v5312 = vpack.c.b16 %v5301, %v5300
    %v5313 = vpack.c.b16 %v5303, %v5302
    %v5314 = vpack.c.b16 %v5305, %v5304
    %v5315 = vpack.c.b16 %v5307, %v5306
    %5324 = vmatprep.subr.bf16.mxu0 0
    %5325 = vmatpush1.bf16.msra.mxu0 %v5308
    %5326 = vmatprep.subr.bf16.mxu0 0
    %5327 = vmatpush1.bf16.msra.mxu0 %v5309
    %5328 = vmatprep.subr.bf16.mxu0 0
    %5329 = vmatpush1.bf16.msra.mxu0 %v5310
    %5330 = vmatprep.subr.bf16.mxu0 0
    %5331 = vmatpush1.bf16.msra.mxu0 %v5311
    %5332 = vmatprep.subr.bf16.mxu0 0
    %5333 = vmatpush1.bf16.msra.mxu0 %v5312
    %5334 = vmatprep.subr.bf16.mxu0 0
    %5335 = vmatpush1.bf16.msra.mxu0 %v5313
    %5336 = vmatprep.subr.bf16.mxu0 0
    %5337 = vmatpush1.bf16.msra.mxu0 %v5314
    %5338 = vmatprep.subr.bf16.mxu0 0
    %5339 = vmatpush1.bf16.msra.mxu0 %v5315
    %5340 = vmatprep.subr.bf16.mxu0 0
    %5341 = vmatpush1.bf16.msra.mxu0 0
    %5342 = vmatprep.subr.bf16.mxu0 0
    %5343 = vmatpush1.bf16.msra.mxu0 0
    %5344 = vmatprep.subr.bf16.mxu0 0
    %5345 = vmatpush1.bf16.msra.mxu0 0
    %5346 = vmatprep.subr.bf16.mxu0 0
    %5347 = vmatpush1.bf16.msra.mxu0 0
    %5348 = vmatprep.subr.bf16.mxu0 0
    %5349 = vmatpush1.bf16.msra.mxu0 0
    %5350 = vmatprep.subr.bf16.mxu0 0
    %5351 = vmatpush1.bf16.msra.mxu0 0
    %5352 = vmatprep.subr.bf16.mxu0 0
    %5353 = vmatpush1.bf16.msra.mxu0 0
    %5354 = vmatprep.subr.bf16.mxu0 0
    %5355 = vmatpush1.bf16.msra.mxu0 0
    %5356 = vmatprep.mubr.bf16.mxu0 0
    %5357 = vmatmul.mubr.bf16.gmra.mrb[0].mxu0 %v4937
    %v5358 = vpop.f32.mrb[0].mxu0
    %v5359 = vadd.f32 0.0, %v5358
    %v5360 = vpop.f32.mrb[0].mxu0
    %v5361 = vpop.f32.mrb[0].mxu0
    %v5362 = vadd.f32 0.0, %v5361
    %v5363 = vpop.f32.mrb[0].mxu0
    %5364 = vdwg.mxu0
    %v5365 = vmax.f32 %v5257, %v5359
    %v5366 = vmax.f32 %v5258, %v5362
    %v5367 = vld [vmem:[#allocation10] sm:$0x1]
    %v5369 = vlaneseq
    %v5370 = vshrl.u32 %v5369, 7
    %v5371 = vsub.s32 0, %v5370
    %v5372 = vrot.slane %v5367, %v5371
    %v5374 = vadd.f32 %v5365, %v5372
    %v5375 = vadd.f32 %v5366, %v5372
    %v5376 = vpack.c.bf16 %v5375, %v5374
    %v5377 = vld [vmem:[#allocation11] sm:$0xf]
    %v5378 = vld [vmem:[#allocation11 + $0x4] sm:$0xf]
    %v5379 = vld [vmem:[#allocation11 + $0x8] sm:$0xf]
    %v5380 = vld [vmem:[#allocation11 + $0xc] sm:$0xf]
    %v5381 = vld [vmem:[#allocation13] sm:$0x1]
    %v5383 = vlaneseq
    %v5384 = vshrl.u32 %v5383, 7
    %v5385 = vsub.s32 0, %v5384
    %v5386 = vrot.slane %v5381, %v5385
    %v5392 = vunpack.c.l.b16 %v5377
    %v5393 = vunpack.c.l.b16 %v5378
    %v5394 = vunpack.c.l.b16 %v5379
    %v5395 = vunpack.c.l.b16 %v5380
    %v5396 = vpack.c.b16 %v5393, %v5392
    %v5397 = vpack.c.b16 %v5395, %v5394
    %vm5400 = vcmask 261120
    %v5402 = vsel %vm5400, %v5376, 0
    %5404 = vmatprep.subr.bf16.mxu0 0
    %5405 = vmatpush1.bf16.msra.mxu0 %v5396
    %5406 = vmatprep.subr.bf16.mxu0 0
    %5407 = vmatpush1.bf16.msra.mxu0 %v5397
    %5408 = vmatprep.subr.bf16.mxu0 0
    %5409 = vmatpush1.bf16.msra.mxu0 0
    %5410 = vmatprep.subr.bf16.mxu0 0
    %5411 = vmatpush1.bf16.msra.mxu0 0
    %5412 = vmatprep.subr.bf16.mxu0 0
    %5413 = vmatpush1.bf16.msra.mxu0 0
    %5414 = vmatprep.subr.bf16.mxu0 0
    %5415 = vmatpush1.bf16.msra.mxu0 0
    %5416 = vmatprep.subr.bf16.mxu0 0
    %5417 = vmatpush1.bf16.msra.mxu0 0
    %5418 = vmatprep.subr.bf16.mxu0 0
    %5419 = vmatpush1.bf16.msra.mxu0 0
    %5420 = vmatprep.subr.bf16.mxu0 0
    %5421 = vmatpush1.bf16.msra.mxu0 0
    %5422 = vmatprep.subr.bf16.mxu0 0
    %5423 = vmatpush1.bf16.msra.mxu0 0
    %5424 = vmatprep.subr.bf16.mxu0 0
    %5425 = vmatpush1.bf16.msra.mxu0 0
    %5426 = vmatprep.subr.bf16.mxu0 0
    %5427 = vmatpush1.bf16.msra.mxu0 0
    %5428 = vmatprep.subr.bf16.mxu0 0
    %5429 = vmatpush1.bf16.msra.mxu0 0
    %5430 = vmatprep.subr.bf16.mxu0 0
    %5431 = vmatpush1.bf16.msra.mxu0 0
    %5432 = vmatprep.subr.bf16.mxu0 0
    %5433 = vmatpush1.bf16.msra.mxu0 0
    %5434 = vmatprep.subr.bf16.mxu0 0
    %5435 = vmatpush1.bf16.msra.mxu0 0
    %5436 = vmatprep.mubr.bf16.mxu0 0
    %5437 = vmatmul.mubr.bf16.gmra.mrb[0].mxu0 %v5402
    %v5438 = vpop.f32.mrb[0].mxu0
    %v5439 = vadd.f32 %v5386, %v5438
    %v5440 = vpop.f32.mrb[0].mxu0
    %v5441 = vpop.f32.mrb[0].mxu0
    %v5442 = vadd.f32 %v5386, %v5441
    %v5443 = vpop.f32.mrb[0].mxu0
    %5444 = vdwg.mxu0
    %v5445 = vmax.f32 %v5439, 0.0
    %v5446 = vmax.f32 %v5442, 0.0
    %v5447 = vld [vmem:[#allocation14] sm:$0x1]
    %v5448 = vld [vmem:[#allocation2] sm:$0x1]
    %5450 = vset.pattern.permute.xlu0 0
    %5451 = vperm.xlu0 %5450, %v5448
    %v5452 = vpop.permute.xlu0 %5451
    %v5454 = vlaneseq
    %v5455 = vshrl.u32 %v5454, 7
    %v5456 = vsub.s32 0, %v5455
    %v5457 = vrot.slane %v5452, %v5456
    %vm5458 = vcmask 523264
    %v5460 = vsel %vm5458, %v5447, 0
    %v5463 = vsel %vm5458, %v5445, 0
    %v5466 = vsel %vm5458, %v5446, 0
    %5468 = vmatprep.subr.mxu0 0.0
    %5469 = vmatpush1.xpose.msra.mxu0 %v5463
    %5470 = vmatprep.subr.mxu0 0.0
    %5471 = vmatpush1.xpose.msra.mxu0 %v5466
    %5472 = vmatprep.subr.mxu0 0.0
    %5473 = vmatpush1.xpose.msra.mxu0 0.0
    %5474 = vmatprep.subr.mxu0 0.0
    %5475 = vmatpush1.xpose.msra.mxu0 0.0
    %5476 = vmatprep.subr.mxu0 0.0
    %5477 = vmatpush1.xpose.msra.mxu0 0.0
    %5478 = vmatprep.subr.mxu0 0.0
    %5479 = vmatpush1.xpose.msra.mxu0 0.0
    %5480 = vmatprep.subr.mxu0 0.0
    %5481 = vmatpush1.xpose.msra.mxu0 0.0
    %5482 = vmatprep.subr.mxu0 0.0
    %5483 = vmatpush1.xpose.msra.mxu0 0.0
    %5484 = vmatprep.subr.mxu0 0.0
    %5485 = vmatpush1.xpose.msra.mxu0 0.0
    %5486 = vmatprep.subr.mxu0 0.0
    %5487 = vmatpush1.xpose.msra.mxu0 0.0
    %5488 = vmatprep.subr.mxu0 0.0
    %5489 = vmatpush1.xpose.msra.mxu0 0.0
    %5490 = vmatprep.subr.mxu0 0.0
    %5491 = vmatpush1.xpose.msra.mxu0 0.0
    %5492 = vmatprep.subr.mxu0 0.0
    %5493 = vmatpush1.xpose.msra.mxu0 0.0
    %5494 = vmatprep.subr.mxu0 0.0
    %5495 = vmatpush1.xpose.msra.mxu0 0.0
    %5496 = vmatprep.subr.mxu0 0.0
    %5497 = vmatpush1.xpose.msra.mxu0 0.0
    %5498 = vmatprep.subr.mxu0 0.0
    %5499 = vmatpush1.xpose.msra.mxu0 0.0
    %5500 = vmatprep.subr.mxu0 0.0
    %5501 = vmatpush1.xpose.msra.mxu0 0.0
    %5502 = vmatprep.subr.mxu0 0.0
    %5503 = vmatpush1.xpose.msra.mxu0 0.0
    %5504 = vmatprep.subr.mxu0 0.0
    %5505 = vmatpush1.xpose.msra.mxu0 0.0
    %5506 = vmatprep.subr.mxu0 0.0
    %5507 = vmatpush1.xpose.msra.mxu0 0.0
    %5508 = vmatprep.subr.mxu0 0.0
    %5509 = vmatpush1.xpose.msra.mxu0 0.0
    %5510 = vmatprep.subr.mxu0 0.0
    %5511 = vmatpush1.xpose.msra.mxu0 0.0
    %5512 = vmatprep.subr.mxu0 0.0
    %5513 = vmatpush1.xpose.msra.mxu0 0.0
    %5514 = vmatprep.subr.mxu0 0.0
    %5515 = vmatpush1.xpose.msra.mxu0 0.0
    %5516 = vmatprep.subr.mxu0 0.0
    %5517 = vmatpush1.xpose.msra.mxu0 0.0
    %5518 = vmatprep.subr.mxu0 0.0
    %5519 = vmatpush1.xpose.msra.mxu0 0.0
    %5520 = vmatprep.subr.mxu0 0.0
    %5521 = vmatpush1.xpose.msra.mxu0 0.0
    %5522 = vmatprep.subr.mxu0 0.0
    %5523 = vmatpush1.xpose.msra.mxu0 0.0
    %5524 = vmatprep.subr.mxu0 0.0
    %5525 = vmatpush1.xpose.msra.mxu0 0.0
    %5526 = vmatprep.subr.mxu0 0.0
    %5527 = vmatpush1.xpose.msra.mxu0 0.0
    %5528 = vmatprep.subr.mxu0 0.0
    %5529 = vmatpush1.xpose.msra.mxu0 0.0
    %5530 = vmatprep.subr.mxu0 0.0
    %5531 = vmatpush1.xpose.msra.mxu0 0.0
    %5532 = vmatprep.mubr.f32.mxu0 0.0
    %5533 = vmatmul.mubr.f32.gmra.mrb[0].mxu0 %v5460
    %v5534 = vpop.f32.mrb[0].mxu0
    %v5535 = vadd.f32 %v5457, %v5534
    %v5536 = vpop.f32.mrb[0].mxu0
    %5537 = vdwg.mxu0
    %vm5538 = vcmp.gt.f32.partialorder %v5535, 0.0
    %v5539 = vsel %vm5538, 1, 0
    %vm5540 = vcmask 122880
    %5541 = vst.msk [vmem:[%s11] sm:$0x1] %vm5540, %v5539
    // Predicated region
    $region78: #{convnet_forward.1} parent=1 // pred_check
      _
    $region79: #{convnet_forward.1} parent=1 // pred_check_branch
      %5543 = sbr.rel (0) target = $region81
    $region80: #{convnet_forward.1} parent=1 // pred_region
      _
    $region81: #{convnet_forward.1} parent=1 // pred_fallthru
      _
    // Predicated region
    $region82: #{convnet_forward.1} parent=1 // pred_check
      _
    $region83: #{convnet_forward.1} parent=1 // pred_check_branch
      %5545 = sbr.rel (0) target = $region85
    $region84: #{convnet_forward.1} parent=1 // pred_region
      _
    $region85: #{convnet_forward.1} parent=1 // pred_fallthru
      _
    %5546 = vsyncpa [#allocation4], 1
    %5547 = vsyncpa [#allocation6], 1
    %5548 = vsyncpa [#allocation9], 1
    %5549 = vsyncpa [#allocation12], 1
    %5550 = vsyncpa [#allocation15], 1

</llo_original>
